<compile_context>
chip_gen: v5e
topology: v5e:2x2
jax: 0.10.0
libtpu: 0.0.40
codegen_flags: <defaults>
</compile_context>

<pallas_src>
import jax
import jax.numpy as jnp
import numpy as np
from jax.experimental import pallas as pl
from jax.experimental.pallas import tpu as pltpu


# --------------------------- fused forward kernel ----------------------------
def _decktalk_kernel(x_ref, hinit_ref, cinit_ref,
                     wih0_ref, b0_ref,
                     wcmb_ref, b1_ref,
                     wfc_ref, bfc_ref,
                     out_ref, hout_ref, cout_ref):
    S, B, V = x_ref.shape
    H = hinit_ref.shape[-1]

    # ---- hoisted layer-0 input projection, time-major rows (t, b) ----------
    x2 = x_ref[...].reshape(S * B, V)                       # bf16
    xp = jnp.dot(x2, wih0_ref[...],
                 preferred_element_type=jnp.float32) + b0_ref[...]
    xp = xp.reshape(S, B, 4 * H)                            # (S, B, 4H) f32

    w_cmb = wcmb_ref[...]                                   # (2H, 8H) bf16
    b1 = jnp.broadcast_to(b1_ref[...], (B, 4 * H))          # hoisted broadcast

    h0 = hinit_ref[0]
    c0 = cinit_ref[0]
    h1 = hinit_ref[1]
    c1 = cinit_ref[1]

    def lstm_update(gates, c):
        # gate order (permuted offline): i | f | o | g
        act = jax.nn.sigmoid(gates[:, :3 * H])
        i = act[:, 0 * H:1 * H]
        f = act[:, 1 * H:2 * H]
        o = act[:, 2 * H:3 * H]
        g = jnp.tanh(gates[:, 3 * H:])
        c_new = f * c + i * g
        h_new = o * jnp.tanh(c_new)
        return h_new, c_new

    def combined_matmul(h0_cur, h1_prev):
        lhs = jnp.concatenate([h0_cur, h1_prev], axis=-1).astype(jnp.bfloat16)
        return jnp.dot(lhs, w_cmb, preferred_element_type=jnp.float32)

    # prologue: rec0 = h0_init @ W_hh0 via the packed weight (first 4H unused)
    rec0 = combined_matmul(h0, h1)[:, 4 * H:]

    tops = []
    # S is small and static -> fully unrolled; all indices are constants.
    for t in range(S):
        # layer 0: input projection precomputed, recurrent term from prev step
        h0, c0 = lstm_update(xp[t] + rec0, c0)
        # single matmul: layer-1 gates (t) + layer-0 recurrent term (t+1)
        m = combined_matmul(h0, h1)
        rec0 = m[:, 4 * H:]
        # layer 1 (inter-layer dropout is identity in eval mode)
        h1, c1 = lstm_update(m[:, :4 * H] + b1, c1)
        tops.append(h1)

    # time-major rows (t, b); wrapper reorders to batch-first and slices vocab
    r = jnp.stack(tops, axis=0).reshape(S * B, H).astype(jnp.bfloat16)
    out_ref[...] = jnp.dot(r, wfc_ref[...],
                           preferred_element_type=jnp.float32) + bfc_ref[...]

    # final hidden state, written exactly once
    hout_ref[0] = h0
    hout_ref[1] = h1
    cout_ref[0] = c0
    cout_ref[1] = c1


# ------------------------------- wrapper --------------------------------------
@jax.jit
def decktalk_forward(x, hidden, lstm_params, fc_params):
    """x: (B, S, V) batch-first; hidden: ((2,B,H), (2,B,H)).
    Returns (logits (B*S, vocab), (h_n, c_n)) like the PyTorch module (eval)."""
    h_init, c_init = hidden
    x = x.astype(jnp.float32)
    B, S, V = x.shape
    H = h_init.shape[-1]

    (wih0, whh0, b0), (wih1, whh1, b1) = lstm_params
    w_fc, b_fc = fc_params
    vocab = w_fc.shape[1]

    # permute PyTorch gate order i|f|g|o  ->  i|f|o|g (halves EUP dispatches)
    def perm(w):
        i, f, g, o = jnp.split(w, 4, axis=-1)
        return jnp.concatenate([i, f, o, g], axis=-1)

    wih0_p, whh0_p, b0_p = perm(wih0), perm(whh0), perm(b0)
    wih1_p, whh1_p, b1_p = perm(wih1), perm(whh1), perm(b1)

    # packed RHS for the combined per-step matmul:
    #   [h0_t ‖ h1_{t-1}] @ [[W_ih1, W_hh0], [W_hh1, 0]]  -> (B, 8H)
    w_cmb = jnp.concatenate(
        [jnp.concatenate([wih1_p, whh0_p], axis=1),
         jnp.concatenate([whh1_p, jnp.zeros_like(whh0_p)], axis=1)],
        axis=0)                                             # (2H, 8H)

    # lane-dense FC output: zero-pad vocab to a multiple of 128, slice after
    v_pad = max(128, ((vocab + 127) // 128) * 128)
    w_fc_p = jnp.pad(w_fc, ((0, 0), (0, v_pad - vocab)))
    b_fc_p = jnp.pad(b_fc, ((0, 0), (0, v_pad - vocab)))

    # time-major x; bf16 matmul operands (accumulation stays f32 in-kernel)
    bf = jnp.bfloat16
    x_tm = jnp.transpose(x, (1, 0, 2)).astype(bf)           # (S, B, V)

    vmem = pl.BlockSpec(memory_space=pltpu.MemorySpace.VMEM)

    out_tm, h_n, c_n = pl.pallas_call(
        _decktalk_kernel,
        out_shape=(
            jax.ShapeDtypeStruct((S * B, v_pad), jnp.float32),
            jax.ShapeDtypeStruct((2, B, H), jnp.float32),
            jax.ShapeDtypeStruct((2, B, H), jnp.float32),
        ),
        # no grid: everything (<1 MiB) is whole-array resident in VMEM
        in_specs=[vmem] * 9,
        out_specs=(vmem, vmem, vmem),
    )(x_tm, h_init, c_init,
      wih0_p.astype(bf), b0_p,
      w_cmb.astype(bf), b1_p,
      w_fc_p.astype(bf), b_fc_p)

    # time-major (t, b) rows -> batch-first (b, t) rows; drop vocab padding
    out = (out_tm.reshape(S, B, v_pad)
                 .transpose(1, 0, 2)
                 .reshape(B * S, v_pad)[:, :vocab])
    return out, (h_n, c_n)


# ------------------------------ reference ------------------------------------
def _ref_forward(x, hidden, lstm_params, fc_params):
    h_init, c_init = hidden
    B, S, V = x.shape
    H = h_init.shape[-1]
    h = [h_init[0], h_init[1]]
    c = [c_init[0], c_init[1]]
    outs = []
    for t in range(S):
        inp = x[:, t, :]
        for layer in range(2):
            wih, whh, b = lstm_params[layer]
            gates = inp @ wih + h[layer] @ whh + b
            i = jax.nn.sigmoid(gates[:, 0 * H:1 * H])
            f = jax.nn.sigmoid(gates[:, 1 * H:2 * H])
            g = jnp.tanh(gates[:, 2 * H:3 * H])
            o = jax.nn.sigmoid(gates[:, 3 * H:4 * H])
            c[layer] = f * c[layer] + i * g
            h[layer] = o * jnp.tanh(c[layer])
            inp = h[layer]
        outs.append(inp)
    r = jnp.stack(outs, axis=1)                 # (B, S, H)
    w_fc, b_fc = fc_params
    out = r.reshape(-1, H) @ w_fc + b_fc
    return out, (jnp.stack(h), jnp.stack(c))


# ------------------------------- main ----------------------------------------
if __name__ == "__main__":
    B, S, VOCAB, H, LAYERS = 2, 8, 32, 128, 2

    key = jax.random.PRNGKey(0)
    keys = jax.random.split(key, 12)
    k = 1.0 / np.sqrt(H)
    u = lambda kk, shape: jax.random.uniform(kk, shape, jnp.float32, -k, k)

    # LSTM params, transposed to (in, 4H); PyTorch gate order i|f|g|o.
    # b = b_ih + b_hh (folded).
    wih0 = u(keys[0], (VOCAB, 4 * H))
    whh0 = u(keys[1], (H, 4 * H))
    b0 = u(keys[2], (1, 4 * H)) + u(keys[3], (1, 4 * H))
    wih1 = u(keys[4], (H, 4 * H))
    whh1 = u(keys[5], (H, 4 * H))
    b1 = u(keys[6], (1, 4 * H)) + u(keys[7], (1, 4 * H))
    lstm_params = ((wih0, whh0, b0), (wih1, whh1, b1))

    # fc: Linear(n_hidden, vocab) -> stored transposed (H, VOCAB)
    w_fc = u(keys[8], (H, VOCAB))
    b_fc = u(keys[9], (1, VOCAB))
    fc_params = (w_fc, b_fc)

    # inputs: float input, zero hidden (init_hidden)
    x = jax.random.uniform(keys[10], (B, S, VOCAB), jnp.float32)
    h0 = jnp.zeros((LAYERS, B, H), jnp.float32)
    c0 = jnp.zeros((LAYERS, B, H), jnp.float32)

    out, (h_n, c_n) = decktalk_forward(x, (h0, c0), lstm_params, fc_params)
    jax.block_until_ready((out, h_n, c_n))

    out_ref, (h_ref, c_ref) = _ref_forward(x, (h0, c0), lstm_params, fc_params)
    # Tolerances account for bf16 matmul operands (f32 accumulation/state):
    # ~0.4% relative rounding per operand over an 8-step recurrence. Still far
    # below any semantic-bug signal (wrong gate order -> O(0.1..1) errors).
    np.testing.assert_allclose(np.asarray(out), np.asarray(out_ref),
                               rtol=5e-2, atol=3e-2)
    np.testing.assert_allclose(np.asarray(h_n), np.asarray(h_ref),
                               rtol=5e-2, atol=3e-2)
    np.testing.assert_allclose(np.asarray(c_n), np.asarray(c_ref),
                               rtol=5e-2, atol=3e-2)

    assert out.shape == (B * S, VOCAB)
    assert h_n.shape == (LAYERS, B, H) and c_n.shape == (LAYERS, B, H)
    print("KERNEL_OK")
</pallas_src>

<mosaic_0001>
module attributes {stable_mosaic.version = 11 : i64} {
  func.func @_decktalk_kernel(%arg0: memref<8x2x32xbf16, #tpu.memory_space<vmem>>, %arg1: memref<2x2x128xf32, #tpu.memory_space<vmem>>, %arg2: memref<2x2x128xf32, #tpu.memory_space<vmem>>, %arg3: memref<32x512xbf16, #tpu.memory_space<vmem>>, %arg4: memref<1x512xf32, #tpu.memory_space<vmem>>, %arg5: memref<256x1024xbf16, #tpu.memory_space<vmem>>, %arg6: memref<1x512xf32, #tpu.memory_space<vmem>>, %arg7: memref<128x128xbf16, #tpu.memory_space<vmem>>, %arg8: memref<1x128xf32, #tpu.memory_space<vmem>>, %arg9: memref<16x128xf32, #tpu.memory_space<vmem>>, %arg10: memref<2x2x128xf32, #tpu.memory_space<vmem>>, %arg11: memref<2x2x128xf32, #tpu.memory_space<vmem>>) attributes {dimension_semantics = [], scalar_prefetch = 0 : i64, scratch_operands = 0 : i64, tpu.core_type = #tpu.core_type<tc>} {
    %c0 = arith.constant 0 : index
    %c0_0 = arith.constant 0 : index
    %c0_1 = arith.constant 0 : index
    %0 = vector.load %arg0[%c0, %c0_0, %c0_1] : memref<8x2x32xbf16, #tpu.memory_space<vmem>>, vector<8x2x32xbf16>
    %1 = vector.shape_cast %0 : vector<8x2x32xbf16> to vector<16x32xbf16>
    %c0_2 = arith.constant 0 : index
    %c0_3 = arith.constant 0 : index
    %2 = vector.load %arg3[%c0_2, %c0_3] : memref<32x512xbf16, #tpu.memory_space<vmem>>, vector<32x512xbf16>
    %cst = arith.constant dense<0.000000e+00> : vector<16x512xf32>
    %3 = tpu.matmul %1, %2, %cst {dimension_numbers = #tpu.dot_dimension_numbers<[1], [0], [0], [1], [0, 0, 1, 1], [], []>} : vector<16x32xbf16>, vector<32x512xbf16>, vector<16x512xf32> -> vector<16x512xf32>
    %c0_4 = arith.constant 0 : index
    %c0_5 = arith.constant 0 : index
    %4 = vector.load %arg4[%c0_4, %c0_5] : memref<1x512xf32, #tpu.memory_space<vmem>>, vector<1x512xf32>
    %5 = vector.broadcast %4 : vector<1x512xf32> to vector<16x512xf32>
    %6 = arith.addf %3, %5 : vector<16x512xf32>
    %7 = vector.shape_cast %6 : vector<16x512xf32> to vector<8x2x512xf32>
    %c0_6 = arith.constant 0 : index
    %c0_7 = arith.constant 0 : index
    %8 = vector.load %arg5[%c0_6, %c0_7] : memref<256x1024xbf16, #tpu.memory_space<vmem>>, vector<256x1024xbf16>
    %c0_8 = arith.constant 0 : index
    %c0_9 = arith.constant 0 : index
    %9 = vector.load %arg6[%c0_8, %c0_9] : memref<1x512xf32, #tpu.memory_space<vmem>>, vector<1x512xf32>
    %10 = vector.shape_cast %9 : vector<1x512xf32> to vector<1x512xf32>
    %11 = vector.broadcast %10 : vector<1x512xf32> to vector<2x512xf32>
    %c0_10 = arith.constant 0 : index
    %c0_11 = arith.constant 0 : index
    %c0_12 = arith.constant 0 : index
    %12 = vector.load %arg1[%c0_10, %c0_11, %c0_12] : memref<2x2x128xf32, #tpu.memory_space<vmem>>, vector<1x2x128xf32>
    %13 = vector.shape_cast %12 : vector<1x2x128xf32> to vector<2x128xf32>
    %c0_13 = arith.constant 0 : index
    %c0_14 = arith.constant 0 : index
    %c0_15 = arith.constant 0 : index
    %14 = vector.load %arg2[%c0_13, %c0_14, %c0_15] : memref<2x2x128xf32, #tpu.memory_space<vmem>>, vector<1x2x128xf32>
    %15 = vector.shape_cast %14 : vector<1x2x128xf32> to vector<2x128xf32>
    %c1 = arith.constant 1 : index
    %c0_16 = arith.constant 0 : index
    %c0_17 = arith.constant 0 : index
    %16 = vector.load %arg1[%c1, %c0_16, %c0_17] : memref<2x2x128xf32, #tpu.memory_space<vmem>>, vector<1x2x128xf32>
    %17 = vector.shape_cast %16 : vector<1x2x128xf32> to vector<2x128xf32>
    %c1_18 = arith.constant 1 : index
    %c0_19 = arith.constant 0 : index
    %c0_20 = arith.constant 0 : index
    %18 = vector.load %arg2[%c1_18, %c0_19, %c0_20] : memref<2x2x128xf32, #tpu.memory_space<vmem>>, vector<1x2x128xf32>
    %19 = vector.shape_cast %18 : vector<1x2x128xf32> to vector<2x128xf32>
    %20 = tpu.concatenate %13, %17 in 1 : vector<2x128xf32>, vector<2x128xf32> -> vector<2x256xf32>
    %21 = arith.truncf %20 : vector<2x256xf32> to vector<2x256xbf16>
    %cst_21 = arith.constant dense<0.000000e+00> : vector<2x1024xf32>
    %22 = tpu.matmul %21, %8, %cst_21 {dimension_numbers = #tpu.dot_dimension_numbers<[1], [0], [0], [1], [0, 0, 1, 1], [], []>} : vector<2x256xbf16>, vector<256x1024xbf16>, vector<2x1024xf32> -> vector<2x1024xf32>
    %23 = vector.extract_strided_slice %22 {offsets = [0, 512], sizes = [2, 512], strides = [1, 1]} : vector<2x1024xf32> to vector<2x512xf32>
    %24 = vector.extract_strided_slice %7 {offsets = [0, 0, 0], sizes = [1, 2, 512], strides = [1, 1, 1]} : vector<8x2x512xf32> to vector<1x2x512xf32>
    %25 = vector.shape_cast %24 : vector<1x2x512xf32> to vector<2x512xf32>
    %26 = arith.addf %25, %23 : vector<2x512xf32>
    %27 = vector.extract_strided_slice %26 {offsets = [0, 0], sizes = [2, 384], strides = [1, 1]} : vector<2x512xf32> to vector<2x384xf32>
    %28 = arith.negf %27 : vector<2x384xf32>
    %29 = math.exp %28 : vector<2x384xf32>
    %cst_22 = arith.constant 1.000000e+00 : f32
    %30 = vector.broadcast %cst_22 : f32 to vector<2x384xf32>
    %31 = arith.addf %30, %29 : vector<2x384xf32>
    %32 = arith.divf %30, %31 : vector<2x384xf32>
    %33 = vector.extract_strided_slice %32 {offsets = [0, 0], sizes = [2, 128], strides = [1, 1]} : vector<2x384xf32> to vector<2x128xf32>
    %34 = vector.extract_strided_slice %32 {offsets = [0, 128], sizes = [2, 128], strides = [1, 1]} : vector<2x384xf32> to vector<2x128xf32>
    %35 = vector.extract_strided_slice %32 {offsets = [0, 256], sizes = [2, 128], strides = [1, 1]} : vector<2x384xf32> to vector<2x128xf32>
    %36 = vector.extract_strided_slice %26 {offsets = [0, 384], sizes = [2, 128], strides = [1, 1]} : vector<2x512xf32> to vector<2x128xf32>
    %37 = math.tanh %36 : vector<2x128xf32>
    %38 = arith.mulf %34, %15 : vector<2x128xf32>
    %39 = arith.mulf %33, %37 : vector<2x128xf32>
    %40 = arith.addf %38, %39 : vector<2x128xf32>
    %41 = math.tanh %40 : vector<2x128xf32>
    %42 = arith.mulf %35, %41 : vector<2x128xf32>
    %43 = tpu.concatenate %42, %17 in 1 : vector<2x128xf32>, vector<2x128xf32> -> vector<2x256xf32>
    %44 = arith.truncf %43 : vector<2x256xf32> to vector<2x256xbf16>
    %cst_23 = arith.constant dense<0.000000e+00> : vector<2x1024xf32>
    %45 = tpu.matmul %44, %8, %cst_23 {dimension_numbers = #tpu.dot_dimension_numbers<[1], [0], [0], [1], [0, 0, 1, 1], [], []>} : vector<2x256xbf16>, vector<256x1024xbf16>, vector<2x1024xf32> -> vector<2x1024xf32>
    %46 = vector.extract_strided_slice %45 {offsets = [0, 512], sizes = [2, 512], strides = [1, 1]} : vector<2x1024xf32> to vector<2x512xf32>
    %47 = vector.extract_strided_slice %45 {offsets = [0, 0], sizes = [2, 512], strides = [1, 1]} : vector<2x1024xf32> to vector<2x512xf32>
    %48 = arith.addf %47, %11 : vector<2x512xf32>
    %49 = vector.extract_strided_slice %48 {offsets = [0, 0], sizes = [2, 384], strides = [1, 1]} : vector<2x512xf32> to vector<2x384xf32>
    %50 = arith.negf %49 : vector<2x384xf32>
    %51 = math.exp %50 : vector<2x384xf32>
    %cst_24 = arith.constant 1.000000e+00 : f32
    %52 = vector.broadcast %cst_24 : f32 to vector<2x384xf32>
    %53 = arith.addf %52, %51 : vector<2x384xf32>
    %54 = arith.divf %52, %53 : vector<2x384xf32>
    %55 = vector.extract_strided_slice %54 {offsets = [0, 0], sizes = [2, 128], strides = [1, 1]} : vector<2x384xf32> to vector<2x128xf32>
    %56 = vector.extract_strided_slice %54 {offsets = [0, 128], sizes = [2, 128], strides = [1, 1]} : vector<2x384xf32> to vector<2x128xf32>
    %57 = vector.extract_strided_slice %54 {offsets = [0, 256], sizes = [2, 128], strides = [1, 1]} : vector<2x384xf32> to vector<2x128xf32>
    %58 = vector.extract_strided_slice %48 {offsets = [0, 384], sizes = [2, 128], strides = [1, 1]} : vector<2x512xf32> to vector<2x128xf32>
    %59 = math.tanh %58 : vector<2x128xf32>
    %60 = arith.mulf %56, %19 : vector<2x128xf32>
    %61 = arith.mulf %55, %59 : vector<2x128xf32>
    %62 = arith.addf %60, %61 : vector<2x128xf32>
    %63 = math.tanh %62 : vector<2x128xf32>
    %64 = arith.mulf %57, %63 : vector<2x128xf32>
    %65 = vector.extract_strided_slice %7 {offsets = [1, 0, 0], sizes = [1, 2, 512], strides = [1, 1, 1]} : vector<8x2x512xf32> to vector<1x2x512xf32>
    %66 = vector.shape_cast %65 : vector<1x2x512xf32> to vector<2x512xf32>
    %67 = arith.addf %66, %46 : vector<2x512xf32>
    %68 = vector.extract_strided_slice %67 {offsets = [0, 0], sizes = [2, 384], strides = [1, 1]} : vector<2x512xf32> to vector<2x384xf32>
    %69 = arith.negf %68 : vector<2x384xf32>
    %70 = math.exp %69 : vector<2x384xf32>
    %cst_25 = arith.constant 1.000000e+00 : f32
    %71 = vector.broadcast %cst_25 : f32 to vector<2x384xf32>
    %72 = arith.addf %71, %70 : vector<2x384xf32>
    %73 = arith.divf %71, %72 : vector<2x384xf32>
    %74 = vector.extract_strided_slice %73 {offsets = [0, 0], sizes = [2, 128], strides = [1, 1]} : vector<2x384xf32> to vector<2x128xf32>
    %75 = vector.extract_strided_slice %73 {offsets = [0, 128], sizes = [2, 128], strides = [1, 1]} : vector<2x384xf32> to vector<2x128xf32>
    %76 = vector.extract_strided_slice %73 {offsets = [0, 256], sizes = [2, 128], strides = [1, 1]} : vector<2x384xf32> to vector<2x128xf32>
    %77 = vector.extract_strided_slice %67 {offsets = [0, 384], sizes = [2, 128], strides = [1, 1]} : vector<2x512xf32> to vector<2x128xf32>
    %78 = math.tanh %77 : vector<2x128xf32>
    %79 = arith.mulf %75, %40 : vector<2x128xf32>
    %80 = arith.mulf %74, %78 : vector<2x128xf32>
    %81 = arith.addf %79, %80 : vector<2x128xf32>
    %82 = math.tanh %81 : vector<2x128xf32>
    %83 = arith.mulf %76, %82 : vector<2x128xf32>
    %84 = tpu.concatenate %83, %64 in 1 : vector<2x128xf32>, vector<2x128xf32> -> vector<2x256xf32>
    %85 = arith.truncf %84 : vector<2x256xf32> to vector<2x256xbf16>
    %cst_26 = arith.constant dense<0.000000e+00> : vector<2x1024xf32>
    %86 = tpu.matmul %85, %8, %cst_26 {dimension_numbers = #tpu.dot_dimension_numbers<[1], [0], [0], [1], [0, 0, 1, 1], [], []>} : vector<2x256xbf16>, vector<256x1024xbf16>, vector<2x1024xf32> -> vector<2x1024xf32>
    %87 = vector.extract_strided_slice %86 {offsets = [0, 512], sizes = [2, 512], strides = [1, 1]} : vector<2x1024xf32> to vector<2x512xf32>
    %88 = vector.extract_strided_slice %86 {offsets = [0, 0], sizes = [2, 512], strides = [1, 1]} : vector<2x1024xf32> to vector<2x512xf32>
    %89 = arith.addf %88, %11 : vector<2x512xf32>
    %90 = vector.extract_strided_slice %89 {offsets = [0, 0], sizes = [2, 384], strides = [1, 1]} : vector<2x512xf32> to vector<2x384xf32>
    %91 = arith.negf %90 : vector<2x384xf32>
    %92 = math.exp %91 : vector<2x384xf32>
    %cst_27 = arith.constant 1.000000e+00 : f32
    %93 = vector.broadcast %cst_27 : f32 to vector<2x384xf32>
    %94 = arith.addf %93, %92 : vector<2x384xf32>
    %95 = arith.divf %93, %94 : vector<2x384xf32>
    %96 = vector.extract_strided_slice %95 {offsets = [0, 0], sizes = [2, 128], strides = [1, 1]} : vector<2x384xf32> to vector<2x128xf32>
    %97 = vector.extract_strided_slice %95 {offsets = [0, 128], sizes = [2, 128], strides = [1, 1]} : vector<2x384xf32> to vector<2x128xf32>
    %98 = vector.extract_strided_slice %95 {offsets = [0, 256], sizes = [2, 128], strides = [1, 1]} : vector<2x384xf32> to vector<2x128xf32>
    %99 = vector.extract_strided_slice %89 {offsets = [0, 384], sizes = [2, 128], strides = [1, 1]} : vector<2x512xf32> to vector<2x128xf32>
    %100 = math.tanh %99 : vector<2x128xf32>
    %101 = arith.mulf %97, %62 : vector<2x128xf32>
    %102 = arith.mulf %96, %100 : vector<2x128xf32>
    %103 = arith.addf %101, %102 : vector<2x128xf32>
    %104 = math.tanh %103 : vector<2x128xf32>
    %105 = arith.mulf %98, %104 : vector<2x128xf32>
    %106 = vector.extract_strided_slice %7 {offsets = [2, 0, 0], sizes = [1, 2, 512], strides = [1, 1, 1]} : vector<8x2x512xf32> to vector<1x2x512xf32>
    %107 = vector.shape_cast %106 : vector<1x2x512xf32> to vector<2x512xf32>
    %108 = arith.addf %107, %87 : vector<2x512xf32>
    %109 = vector.extract_strided_slice %108 {offsets = [0, 0], sizes = [2, 384], strides = [1, 1]} : vector<2x512xf32> to vector<2x384xf32>
    %110 = arith.negf %109 : vector<2x384xf32>
    %111 = math.exp %110 : vector<2x384xf32>
    %cst_28 = arith.constant 1.000000e+00 : f32
    %112 = vector.broadcast %cst_28 : f32 to vector<2x384xf32>
    %113 = arith.addf %112, %111 : vector<2x384xf32>
    %114 = arith.divf %112, %113 : vector<2x384xf32>
    %115 = vector.extract_strided_slice %114 {offsets = [0, 0], sizes = [2, 128], strides = [1, 1]} : vector<2x384xf32> to vector<2x128xf32>
    %116 = vector.extract_strided_slice %114 {offsets = [0, 128], sizes = [2, 128], strides = [1, 1]} : vector<2x384xf32> to vector<2x128xf32>
    %117 = vector.extract_strided_slice %114 {offsets = [0, 256], sizes = [2, 128], strides = [1, 1]} : vector<2x384xf32> to vector<2x128xf32>
    %118 = vector.extract_strided_slice %108 {offsets = [0, 384], sizes = [2, 128], strides = [1, 1]} : vector<2x512xf32> to vector<2x128xf32>
    %119 = math.tanh %118 : vector<2x128xf32>
    %120 = arith.mulf %116, %81 : vector<2x128xf32>
    %121 = arith.mulf %115, %119 : vector<2x128xf32>
    %122 = arith.addf %120, %121 : vector<2x128xf32>
    %123 = math.tanh %122 : vector<2x128xf32>
    %124 = arith.mulf %117, %123 : vector<2x128xf32>
    %125 = tpu.concatenate %124, %105 in 1 : vector<2x128xf32>, vector<2x128xf32> -> vector<2x256xf32>
    %126 = arith.truncf %125 : vector<2x256xf32> to vector<2x256xbf16>
    %cst_29 = arith.constant dense<0.000000e+00> : vector<2x1024xf32>
    %127 = tpu.matmul %126, %8, %cst_29 {dimension_numbers = #tpu.dot_dimension_numbers<[1], [0], [0], [1], [0, 0, 1, 1], [], []>} : vector<2x256xbf16>, vector<256x1024xbf16>, vector<2x1024xf32> -> vector<2x1024xf32>
    %128 = vector.extract_strided_slice %127 {offsets = [0, 512], sizes = [2, 512], strides = [1, 1]} : vector<2x1024xf32> to vector<2x512xf32>
    %129 = vector.extract_strided_slice %127 {offsets = [0, 0], sizes = [2, 512], strides = [1, 1]} : vector<2x1024xf32> to vector<2x512xf32>
    %130 = arith.addf %129, %11 : vector<2x512xf32>
    %131 = vector.extract_strided_slice %130 {offsets = [0, 0], sizes = [2, 384], strides = [1, 1]} : vector<2x512xf32> to vector<2x384xf32>
    %132 = arith.negf %131 : vector<2x384xf32>
    %133 = math.exp %132 : vector<2x384xf32>
    %cst_30 = arith.constant 1.000000e+00 : f32
    %134 = vector.broadcast %cst_30 : f32 to vector<2x384xf32>
    %135 = arith.addf %134, %133 : vector<2x384xf32>
    %136 = arith.divf %134, %135 : vector<2x384xf32>
    %137 = vector.extract_strided_slice %136 {offsets = [0, 0], sizes = [2, 128], strides = [1, 1]} : vector<2x384xf32> to vector<2x128xf32>
    %138 = vector.extract_strided_slice %136 {offsets = [0, 128], sizes = [2, 128], strides = [1, 1]} : vector<2x384xf32> to vector<2x128xf32>
    %139 = vector.extract_strided_slice %136 {offsets = [0, 256], sizes = [2, 128], strides = [1, 1]} : vector<2x384xf32> to vector<2x128xf32>
    %140 = vector.extract_strided_slice %130 {offsets = [0, 384], sizes = [2, 128], strides = [1, 1]} : vector<2x512xf32> to vector<2x128xf32>
    %141 = math.tanh %140 : vector<2x128xf32>
    %142 = arith.mulf %138, %103 : vector<2x128xf32>
    %143 = arith.mulf %137, %141 : vector<2x128xf32>
    %144 = arith.addf %142, %143 : vector<2x128xf32>
    %145 = math.tanh %144 : vector<2x128xf32>
    %146 = arith.mulf %139, %145 : vector<2x128xf32>
    %147 = vector.extract_strided_slice %7 {offsets = [3, 0, 0], sizes = [1, 2, 512], strides = [1, 1, 1]} : vector<8x2x512xf32> to vector<1x2x512xf32>
    %148 = vector.shape_cast %147 : vector<1x2x512xf32> to vector<2x512xf32>
    %149 = arith.addf %148, %128 : vector<2x512xf32>
    %150 = vector.extract_strided_slice %149 {offsets = [0, 0], sizes = [2, 384], strides = [1, 1]} : vector<2x512xf32> to vector<2x384xf32>
    %151 = arith.negf %150 : vector<2x384xf32>
    %152 = math.exp %151 : vector<2x384xf32>
    %cst_31 = arith.constant 1.000000e+00 : f32
    %153 = vector.broadcast %cst_31 : f32 to vector<2x384xf32>
    %154 = arith.addf %153, %152 : vector<2x384xf32>
    %155 = arith.divf %153, %154 : vector<2x384xf32>
    %156 = vector.extract_strided_slice %155 {offsets = [0, 0], sizes = [2, 128], strides = [1, 1]} : vector<2x384xf32> to vector<2x128xf32>
    %157 = vector.extract_strided_slice %155 {offsets = [0, 128], sizes = [2, 128], strides = [1, 1]} : vector<2x384xf32> to vector<2x128xf32>
    %158 = vector.extract_strided_slice %155 {offsets = [0, 256], sizes = [2, 128], strides = [1, 1]} : vector<2x384xf32> to vector<2x128xf32>
    %159 = vector.extract_strided_slice %149 {offsets = [0, 384], sizes = [2, 128], strides = [1, 1]} : vector<2x512xf32> to vector<2x128xf32>
    %160 = math.tanh %159 : vector<2x128xf32>
    %161 = arith.mulf %157, %122 : vector<2x128xf32>
    %162 = arith.mulf %156, %160 : vector<2x128xf32>
    %163 = arith.addf %161, %162 : vector<2x128xf32>
    %164 = math.tanh %163 : vector<2x128xf32>
    %165 = arith.mulf %158, %164 : vector<2x128xf32>
    %166 = tpu.concatenate %165, %146 in 1 : vector<2x128xf32>, vector<2x128xf32> -> vector<2x256xf32>
    %167 = arith.truncf %166 : vector<2x256xf32> to vector<2x256xbf16>
    %cst_32 = arith.constant dense<0.000000e+00> : vector<2x1024xf32>
    %168 = tpu.matmul %167, %8, %cst_32 {dimension_numbers = #tpu.dot_dimension_numbers<[1], [0], [0], [1], [0, 0, 1, 1], [], []>} : vector<2x256xbf16>, vector<256x1024xbf16>, vector<2x1024xf32> -> vector<2x1024xf32>
    %169 = vector.extract_strided_slice %168 {offsets = [0, 512], sizes = [2, 512], strides = [1, 1]} : vector<2x1024xf32> to vector<2x512xf32>
    %170 = vector.extract_strided_slice %168 {offsets = [0, 0], sizes = [2, 512], strides = [1, 1]} : vector<2x1024xf32> to vector<2x512xf32>
    %171 = arith.addf %170, %11 : vector<2x512xf32>
    %172 = vector.extract_strided_slice %171 {offsets = [0, 0], sizes = [2, 384], strides = [1, 1]} : vector<2x512xf32> to vector<2x384xf32>
    %173 = arith.negf %172 : vector<2x384xf32>
    %174 = math.exp %173 : vector<2x384xf32>
    %cst_33 = arith.constant 1.000000e+00 : f32
    %175 = vector.broadcast %cst_33 : f32 to vector<2x384xf32>
    %176 = arith.addf %175, %174 : vector<2x384xf32>
    %177 = arith.divf %175, %176 : vector<2x384xf32>
    %178 = vector.extract_strided_slice %177 {offsets = [0, 0], sizes = [2, 128], strides = [1, 1]} : vector<2x384xf32> to vector<2x128xf32>
    %179 = vector.extract_strided_slice %177 {offsets = [0, 128], sizes = [2, 128], strides = [1, 1]} : vector<2x384xf32> to vector<2x128xf32>
    %180 = vector.extract_strided_slice %177 {offsets = [0, 256], sizes = [2, 128], strides = [1, 1]} : vector<2x384xf32> to vector<2x128xf32>
    %181 = vector.extract_strided_slice %171 {offsets = [0, 384], sizes = [2, 128], strides = [1, 1]} : vector<2x512xf32> to vector<2x128xf32>
    %182 = math.tanh %181 : vector<2x128xf32>
    %183 = arith.mulf %179, %144 : vector<2x128xf32>
    %184 = arith.mulf %178, %182 : vector<2x128xf32>
    %185 = arith.addf %183, %184 : vector<2x128xf32>
    %186 = math.tanh %185 : vector<2x128xf32>
    %187 = arith.mulf %180, %186 : vector<2x128xf32>
    %188 = vector.extract_strided_slice %7 {offsets = [4, 0, 0], sizes = [1, 2, 512], strides = [1, 1, 1]} : vector<8x2x512xf32> to vector<1x2x512xf32>
    %189 = vector.shape_cast %188 : vector<1x2x512xf32> to vector<2x512xf32>
    %190 = arith.addf %189, %169 : vector<2x512xf32>
    %191 = vector.extract_strided_slice %190 {offsets = [0, 0], sizes = [2, 384], strides = [1, 1]} : vector<2x512xf32> to vector<2x384xf32>
    %192 = arith.negf %191 : vector<2x384xf32>
    %193 = math.exp %192 : vector<2x384xf32>
    %cst_34 = arith.constant 1.000000e+00 : f32
    %194 = vector.broadcast %cst_34 : f32 to vector<2x384xf32>
    %195 = arith.addf %194, %193 : vector<2x384xf32>
    %196 = arith.divf %194, %195 : vector<2x384xf32>
    %197 = vector.extract_strided_slice %196 {offsets = [0, 0], sizes = [2, 128], strides = [1, 1]} : vector<2x384xf32> to vector<2x128xf32>
    %198 = vector.extract_strided_slice %196 {offsets = [0, 128], sizes = [2, 128], strides = [1, 1]} : vector<2x384xf32> to vector<2x128xf32>
    %199 = vector.extract_strided_slice %196 {offsets = [0, 256], sizes = [2, 128], strides = [1, 1]} : vector<2x384xf32> to vector<2x128xf32>
    %200 = vector.extract_strided_slice %190 {offsets = [0, 384], sizes = [2, 128], strides = [1, 1]} : vector<2x512xf32> to vector<2x128xf32>
    %201 = math.tanh %200 : vector<2x128xf32>
    %202 = arith.mulf %198, %163 : vector<2x128xf32>
    %203 = arith.mulf %197, %201 : vector<2x128xf32>
    %204 = arith.addf %202, %203 : vector<2x128xf32>
    %205 = math.tanh %204 : vector<2x128xf32>
    %206 = arith.mulf %199, %205 : vector<2x128xf32>
    %207 = tpu.concatenate %206, %187 in 1 : vector<2x128xf32>, vector<2x128xf32> -> vector<2x256xf32>
    %208 = arith.truncf %207 : vector<2x256xf32> to vector<2x256xbf16>
    %cst_35 = arith.constant dense<0.000000e+00> : vector<2x1024xf32>
    %209 = tpu.matmul %208, %8, %cst_35 {dimension_numbers = #tpu.dot_dimension_numbers<[1], [0], [0], [1], [0, 0, 1, 1], [], []>} : vector<2x256xbf16>, vector<256x1024xbf16>, vector<2x1024xf32> -> vector<2x1024xf32>
    %210 = vector.extract_strided_slice %209 {offsets = [0, 512], sizes = [2, 512], strides = [1, 1]} : vector<2x1024xf32> to vector<2x512xf32>
    %211 = vector.extract_strided_slice %209 {offsets = [0, 0], sizes = [2, 512], strides = [1, 1]} : vector<2x1024xf32> to vector<2x512xf32>
    %212 = arith.addf %211, %11 : vector<2x512xf32>
    %213 = vector.extract_strided_slice %212 {offsets = [0, 0], sizes = [2, 384], strides = [1, 1]} : vector<2x512xf32> to vector<2x384xf32>
    %214 = arith.negf %213 : vector<2x384xf32>
    %215 = math.exp %214 : vector<2x384xf32>
    %cst_36 = arith.constant 1.000000e+00 : f32
    %216 = vector.broadcast %cst_36 : f32 to vector<2x384xf32>
    %217 = arith.addf %216, %215 : vector<2x384xf32>
    %218 = arith.divf %216, %217 : vector<2x384xf32>
    %219 = vector.extract_strided_slice %218 {offsets = [0, 0], sizes = [2, 128], strides = [1, 1]} : vector<2x384xf32> to vector<2x128xf32>
    %220 = vector.extract_strided_slice %218 {offsets = [0, 128], sizes = [2, 128], strides = [1, 1]} : vector<2x384xf32> to vector<2x128xf32>
    %221 = vector.extract_strided_slice %218 {offsets = [0, 256], sizes = [2, 128], strides = [1, 1]} : vector<2x384xf32> to vector<2x128xf32>
    %222 = vector.extract_strided_slice %212 {offsets = [0, 384], sizes = [2, 128], strides = [1, 1]} : vector<2x512xf32> to vector<2x128xf32>
    %223 = math.tanh %222 : vector<2x128xf32>
    %224 = arith.mulf %220, %185 : vector<2x128xf32>
    %225 = arith.mulf %219, %223 : vector<2x128xf32>
    %226 = arith.addf %224, %225 : vector<2x128xf32>
    %227 = math.tanh %226 : vector<2x128xf32>
    %228 = arith.mulf %221, %227 : vector<2x128xf32>
    %229 = vector.extract_strided_slice %7 {offsets = [5, 0, 0], sizes = [1, 2, 512], strides = [1, 1, 1]} : vector<8x2x512xf32> to vector<1x2x512xf32>
    %230 = vector.shape_cast %229 : vector<1x2x512xf32> to vector<2x512xf32>
    %231 = arith.addf %230, %210 : vector<2x512xf32>
    %232 = vector.extract_strided_slice %231 {offsets = [0, 0], sizes = [2, 384], strides = [1, 1]} : vector<2x512xf32> to vector<2x384xf32>
    %233 = arith.negf %232 : vector<2x384xf32>
    %234 = math.exp %233 : vector<2x384xf32>
    %cst_37 = arith.constant 1.000000e+00 : f32
    %235 = vector.broadcast %cst_37 : f32 to vector<2x384xf32>
    %236 = arith.addf %235, %234 : vector<2x384xf32>
    %237 = arith.divf %235, %236 : vector<2x384xf32>
    %238 = vector.extract_strided_slice %237 {offsets = [0, 0], sizes = [2, 128], strides = [1, 1]} : vector<2x384xf32> to vector<2x128xf32>
    %239 = vector.extract_strided_slice %237 {offsets = [0, 128], sizes = [2, 128], strides = [1, 1]} : vector<2x384xf32> to vector<2x128xf32>
    %240 = vector.extract_strided_slice %237 {offsets = [0, 256], sizes = [2, 128], strides = [1, 1]} : vector<2x384xf32> to vector<2x128xf32>
    %241 = vector.extract_strided_slice %231 {offsets = [0, 384], sizes = [2, 128], strides = [1, 1]} : vector<2x512xf32> to vector<2x128xf32>
    %242 = math.tanh %241 : vector<2x128xf32>
    %243 = arith.mulf %239, %204 : vector<2x128xf32>
    %244 = arith.mulf %238, %242 : vector<2x128xf32>
    %245 = arith.addf %243, %244 : vector<2x128xf32>
    %246 = math.tanh %245 : vector<2x128xf32>
    %247 = arith.mulf %240, %246 : vector<2x128xf32>
    %248 = tpu.concatenate %247, %228 in 1 : vector<2x128xf32>, vector<2x128xf32> -> vector<2x256xf32>
    %249 = arith.truncf %248 : vector<2x256xf32> to vector<2x256xbf16>
    %cst_38 = arith.constant dense<0.000000e+00> : vector<2x1024xf32>
    %250 = tpu.matmul %249, %8, %cst_38 {dimension_numbers = #tpu.dot_dimension_numbers<[1], [0], [0], [1], [0, 0, 1, 1], [], []>} : vector<2x256xbf16>, vector<256x1024xbf16>, vector<2x1024xf32> -> vector<2x1024xf32>
    %251 = vector.extract_strided_slice %250 {offsets = [0, 512], sizes = [2, 512], strides = [1, 1]} : vector<2x1024xf32> to vector<2x512xf32>
    %252 = vector.extract_strided_slice %250 {offsets = [0, 0], sizes = [2, 512], strides = [1, 1]} : vector<2x1024xf32> to vector<2x512xf32>
    %253 = arith.addf %252, %11 : vector<2x512xf32>
    %254 = vector.extract_strided_slice %253 {offsets = [0, 0], sizes = [2, 384], strides = [1, 1]} : vector<2x512xf32> to vector<2x384xf32>
    %255 = arith.negf %254 : vector<2x384xf32>
    %256 = math.exp %255 : vector<2x384xf32>
    %cst_39 = arith.constant 1.000000e+00 : f32
    %257 = vector.broadcast %cst_39 : f32 to vector<2x384xf32>
    %258 = arith.addf %257, %256 : vector<2x384xf32>
    %259 = arith.divf %257, %258 : vector<2x384xf32>
    %260 = vector.extract_strided_slice %259 {offsets = [0, 0], sizes = [2, 128], strides = [1, 1]} : vector<2x384xf32> to vector<2x128xf32>
    %261 = vector.extract_strided_slice %259 {offsets = [0, 128], sizes = [2, 128], strides = [1, 1]} : vector<2x384xf32> to vector<2x128xf32>
    %262 = vector.extract_strided_slice %259 {offsets = [0, 256], sizes = [2, 128], strides = [1, 1]} : vector<2x384xf32> to vector<2x128xf32>
    %263 = vector.extract_strided_slice %253 {offsets = [0, 384], sizes = [2, 128], strides = [1, 1]} : vector<2x512xf32> to vector<2x128xf32>
    %264 = math.tanh %263 : vector<2x128xf32>
    %265 = arith.mulf %261, %226 : vector<2x128xf32>
    %266 = arith.mulf %260, %264 : vector<2x128xf32>
    %267 = arith.addf %265, %266 : vector<2x128xf32>
    %268 = math.tanh %267 : vector<2x128xf32>
    %269 = arith.mulf %262, %268 : vector<2x128xf32>
    %270 = vector.extract_strided_slice %7 {offsets = [6, 0, 0], sizes = [1, 2, 512], strides = [1, 1, 1]} : vector<8x2x512xf32> to vector<1x2x512xf32>
    %271 = vector.shape_cast %270 : vector<1x2x512xf32> to vector<2x512xf32>
    %272 = arith.addf %271, %251 : vector<2x512xf32>
    %273 = vector.extract_strided_slice %272 {offsets = [0, 0], sizes = [2, 384], strides = [1, 1]} : vector<2x512xf32> to vector<2x384xf32>
    %274 = arith.negf %273 : vector<2x384xf32>
    %275 = math.exp %274 : vector<2x384xf32>
    %cst_40 = arith.constant 1.000000e+00 : f32
    %276 = vector.broadcast %cst_40 : f32 to vector<2x384xf32>
    %277 = arith.addf %276, %275 : vector<2x384xf32>
    %278 = arith.divf %276, %277 : vector<2x384xf32>
    %279 = vector.extract_strided_slice %278 {offsets = [0, 0], sizes = [2, 128], strides = [1, 1]} : vector<2x384xf32> to vector<2x128xf32>
    %280 = vector.extract_strided_slice %278 {offsets = [0, 128], sizes = [2, 128], strides = [1, 1]} : vector<2x384xf32> to vector<2x128xf32>
    %281 = vector.extract_strided_slice %278 {offsets = [0, 256], sizes = [2, 128], strides = [1, 1]} : vector<2x384xf32> to vector<2x128xf32>
    %282 = vector.extract_strided_slice %272 {offsets = [0, 384], sizes = [2, 128], strides = [1, 1]} : vector<2x512xf32> to vector<2x128xf32>
    %283 = math.tanh %282 : vector<2x128xf32>
    %284 = arith.mulf %280, %245 : vector<2x128xf32>
    %285 = arith.mulf %279, %283 : vector<2x128xf32>
    %286 = arith.addf %284, %285 : vector<2x128xf32>
    %287 = math.tanh %286 : vector<2x128xf32>
    %288 = arith.mulf %281, %287 : vector<2x128xf32>
    %289 = tpu.concatenate %288, %269 in 1 : vector<2x128xf32>, vector<2x128xf32> -> vector<2x256xf32>
    %290 = arith.truncf %289 : vector<2x256xf32> to vector<2x256xbf16>
    %cst_41 = arith.constant dense<0.000000e+00> : vector<2x1024xf32>
    %291 = tpu.matmul %290, %8, %cst_41 {dimension_numbers = #tpu.dot_dimension_numbers<[1], [0], [0], [1], [0, 0, 1, 1], [], []>} : vector<2x256xbf16>, vector<256x1024xbf16>, vector<2x1024xf32> -> vector<2x1024xf32>
    %292 = vector.extract_strided_slice %291 {offsets = [0, 512], sizes = [2, 512], strides = [1, 1]} : vector<2x1024xf32> to vector<2x512xf32>
    %293 = vector.extract_strided_slice %291 {offsets = [0, 0], sizes = [2, 512], strides = [1, 1]} : vector<2x1024xf32> to vector<2x512xf32>
    %294 = arith.addf %293, %11 : vector<2x512xf32>
    %295 = vector.extract_strided_slice %294 {offsets = [0, 0], sizes = [2, 384], strides = [1, 1]} : vector<2x512xf32> to vector<2x384xf32>
    %296 = arith.negf %295 : vector<2x384xf32>
    %297 = math.exp %296 : vector<2x384xf32>
    %cst_42 = arith.constant 1.000000e+00 : f32
    %298 = vector.broadcast %cst_42 : f32 to vector<2x384xf32>
    %299 = arith.addf %298, %297 : vector<2x384xf32>
    %300 = arith.divf %298, %299 : vector<2x384xf32>
    %301 = vector.extract_strided_slice %300 {offsets = [0, 0], sizes = [2, 128], strides = [1, 1]} : vector<2x384xf32> to vector<2x128xf32>
    %302 = vector.extract_strided_slice %300 {offsets = [0, 128], sizes = [2, 128], strides = [1, 1]} : vector<2x384xf32> to vector<2x128xf32>
    %303 = vector.extract_strided_slice %300 {offsets = [0, 256], sizes = [2, 128], strides = [1, 1]} : vector<2x384xf32> to vector<2x128xf32>
    %304 = vector.extract_strided_slice %294 {offsets = [0, 384], sizes = [2, 128], strides = [1, 1]} : vector<2x512xf32> to vector<2x128xf32>
    %305 = math.tanh %304 : vector<2x128xf32>
    %306 = arith.mulf %302, %267 : vector<2x128xf32>
    %307 = arith.mulf %301, %305 : vector<2x128xf32>
    %308 = arith.addf %306, %307 : vector<2x128xf32>
    %309 = math.tanh %308 : vector<2x128xf32>
    %310 = arith.mulf %303, %309 : vector<2x128xf32>
    %311 = vector.extract_strided_slice %7 {offsets = [7, 0, 0], sizes = [1, 2, 512], strides = [1, 1, 1]} : vector<8x2x512xf32> to vector<1x2x512xf32>
    %312 = vector.shape_cast %311 : vector<1x2x512xf32> to vector<2x512xf32>
    %313 = arith.addf %312, %292 : vector<2x512xf32>
    %314 = vector.extract_strided_slice %313 {offsets = [0, 0], sizes = [2, 384], strides = [1, 1]} : vector<2x512xf32> to vector<2x384xf32>
    %315 = arith.negf %314 : vector<2x384xf32>
    %316 = math.exp %315 : vector<2x384xf32>
    %cst_43 = arith.constant 1.000000e+00 : f32
    %317 = vector.broadcast %cst_43 : f32 to vector<2x384xf32>
    %318 = arith.addf %317, %316 : vector<2x384xf32>
    %319 = arith.divf %317, %318 : vector<2x384xf32>
    %320 = vector.extract_strided_slice %319 {offsets = [0, 0], sizes = [2, 128], strides = [1, 1]} : vector<2x384xf32> to vector<2x128xf32>
    %321 = vector.extract_strided_slice %319 {offsets = [0, 128], sizes = [2, 128], strides = [1, 1]} : vector<2x384xf32> to vector<2x128xf32>
    %322 = vector.extract_strided_slice %319 {offsets = [0, 256], sizes = [2, 128], strides = [1, 1]} : vector<2x384xf32> to vector<2x128xf32>
    %323 = vector.extract_strided_slice %313 {offsets = [0, 384], sizes = [2, 128], strides = [1, 1]} : vector<2x512xf32> to vector<2x128xf32>
    %324 = math.tanh %323 : vector<2x128xf32>
    %325 = arith.mulf %321, %286 : vector<2x128xf32>
    %326 = arith.mulf %320, %324 : vector<2x128xf32>
    %327 = arith.addf %325, %326 : vector<2x128xf32>
    %328 = math.tanh %327 : vector<2x128xf32>
    %329 = arith.mulf %322, %328 : vector<2x128xf32>
    %330 = tpu.concatenate %329, %310 in 1 : vector<2x128xf32>, vector<2x128xf32> -> vector<2x256xf32>
    %331 = arith.truncf %330 : vector<2x256xf32> to vector<2x256xbf16>
    %cst_44 = arith.constant dense<0.000000e+00> : vector<2x1024xf32>
    %332 = tpu.matmul %331, %8, %cst_44 {dimension_numbers = #tpu.dot_dimension_numbers<[1], [0], [0], [1], [0, 0, 1, 1], [], []>} : vector<2x256xbf16>, vector<256x1024xbf16>, vector<2x1024xf32> -> vector<2x1024xf32>
    %333 = vector.extract_strided_slice %332 {offsets = [0, 0], sizes = [2, 512], strides = [1, 1]} : vector<2x1024xf32> to vector<2x512xf32>
    %334 = arith.addf %333, %11 : vector<2x512xf32>
    %335 = vector.extract_strided_slice %334 {offsets = [0, 0], sizes = [2, 384], strides = [1, 1]} : vector<2x512xf32> to vector<2x384xf32>
    %336 = arith.negf %335 : vector<2x384xf32>
    %337 = math.exp %336 : vector<2x384xf32>
    %cst_45 = arith.constant 1.000000e+00 : f32
    %338 = vector.broadcast %cst_45 : f32 to vector<2x384xf32>
    %339 = arith.addf %338, %337 : vector<2x384xf32>
    %340 = arith.divf %338, %339 : vector<2x384xf32>
    %341 = vector.extract_strided_slice %340 {offsets = [0, 0], sizes = [2, 128], strides = [1, 1]} : vector<2x384xf32> to vector<2x128xf32>
    %342 = vector.extract_strided_slice %340 {offsets = [0, 128], sizes = [2, 128], strides = [1, 1]} : vector<2x384xf32> to vector<2x128xf32>
    %343 = vector.extract_strided_slice %340 {offsets = [0, 256], sizes = [2, 128], strides = [1, 1]} : vector<2x384xf32> to vector<2x128xf32>
    %344 = vector.extract_strided_slice %334 {offsets = [0, 384], sizes = [2, 128], strides = [1, 1]} : vector<2x512xf32> to vector<2x128xf32>
    %345 = math.tanh %344 : vector<2x128xf32>
    %346 = arith.mulf %342, %308 : vector<2x128xf32>
    %347 = arith.mulf %341, %345 : vector<2x128xf32>
    %348 = arith.addf %346, %347 : vector<2x128xf32>
    %349 = math.tanh %348 : vector<2x128xf32>
    %350 = arith.mulf %343, %349 : vector<2x128xf32>
    %351 = vector.shape_cast %64 : vector<2x128xf32> to vector<1x2x128xf32>
    %352 = vector.shape_cast %105 : vector<2x128xf32> to vector<1x2x128xf32>
    %353 = vector.shape_cast %146 : vector<2x128xf32> to vector<1x2x128xf32>
    %354 = vector.shape_cast %187 : vector<2x128xf32> to vector<1x2x128xf32>
    %355 = vector.shape_cast %228 : vector<2x128xf32> to vector<1x2x128xf32>
    %356 = vector.shape_cast %269 : vector<2x128xf32> to vector<1x2x128xf32>
    %357 = vector.shape_cast %310 : vector<2x128xf32> to vector<1x2x128xf32>
    %358 = vector.shape_cast %350 : vector<2x128xf32> to vector<1x2x128xf32>
    %359 = tpu.concatenate %351, %352, %353, %354, %355, %356, %357, %358 in 0 : vector<1x2x128xf32>, vector<1x2x128xf32>, vector<1x2x128xf32>, vector<1x2x128xf32>, vector<1x2x128xf32>, vector<1x2x128xf32>, vector<1x2x128xf32>, vector<1x2x128xf32> -> vector<8x2x128xf32>
    %360 = vector.shape_cast %359 : vector<8x2x128xf32> to vector<16x128xf32>
    %361 = arith.truncf %360 : vector<16x128xf32> to vector<16x128xbf16>
    %c0_46 = arith.constant 0 : index
    %c0_47 = arith.constant 0 : index
    %362 = vector.load %arg7[%c0_46, %c0_47] : memref<128x128xbf16, #tpu.memory_space<vmem>>, vector<128x128xbf16>
    %cst_48 = arith.constant dense<0.000000e+00> : vector<16x128xf32>
    %363 = tpu.matmul %361, %362, %cst_48 {dimension_numbers = #tpu.dot_dimension_numbers<[1], [0], [0], [1], [0, 0, 1, 1], [], []>} : vector<16x128xbf16>, vector<128x128xbf16>, vector<16x128xf32> -> vector<16x128xf32>
    %c0_49 = arith.constant 0 : index
    %c0_50 = arith.constant 0 : index
    %364 = vector.load %arg8[%c0_49, %c0_50] : memref<1x128xf32, #tpu.memory_space<vmem>>, vector<1x128xf32>
    %365 = vector.broadcast %364 : vector<1x128xf32> to vector<16x128xf32>
    %366 = arith.addf %363, %365 : vector<16x128xf32>
    %c0_51 = arith.constant 0 : index
    %c0_52 = arith.constant 0 : index
    %367 = vector.load %arg9[%c0_51, %c0_52] : memref<16x128xf32, #tpu.memory_space<vmem>>, vector<16x128xf32>
    tpu.vector_store %arg9[%c0_51, %c0_52], %366 {strides = array<i32>} : memref<16x128xf32, #tpu.memory_space<vmem>>, vector<16x128xf32>,
    %c0_53 = arith.constant 0 : index
    %c0_54 = arith.constant 0 : index
    %c0_55 = arith.constant 0 : index
    %368 = vector.load %arg10[%c0_53, %c0_54, %c0_55] : memref<2x2x128xf32, #tpu.memory_space<vmem>>, vector<1x2x128xf32>
    %369 = vector.shape_cast %368 : vector<1x2x128xf32> to vector<2x128xf32>
    %370 = vector.shape_cast %329 : vector<2x128xf32> to vector<1x2x128xf32>
    tpu.vector_store %arg10[%c0_53, %c0_54, %c0_55], %370 {strides = array<i32>} : memref<2x2x128xf32, #tpu.memory_space<vmem>>, vector<1x2x128xf32>,
    %c1_56 = arith.constant 1 : index
    %c0_57 = arith.constant 0 : index
    %c0_58 = arith.constant 0 : index
    %371 = vector.load %arg10[%c1_56, %c0_57, %c0_58] : memref<2x2x128xf32, #tpu.memory_space<vmem>>, vector<1x2x128xf32>
    %372 = vector.shape_cast %371 : vector<1x2x128xf32> to vector<2x128xf32>
    %373 = vector.shape_cast %350 : vector<2x128xf32> to vector<1x2x128xf32>
    tpu.vector_store %arg10[%c1_56, %c0_57, %c0_58], %373 {strides = array<i32>} : memref<2x2x128xf32, #tpu.memory_space<vmem>>, vector<1x2x128xf32>,
    %c0_59 = arith.constant 0 : index
    %c0_60 = arith.constant 0 : index
    %c0_61 = arith.constant 0 : index
    %374 = vector.load %arg11[%c0_59, %c0_60, %c0_61] : memref<2x2x128xf32, #tpu.memory_space<vmem>>, vector<1x2x128xf32>
    %375 = vector.shape_cast %374 : vector<1x2x128xf32> to vector<2x128xf32>
    %376 = vector.shape_cast %327 : vector<2x128xf32> to vector<1x2x128xf32>
    tpu.vector_store %arg11[%c0_59, %c0_60, %c0_61], %376 {strides = array<i32>} : memref<2x2x128xf32, #tpu.memory_space<vmem>>, vector<1x2x128xf32>,
    %c1_62 = arith.constant 1 : index
    %c0_63 = arith.constant 0 : index
    %c0_64 = arith.constant 0 : index
    %377 = vector.load %arg11[%c1_62, %c0_63, %c0_64] : memref<2x2x128xf32, #tpu.memory_space<vmem>>, vector<1x2x128xf32>
    %378 = vector.shape_cast %377 : vector<1x2x128xf32> to vector<2x128xf32>
    %379 = vector.shape_cast %348 : vector<2x128xf32> to vector<1x2x128xf32>
    tpu.vector_store %arg11[%c1_62, %c0_63, %c0_64], %379 {strides = array<i32>} : memref<2x2x128xf32, #tpu.memory_space<vmem>>, vector<1x2x128xf32>,
    return
  }
}

</mosaic_0001>

<llo_original>
// kernel: decktalk_forward.1
$region0: #{decktalk_forward.1}
  #allocation0 [shape = 'u32[]', space=smem, size = 0x4, offset = 0x4, fixed_abs, tag = 'smem constant byte address 0x4 - core index']
  #allocation1 [shape = 'u32[72,128]{1,0:T(1,128)}', space=vmem, size = 0x9000, scoped, tag = 'internal scratch']
  %s0 = inlined_call_operand.vmem [shape: bf16[8,2,32], index: 0, kind: input, shape index: {}]
  %s1 = inlined_call_operand.vmem [shape: f32[2,2,128], index: 1, kind: input, shape index: {}]
  %s2 = inlined_call_operand.vmem [shape: f32[2,2,128], index: 2, kind: input, shape index: {}]
  %s3 = inlined_call_operand.vmem [shape: bf16[32,512], index: 3, kind: input, shape index: {}]
  %s4 = inlined_call_operand.vmem [shape: f32[1,512], index: 4, kind: input, shape index: {}]
  %s5 = inlined_call_operand.vmem [shape: bf16[256,1024], index: 5, kind: input, shape index: {}]
  %s6 = inlined_call_operand.vmem [shape: f32[1,512], index: 6, kind: input, shape index: {}]
  %s7 = inlined_call_operand.vmem [shape: bf16[128,128], index: 7, kind: input, shape index: {}]
  %s8 = inlined_call_operand.vmem [shape: f32[1,128], index: 8, kind: input, shape index: {}]
  %s9 = inlined_call_operand.vmem [shape: f32[16,128], index: 9, kind: output, shape index: {0}]
  %s10 = inlined_call_operand.hbm [shape: f32[2,2,128], index: 10, kind: output, shape index: {1}]
  %s11 = inlined_call_operand.hbm [shape: f32[2,2,128], index: 11, kind: output, shape index: {2}]
  %12 = xla_tuple %s9, %s10, %s11
  %s13 = sld [smem:[#allocation0]]
  $region62: #{decktalk_forward.1} parent=0
    _
  %s15 = ssub.s32 1, %s13
  %s16 = scalar_select 0, %s15, %s13
  $region1: #{decktalk_forward.1} parent=0
    #allocation2 [shape = 'u8[2048]{0}', space=vmem, size = 0x800, scoped, tag = 'output window, operand 1, single buffered']
    #allocation3 [shape = 's32[1]{0}', space=sflag, size = 0x4, scoped, tag = 'scoped memory for decktalk_forward.1']
    #allocation4 [shape = 'u8[2048]{0}', space=vmem, size = 0x800, scoped, tag = 'output window, operand 2, single buffered']
    #allocation5 [shape = 's32[1]{0}', space=sflag, size = 0x4, scoped, tag = 'scoped memory for decktalk_forward.1']
    %17 = vsyncpa [#allocation3], 0
    %18 = vsyncpa [#allocation5], 0
    // Predicated region
    $region2: #{decktalk_forward.1} parent=1 // pred_check
      _
    $region3: #{decktalk_forward.1} parent=1 // pred_check_branch
      %20 = sbr.rel (0) target = $region5
    $region4: #{decktalk_forward.1} parent=1 // pred_region
      _
    $region5: #{decktalk_forward.1} parent=1 // pred_fallthru
      _
    // Predicated region
    $region6: #{decktalk_forward.1} parent=1 // pred_check
      _
    $region7: #{decktalk_forward.1} parent=1 // pred_check_branch
      %22 = sbr.rel (0) target = $region9
    $region8: #{decktalk_forward.1} parent=1 // pred_region
      _
    $region9: #{decktalk_forward.1} parent=1 // pred_fallthru
      _
    // Predicated region
    $region10: #{decktalk_forward.1} parent=1 // pred_check
      _
    $region11: #{decktalk_forward.1} parent=1 // pred_check_branch
      %24 = sbr.rel (0) target = $region13
    $region12: #{decktalk_forward.1} parent=1 // pred_region
      _
    $region13: #{decktalk_forward.1} parent=1 // pred_fallthru
      _
    // Predicated region
    $region14: #{decktalk_forward.1} parent=1 // pred_check
      _
    $region15: #{decktalk_forward.1} parent=1 // pred_check_branch
      %26 = sbr.rel (0) target = $region17
    $region16: #{decktalk_forward.1} parent=1 // pred_region
      _
    $region17: #{decktalk_forward.1} parent=1 // pred_fallthru
      _
    // Predicated region
    $region18: #{decktalk_forward.1} parent=1 // pred_check
      _
    $region19: #{decktalk_forward.1} parent=1 // pred_check_branch
      %28 = sbr.rel (0) target = $region21
    $region20: #{decktalk_forward.1} parent=1 // pred_region
      _
    $region21: #{decktalk_forward.1} parent=1 // pred_fallthru
      _
    // Predicated region
    $region22: #{decktalk_forward.1} parent=1 // pred_check
      _
    $region23: #{decktalk_forward.1} parent=1 // pred_check_branch
      %30 = sbr.rel (0) target = $region25
    $region24: #{decktalk_forward.1} parent=1 // pred_region
      _
    $region25: #{decktalk_forward.1} parent=1 // pred_fallthru
      _
    // Predicated region
    $region26: #{decktalk_forward.1} parent=1 // pred_check
      _
    $region27: #{decktalk_forward.1} parent=1 // pred_check_branch
      %32 = sbr.rel (0) target = $region29
    $region28: #{decktalk_forward.1} parent=1 // pred_region
      _
    $region29: #{decktalk_forward.1} parent=1 // pred_fallthru
      _
    // Predicated region
    $region30: #{decktalk_forward.1} parent=1 // pred_check
      _
    $region31: #{decktalk_forward.1} parent=1 // pred_check_branch
      %34 = sbr.rel (0) target = $region33
    $region32: #{decktalk_forward.1} parent=1 // pred_region
      _
    $region33: #{decktalk_forward.1} parent=1 // pred_fallthru
      _
    // Predicated region
    $region34: #{decktalk_forward.1} parent=1 // pred_check
      _
    $region35: #{decktalk_forward.1} parent=1 // pred_check_branch
      %36 = sbr.rel (0) target = $region37
    $region36: #{decktalk_forward.1} parent=1 // pred_region
      _
    $region37: #{decktalk_forward.1} parent=1 // pred_fallthru
      _
    %v38 = vld [vmem:[%s0] sm:$0x1]
    %v39 = vld [vmem:[%s0 + $0x1] sm:$0x1]
    %v40 = vld [vmem:[%s0 + $0x2] sm:$0x1]
    %v41 = vld [vmem:[%s0 + $0x3] sm:$0x1]
    %v42 = vld [vmem:[%s0 + $0x4] sm:$0x1]
    %v43 = vld [vmem:[%s0 + $0x5] sm:$0x1]
    %v44 = vld [vmem:[%s0 + $0x6] sm:$0x1]
    %v45 = vld [vmem:[%s0 + $0x7] sm:$0x1]
    %v46 = vld [vmem:[%s3] sm:$0xff]
    %v47 = vld [vmem:[%s3 + $0x8] sm:$0xff]
    %v48 = vld [vmem:[%s3 + $0x10] sm:$0xff]
    %v49 = vld [vmem:[%s3 + $0x18] sm:$0xff]
    %v50 = vld [vmem:[%s3 + $0x20] sm:$0xff]
    %v51 = vld [vmem:[%s3 + $0x28] sm:$0xff]
    %v52 = vld [vmem:[%s3 + $0x30] sm:$0xff]
    %v53 = vld [vmem:[%s3 + $0x38] sm:$0xff]
    %v54 = vld [vmem:[%s4] sm:$0xf]
    %v56 = vperm.slane %v54, 0
    %v57 = vperm.slane %v54, 1
    %v58 = vperm.slane %v54, 2
    %v59 = vperm.slane %v54, 3
    %65 = vst [vmem:[#allocation1] ss:$9 sm:$0xff] %v38
    %s67 = scalar_lea.vmem [#allocation1], 1
    %68 = vst [vmem:[%s67] ss:$9 sm:$0xff] %v39
    %s70 = scalar_lea.vmem [#allocation1], 2
    %71 = vst [vmem:[%s70] ss:$9 sm:$0xff] %v40
    %s73 = scalar_lea.vmem [#allocation1], 3
    %74 = vst [vmem:[%s73] ss:$9 sm:$0xff] %v41
    %s76 = scalar_lea.vmem [#allocation1], 4
    %77 = vst [vmem:[%s76] ss:$9 sm:$0xff] %v42
    %s79 = scalar_lea.vmem [#allocation1], 5
    %80 = vst [vmem:[%s79] ss:$9 sm:$0xff] %v43
    %s82 = scalar_lea.vmem [#allocation1], 6
    %83 = vst [vmem:[%s82] ss:$9 sm:$0xff] %v44
    %s85 = scalar_lea.vmem [#allocation1], 7
    %86 = vst [vmem:[%s85] ss:$9 sm:$0xff] %v45
    %v87 = vld [vmem:[#allocation1] sm:$0xff]
    %v96 = vunpack.c.l.b16 %v46
    %v97 = vunpack.c.h.b16 %v46
    %v98 = vunpack.c.l.b16 %v47
    %v99 = vunpack.c.h.b16 %v47
    %v100 = vunpack.c.l.b16 %v48
    %v101 = vunpack.c.h.b16 %v48
    %v102 = vunpack.c.l.b16 %v49
    %v103 = vunpack.c.h.b16 %v49
    %v104 = vunpack.c.l.b16 %v50
    %v105 = vunpack.c.h.b16 %v50
    %v106 = vunpack.c.l.b16 %v51
    %v107 = vunpack.c.h.b16 %v51
    %v108 = vunpack.c.l.b16 %v52
    %v109 = vunpack.c.h.b16 %v52
    %v110 = vunpack.c.l.b16 %v53
    %v111 = vunpack.c.h.b16 %v53
    %v112 = vpack.c.b16 %v100, %v96
    %v113 = vpack.c.b16 %v101, %v97
    %v114 = vpack.c.b16 %v102, %v98
    %v115 = vpack.c.b16 %v103, %v99
    %v116 = vpack.c.b16 %v108, %v104
    %v117 = vpack.c.b16 %v109, %v105
    %v118 = vpack.c.b16 %v110, %v106
    %v119 = vpack.c.b16 %v111, %v107
    %vm128 = vcmask 261120
    %v129 = vsel %vm128, %v87, 0
    %131 = vmatpush.bf16.msra.mxu0 0
    %132 = vmatpush.bf16.msra.mxu0 0
    %133 = vmatpush.bf16.msra.mxu0 0
    %134 = vmatpush.bf16.msra.mxu0 0
    %135 = vmatpush.bf16.msra.mxu0 0
    %136 = vmatpush.bf16.msra.mxu0 0
    %137 = vmatpush.bf16.msra.mxu0 %v116
    %138 = vmatpush.bf16.msra.mxu0 %v112
    %139 = vmatmul.bf16.gmra.mxu0 %v129
    %v140 = vpop.f32.mrf.mxu0
    %v141 = vadd.f32 %v56, %v140
    %v142 = vpop.f32.mrf.mxu0
    %v143 = vadd.f32 %v56, %v142
    %144 = vdwg.mxu0
    %145 = vmatpush.bf16.msra.mxu0 0
    %146 = vmatpush.bf16.msra.mxu0 0
    %147 = vmatpush.bf16.msra.mxu0 0
    %148 = vmatpush.bf16.msra.mxu0 0
    %149 = vmatpush.bf16.msra.mxu0 0
    %150 = vmatpush.bf16.msra.mxu0 0
    %151 = vmatpush.bf16.msra.mxu0 %v117
    %152 = vmatpush.bf16.msra.mxu0 %v113
    %153 = vmatmul.bf16.gmra.mxu0 %v129
    %v154 = vpop.f32.mrf.mxu0
    %v155 = vadd.f32 %v57, %v154
    %v156 = vpop.f32.mrf.mxu0
    %v157 = vadd.f32 %v57, %v156
    %158 = vdwg.mxu0
    %159 = vmatpush.bf16.msra.mxu0 0
    %160 = vmatpush.bf16.msra.mxu0 0
    %161 = vmatpush.bf16.msra.mxu0 0
    %162 = vmatpush.bf16.msra.mxu0 0
    %163 = vmatpush.bf16.msra.mxu0 0
    %164 = vmatpush.bf16.msra.mxu0 0
    %165 = vmatpush.bf16.msra.mxu0 %v118
    %166 = vmatpush.bf16.msra.mxu0 %v114
    %167 = vmatmul.bf16.gmra.mxu0 %v129
    %v168 = vpop.f32.mrf.mxu0
    %v169 = vadd.f32 %v58, %v168
    %v170 = vpop.f32.mrf.mxu0
    %v171 = vadd.f32 %v58, %v170
    %172 = vdwg.mxu0
    %173 = vmatpush.bf16.msra.mxu0 0
    %174 = vmatpush.bf16.msra.mxu0 0
    %175 = vmatpush.bf16.msra.mxu0 0
    %176 = vmatpush.bf16.msra.mxu0 0
    %177 = vmatpush.bf16.msra.mxu0 0
    %178 = vmatpush.bf16.msra.mxu0 0
    %179 = vmatpush.bf16.msra.mxu0 %v119
    %180 = vmatpush.bf16.msra.mxu0 %v115
    %181 = vmatmul.bf16.gmra.mxu0 %v129
    %v182 = vpop.f32.mrf.mxu0
    %v183 = vadd.f32 %v59, %v182
    %v184 = vpop.f32.mrf.mxu0
    %v185 = vadd.f32 %v59, %v184
    %186 = vdwg.mxu0
    %v195 = vrot.slane %v155, 6
    %v196 = vrot.slane %v169, 4
    %v197 = vrot.slane %v183, 2
    %v198 = vrot.slane %v157, 6
    %v199 = vrot.slane %v171, 4
    %v200 = vrot.slane %v185, 2
    %vm201 = vcmask 1041408
    %v202 = vsel %vm201, %v141, %v195
    %vm203 = vcmask 1045508
    %v204 = vsel %vm203, %v196, %v197
    %vm205 = vcmask 1043456
    %v206 = vsel %vm205, %v202, %v204
    %vm207 = vcmask 1043458
    %v208 = vsel %vm207, %v141, %v195
    %vm209 = vcmask 1045504
    %v210 = vsel %vm209, %v197, %v196
    %vm211 = vcmask 1045506
    %v212 = vsel %vm211, %v208, %v210
    %v213 = vrot.slane %v212, 2
    %v214 = vsel %vm203, %v141, %v195
    %v215 = vsel %vm201, %v196, %v197
    %v216 = vsel %vm205, %v215, %v214
    %v217 = vrot.slane %v216, 4
    %v218 = vsel %vm209, %v195, %v141
    %v219 = vsel %vm207, %v196, %v197
    %v220 = vsel %vm211, %v219, %v218
    %v221 = vrot.slane %v220, 6
    %v222 = vsel %vm201, %v143, %v198
    %v223 = vsel %vm203, %v199, %v200
    %v224 = vsel %vm205, %v222, %v223
    %v225 = vsel %vm207, %v143, %v198
    %v226 = vsel %vm209, %v200, %v199
    %v227 = vsel %vm211, %v225, %v226
    %v228 = vrot.slane %v227, 2
    %v229 = vsel %vm203, %v143, %v198
    %v230 = vsel %vm201, %v199, %v200
    %v231 = vsel %vm205, %v230, %v229
    %v232 = vrot.slane %v231, 4
    %v233 = vsel %vm209, %v198, %v143
    %v234 = vsel %vm207, %v199, %v200
    %v235 = vsel %vm211, %v234, %v233
    %v236 = vrot.slane %v235, 6
    %v245 = vld [vmem:[%s5] sm:$0xff]
    %v246 = vld [vmem:[%s5 + $0x8] sm:$0xff]
    %v247 = vld [vmem:[%s5 + $0x10] sm:$0xff]
    %v248 = vld [vmem:[%s5 + $0x18] sm:$0xff]
    %v249 = vld [vmem:[%s5 + $0x20] sm:$0xff]
    %v250 = vld [vmem:[%s5 + $0x28] sm:$0xff]
    %v251 = vld [vmem:[%s5 + $0x30] sm:$0xff]
    %v252 = vld [vmem:[%s5 + $0x38] sm:$0xff]
    %v253 = vld [vmem:[%s5 + $0x40] sm:$0xff]
    %v254 = vld [vmem:[%s5 + $0x48] sm:$0xff]
    %v255 = vld [vmem:[%s5 + $0x50] sm:$0xff]
    %v256 = vld [vmem:[%s5 + $0x58] sm:$0xff]
    %v257 = vld [vmem:[%s5 + $0x60] sm:$0xff]
    %v258 = vld [vmem:[%s5 + $0x68] sm:$0xff]
    %v259 = vld [vmem:[%s5 + $0x70] sm:$0xff]
    %v260 = vld [vmem:[%s5 + $0x78] sm:$0xff]
    %v261 = vld [vmem:[%s5 + $0x80] sm:$0xff]
    %v262 = vld [vmem:[%s5 + $0x88] sm:$0xff]
    %v263 = vld [vmem:[%s5 + $0x90] sm:$0xff]
    %v264 = vld [vmem:[%s5 + $0x98] sm:$0xff]
    %v265 = vld [vmem:[%s5 + $0xa0] sm:$0xff]
    %v266 = vld [vmem:[%s5 + $0xa8] sm:$0xff]
    %v267 = vld [vmem:[%s5 + $0xb0] sm:$0xff]
    %v268 = vld [vmem:[%s5 + $0xb8] sm:$0xff]
    %v269 = vld [vmem:[%s5 + $0xc0] sm:$0xff]
    %v270 = vld [vmem:[%s5 + $0xc8] sm:$0xff]
    %v271 = vld [vmem:[%s5 + $0xd0] sm:$0xff]
    %v272 = vld [vmem:[%s5 + $0xd8] sm:$0xff]
    %v273 = vld [vmem:[%s5 + $0xe0] sm:$0xff]
    %v274 = vld [vmem:[%s5 + $0xe8] sm:$0xff]
    %v275 = vld [vmem:[%s5 + $0xf0] sm:$0xff]
    %v276 = vld [vmem:[%s5 + $0xf8] sm:$0xff]
    %v277 = vld [vmem:[%s5 + $0x100] sm:$0xff]
    %v278 = vld [vmem:[%s5 + $0x108] sm:$0xff]
    %v279 = vld [vmem:[%s5 + $0x110] sm:$0xff]
    %v280 = vld [vmem:[%s5 + $0x118] sm:$0xff]
    %v281 = vld [vmem:[%s5 + $0x120] sm:$0xff]
    %v282 = vld [vmem:[%s5 + $0x128] sm:$0xff]
    %v283 = vld [vmem:[%s5 + $0x130] sm:$0xff]
    %v284 = vld [vmem:[%s5 + $0x138] sm:$0xff]
    %v285 = vld [vmem:[%s5 + $0x140] sm:$0xff]
    %v286 = vld [vmem:[%s5 + $0x148] sm:$0xff]
    %v287 = vld [vmem:[%s5 + $0x150] sm:$0xff]
    %v288 = vld [vmem:[%s5 + $0x158] sm:$0xff]
    %v289 = vld [vmem:[%s5 + $0x160] sm:$0xff]
    %v290 = vld [vmem:[%s5 + $0x168] sm:$0xff]
    %v291 = vld [vmem:[%s5 + $0x170] sm:$0xff]
    %v292 = vld [vmem:[%s5 + $0x178] sm:$0xff]
    %v293 = vld [vmem:[%s5 + $0x180] sm:$0xff]
    %v294 = vld [vmem:[%s5 + $0x188] sm:$0xff]
    %v295 = vld [vmem:[%s5 + $0x190] sm:$0xff]
    %v296 = vld [vmem:[%s5 + $0x198] sm:$0xff]
    %v297 = vld [vmem:[%s5 + $0x1a0] sm:$0xff]
    %v298 = vld [vmem:[%s5 + $0x1a8] sm:$0xff]
    %v299 = vld [vmem:[%s5 + $0x1b0] sm:$0xff]
    %v300 = vld [vmem:[%s5 + $0x1b8] sm:$0xff]
    %v301 = vld [vmem:[%s5 + $0x1c0] sm:$0xff]
    %v302 = vld [vmem:[%s5 + $0x1c8] sm:$0xff]
    %v303 = vld [vmem:[%s5 + $0x1d0] sm:$0xff]
    %v304 = vld [vmem:[%s5 + $0x1d8] sm:$0xff]
    %v305 = vld [vmem:[%s5 + $0x1e0] sm:$0xff]
    %v306 = vld [vmem:[%s5 + $0x1e8] sm:$0xff]
    %v307 = vld [vmem:[%s5 + $0x1f0] sm:$0xff]
    %v308 = vld [vmem:[%s5 + $0x1f8] sm:$0xff]
    %v309 = vld [vmem:[%s5 + $0x200] sm:$0xff]
    %v310 = vld [vmem:[%s5 + $0x208] sm:$0xff]
    %v311 = vld [vmem:[%s5 + $0x210] sm:$0xff]
    %v312 = vld [vmem:[%s5 + $0x218] sm:$0xff]
    %v313 = vld [vmem:[%s5 + $0x220] sm:$0xff]
    %v314 = vld [vmem:[%s5 + $0x228] sm:$0xff]
    %v315 = vld [vmem:[%s5 + $0x230] sm:$0xff]
    %v316 = vld [vmem:[%s5 + $0x238] sm:$0xff]
    %v317 = vld [vmem:[%s5 + $0x240] sm:$0xff]
    %v318 = vld [vmem:[%s5 + $0x248] sm:$0xff]
    %v319 = vld [vmem:[%s5 + $0x250] sm:$0xff]
    %v320 = vld [vmem:[%s5 + $0x258] sm:$0xff]
    %v321 = vld [vmem:[%s5 + $0x260] sm:$0xff]
    %v322 = vld [vmem:[%s5 + $0x268] sm:$0xff]
    %v323 = vld [vmem:[%s5 + $0x270] sm:$0xff]
    %v324 = vld [vmem:[%s5 + $0x278] sm:$0xff]
    %v325 = vld [vmem:[%s5 + $0x280] sm:$0xff]
    %v326 = vld [vmem:[%s5 + $0x288] sm:$0xff]
    %v327 = vld [vmem:[%s5 + $0x290] sm:$0xff]
    %v328 = vld [vmem:[%s5 + $0x298] sm:$0xff]
    %v329 = vld [vmem:[%s5 + $0x2a0] sm:$0xff]
    %v330 = vld [vmem:[%s5 + $0x2a8] sm:$0xff]
    %v331 = vld [vmem:[%s5 + $0x2b0] sm:$0xff]
    %v332 = vld [vmem:[%s5 + $0x2b8] sm:$0xff]
    %v333 = vld [vmem:[%s5 + $0x2c0] sm:$0xff]
    %v334 = vld [vmem:[%s5 + $0x2c8] sm:$0xff]
    %v335 = vld [vmem:[%s5 + $0x2d0] sm:$0xff]
    %v336 = vld [vmem:[%s5 + $0x2d8] sm:$0xff]
    %v337 = vld [vmem:[%s5 + $0x2e0] sm:$0xff]
    %v338 = vld [vmem:[%s5 + $0x2e8] sm:$0xff]
    %v339 = vld [vmem:[%s5 + $0x2f0] sm:$0xff]
    %v340 = vld [vmem:[%s5 + $0x2f8] sm:$0xff]
    %v341 = vld [vmem:[%s5 + $0x300] sm:$0xff]
    %v342 = vld [vmem:[%s5 + $0x308] sm:$0xff]
    %v343 = vld [vmem:[%s5 + $0x310] sm:$0xff]
    %v344 = vld [vmem:[%s5 + $0x318] sm:$0xff]
    %v345 = vld [vmem:[%s5 + $0x320] sm:$0xff]
    %v346 = vld [vmem:[%s5 + $0x328] sm:$0xff]
    %v347 = vld [vmem:[%s5 + $0x330] sm:$0xff]
    %v348 = vld [vmem:[%s5 + $0x338] sm:$0xff]
    %v349 = vld [vmem:[%s5 + $0x340] sm:$0xff]
    %v350 = vld [vmem:[%s5 + $0x348] sm:$0xff]
    %v351 = vld [vmem:[%s5 + $0x350] sm:$0xff]
    %v352 = vld [vmem:[%s5 + $0x358] sm:$0xff]
    %v353 = vld [vmem:[%s5 + $0x360] sm:$0xff]
    %v354 = vld [vmem:[%s5 + $0x368] sm:$0xff]
    %v355 = vld [vmem:[%s5 + $0x370] sm:$0xff]
    %v356 = vld [vmem:[%s5 + $0x378] sm:$0xff]
    %v357 = vld [vmem:[%s5 + $0x380] sm:$0xff]
    %v358 = vld [vmem:[%s5 + $0x388] sm:$0xff]
    %v359 = vld [vmem:[%s5 + $0x390] sm:$0xff]
    %v360 = vld [vmem:[%s5 + $0x398] sm:$0xff]
    %v361 = vld [vmem:[%s5 + $0x3a0] sm:$0xff]
    %v362 = vld [vmem:[%s5 + $0x3a8] sm:$0xff]
    %v363 = vld [vmem:[%s5 + $0x3b0] sm:$0xff]
    %v364 = vld [vmem:[%s5 + $0x3b8] sm:$0xff]
    %v365 = vld [vmem:[%s5 + $0x3c0] sm:$0xff]
    %v366 = vld [vmem:[%s5 + $0x3c8] sm:$0xff]
    %v367 = vld [vmem:[%s5 + $0x3d0] sm:$0xff]
    %v368 = vld [vmem:[%s5 + $0x3d8] sm:$0xff]
    %v369 = vld [vmem:[%s5 + $0x3e0] sm:$0xff]
    %v370 = vld [vmem:[%s5 + $0x3e8] sm:$0xff]
    %v371 = vld [vmem:[%s5 + $0x3f0] sm:$0xff]
    %v372 = vld [vmem:[%s5 + $0x3f8] sm:$0xff]
    %v373 = vld [vmem:[%s6] sm:$0xf]
    %v375 = vperm.slane %v373, 0
    %v376 = vperm.slane %v373, 1
    %v377 = vperm.slane %v373, 2
    %v378 = vperm.slane %v373, 3
    %v383 = vld [vmem:[%s1] sm:$0x3]
    %v384 = vld [vmem:[%s2] sm:$0x3]
    %s385 = scalar_lea.vmem %s1, 2
    %v386 = vld [vmem:[%s385] sm:$0x3]
    %s387 = scalar_lea.vmem %s2, 2
    %v388 = vld [vmem:[%s387] sm:$0x3]
    %v389 = vpack.c.bf16 %v383, %v383
    %v390 = vpack.c.bf16 %v386, %v386
    %v455 = vunpack.c.l.b16 %v247
    %v456 = vunpack.c.h.b16 %v247
    %v457 = vunpack.c.l.b16 %v248
    %v458 = vunpack.c.h.b16 %v248
    %v459 = vunpack.c.l.b16 %v251
    %v460 = vunpack.c.h.b16 %v251
    %v461 = vunpack.c.l.b16 %v252
    %v462 = vunpack.c.h.b16 %v252
    %v463 = vunpack.c.l.b16 %v255
    %v464 = vunpack.c.h.b16 %v255
    %v465 = vunpack.c.l.b16 %v256
    %v466 = vunpack.c.h.b16 %v256
    %v467 = vunpack.c.l.b16 %v259
    %v468 = vunpack.c.h.b16 %v259
    %v469 = vunpack.c.l.b16 %v260
    %v470 = vunpack.c.h.b16 %v260
    %v471 = vunpack.c.l.b16 %v263
    %v472 = vunpack.c.h.b16 %v263
    %v473 = vunpack.c.l.b16 %v264
    %v474 = vunpack.c.h.b16 %v264
    %v475 = vunpack.c.l.b16 %v267
    %v476 = vunpack.c.h.b16 %v267
    %v477 = vunpack.c.l.b16 %v268
    %v478 = vunpack.c.h.b16 %v268
    %v479 = vunpack.c.l.b16 %v271
    %v480 = vunpack.c.h.b16 %v271
    %v481 = vunpack.c.l.b16 %v272
    %v482 = vunpack.c.h.b16 %v272
    %v483 = vunpack.c.l.b16 %v275
    %v484 = vunpack.c.h.b16 %v275
    %v485 = vunpack.c.l.b16 %v276
    %v486 = vunpack.c.h.b16 %v276
    %v487 = vunpack.c.l.b16 %v279
    %v488 = vunpack.c.h.b16 %v279
    %v489 = vunpack.c.l.b16 %v280
    %v490 = vunpack.c.h.b16 %v280
    %v491 = vunpack.c.l.b16 %v283
    %v492 = vunpack.c.h.b16 %v283
    %v493 = vunpack.c.l.b16 %v284
    %v494 = vunpack.c.h.b16 %v284
    %v495 = vunpack.c.l.b16 %v287
    %v496 = vunpack.c.h.b16 %v287
    %v497 = vunpack.c.l.b16 %v288
    %v498 = vunpack.c.h.b16 %v288
    %v499 = vunpack.c.l.b16 %v291
    %v500 = vunpack.c.h.b16 %v291
    %v501 = vunpack.c.l.b16 %v292
    %v502 = vunpack.c.h.b16 %v292
    %v503 = vunpack.c.l.b16 %v295
    %v504 = vunpack.c.h.b16 %v295
    %v505 = vunpack.c.l.b16 %v296
    %v506 = vunpack.c.h.b16 %v296
    %v507 = vunpack.c.l.b16 %v299
    %v508 = vunpack.c.h.b16 %v299
    %v509 = vunpack.c.l.b16 %v300
    %v510 = vunpack.c.h.b16 %v300
    %v511 = vunpack.c.l.b16 %v303
    %v512 = vunpack.c.h.b16 %v303
    %v513 = vunpack.c.l.b16 %v304
    %v514 = vunpack.c.h.b16 %v304
    %v515 = vunpack.c.l.b16 %v307
    %v516 = vunpack.c.h.b16 %v307
    %v517 = vunpack.c.l.b16 %v308
    %v518 = vunpack.c.h.b16 %v308
    %v519 = vunpack.c.l.b16 %v311
    %v520 = vunpack.c.h.b16 %v311
    %v521 = vunpack.c.l.b16 %v312
    %v522 = vunpack.c.h.b16 %v312
    %v523 = vunpack.c.l.b16 %v315
    %v524 = vunpack.c.h.b16 %v315
    %v525 = vunpack.c.l.b16 %v316
    %v526 = vunpack.c.h.b16 %v316
    %v527 = vunpack.c.l.b16 %v319
    %v528 = vunpack.c.h.b16 %v319
    %v529 = vunpack.c.l.b16 %v320
    %v530 = vunpack.c.h.b16 %v320
    %v531 = vunpack.c.l.b16 %v323
    %v532 = vunpack.c.h.b16 %v323
    %v533 = vunpack.c.l.b16 %v324
    %v534 = vunpack.c.h.b16 %v324
    %v535 = vunpack.c.l.b16 %v327
    %v536 = vunpack.c.h.b16 %v327
    %v537 = vunpack.c.l.b16 %v328
    %v538 = vunpack.c.h.b16 %v328
    %v539 = vunpack.c.l.b16 %v331
    %v540 = vunpack.c.h.b16 %v331
    %v541 = vunpack.c.l.b16 %v332
    %v542 = vunpack.c.h.b16 %v332
    %v543 = vunpack.c.l.b16 %v335
    %v544 = vunpack.c.h.b16 %v335
    %v545 = vunpack.c.l.b16 %v336
    %v546 = vunpack.c.h.b16 %v336
    %v547 = vunpack.c.l.b16 %v339
    %v548 = vunpack.c.h.b16 %v339
    %v549 = vunpack.c.l.b16 %v340
    %v550 = vunpack.c.h.b16 %v340
    %v551 = vunpack.c.l.b16 %v343
    %v552 = vunpack.c.h.b16 %v343
    %v553 = vunpack.c.l.b16 %v344
    %v554 = vunpack.c.h.b16 %v344
    %v555 = vunpack.c.l.b16 %v347
    %v556 = vunpack.c.h.b16 %v347
    %v557 = vunpack.c.l.b16 %v348
    %v558 = vunpack.c.h.b16 %v348
    %v559 = vunpack.c.l.b16 %v351
    %v560 = vunpack.c.h.b16 %v351
    %v561 = vunpack.c.l.b16 %v352
    %v562 = vunpack.c.h.b16 %v352
    %v563 = vunpack.c.l.b16 %v355
    %v564 = vunpack.c.h.b16 %v355
    %v565 = vunpack.c.l.b16 %v356
    %v566 = vunpack.c.h.b16 %v356
    %v567 = vunpack.c.l.b16 %v359
    %v568 = vunpack.c.h.b16 %v359
    %v569 = vunpack.c.l.b16 %v360
    %v570 = vunpack.c.h.b16 %v360
    %v571 = vunpack.c.l.b16 %v363
    %v572 = vunpack.c.h.b16 %v363
    %v573 = vunpack.c.l.b16 %v364
    %v574 = vunpack.c.h.b16 %v364
    %v575 = vunpack.c.l.b16 %v367
    %v576 = vunpack.c.h.b16 %v367
    %v577 = vunpack.c.l.b16 %v368
    %v578 = vunpack.c.h.b16 %v368
    %v579 = vunpack.c.l.b16 %v371
    %v580 = vunpack.c.h.b16 %v371
    %v581 = vunpack.c.l.b16 %v372
    %v582 = vunpack.c.h.b16 %v372
    %v583 = vpack.c.b16 %v459, %v455
    %v584 = vpack.c.b16 %v460, %v456
    %v585 = vpack.c.b16 %v461, %v457
    %v586 = vpack.c.b16 %v462, %v458
    %v587 = vpack.c.b16 %v467, %v463
    %v588 = vpack.c.b16 %v468, %v464
    %v589 = vpack.c.b16 %v469, %v465
    %v590 = vpack.c.b16 %v470, %v466
    %v591 = vpack.c.b16 %v475, %v471
    %v592 = vpack.c.b16 %v476, %v472
    %v593 = vpack.c.b16 %v477, %v473
    %v594 = vpack.c.b16 %v478, %v474
    %v595 = vpack.c.b16 %v483, %v479
    %v596 = vpack.c.b16 %v484, %v480
    %v597 = vpack.c.b16 %v485, %v481
    %v598 = vpack.c.b16 %v486, %v482
    %v599 = vpack.c.b16 %v491, %v487
    %v600 = vpack.c.b16 %v492, %v488
    %v601 = vpack.c.b16 %v493, %v489
    %v602 = vpack.c.b16 %v494, %v490
    %v603 = vpack.c.b16 %v499, %v495
    %v604 = vpack.c.b16 %v500, %v496
    %v605 = vpack.c.b16 %v501, %v497
    %v606 = vpack.c.b16 %v502, %v498
    %v607 = vpack.c.b16 %v507, %v503
    %v608 = vpack.c.b16 %v508, %v504
    %v609 = vpack.c.b16 %v509, %v505
    %v610 = vpack.c.b16 %v510, %v506
    %v611 = vpack.c.b16 %v515, %v511
    %v612 = vpack.c.b16 %v516, %v512
    %v613 = vpack.c.b16 %v517, %v513
    %v614 = vpack.c.b16 %v518, %v514
    %v615 = vpack.c.b16 %v523, %v519
    %v616 = vpack.c.b16 %v524, %v520
    %v617 = vpack.c.b16 %v525, %v521
    %v618 = vpack.c.b16 %v526, %v522
    %v619 = vpack.c.b16 %v531, %v527
    %v620 = vpack.c.b16 %v532, %v528
    %v621 = vpack.c.b16 %v533, %v529
    %v622 = vpack.c.b16 %v534, %v530
    %v623 = vpack.c.b16 %v539, %v535
    %v624 = vpack.c.b16 %v540, %v536
    %v625 = vpack.c.b16 %v541, %v537
    %v626 = vpack.c.b16 %v542, %v538
    %v627 = vpack.c.b16 %v547, %v543
    %v628 = vpack.c.b16 %v548, %v544
    %v629 = vpack.c.b16 %v549, %v545
    %v630 = vpack.c.b16 %v550, %v546
    %v631 = vpack.c.b16 %v555, %v551
    %v632 = vpack.c.b16 %v556, %v552
    %v633 = vpack.c.b16 %v557, %v553
    %v634 = vpack.c.b16 %v558, %v554
    %v635 = vpack.c.b16 %v563, %v559
    %v636 = vpack.c.b16 %v564, %v560
    %v637 = vpack.c.b16 %v565, %v561
    %v638 = vpack.c.b16 %v566, %v562
    %v639 = vpack.c.b16 %v571, %v567
    %v640 = vpack.c.b16 %v572, %v568
    %v641 = vpack.c.b16 %v573, %v569
    %v642 = vpack.c.b16 %v574, %v570
    %v643 = vpack.c.b16 %v579, %v575
    %v644 = vpack.c.b16 %v580, %v576
    %v645 = vpack.c.b16 %v581, %v577
    %v646 = vpack.c.b16 %v582, %v578
    %711 = vmatpush.bf16.msra.mxu0 %v611
    %712 = vmatpush.bf16.msra.mxu0 %v607
    %713 = vmatpush.bf16.msra.mxu0 %v603
    %714 = vmatpush.bf16.msra.mxu0 %v599
    %715 = vmatpush.bf16.msra.mxu0 %v595
    %716 = vmatpush.bf16.msra.mxu0 %v591
    %717 = vmatpush.bf16.msra.mxu0 %v587
    %718 = vmatpush.bf16.msra.mxu0 %v583
    %719 = vmatmul.bf16.gmra.mxu0 %v389
    %v720 = vpop.f32.mrf.mxu0
    %v721 = vadd.f32 0.0, %v720
    %v722 = vpop.f32.mrf.mxu0
    %723 = vdwg.mxu0
    %724 = vmatpush.bf16.msra.mxu0 %v643
    %725 = vmatpush.bf16.msra.mxu0 %v639
    %726 = vmatpush.bf16.msra.mxu0 %v635
    %727 = vmatpush.bf16.msra.mxu0 %v631
    %728 = vmatpush.bf16.msra.mxu0 %v627
    %729 = vmatpush.bf16.msra.mxu0 %v623
    %730 = vmatpush.bf16.msra.mxu0 %v619
    %731 = vmatpush.bf16.msra.mxu0 %v615
    %732 = vmatmul.bf16.gmra.mxu0 %v390
    %v733 = vpop.f32.mrf.mxu0
    %v734 = vadd.f32 %v721, %v733
    %v735 = vpop.f32.mrf.mxu0
    %736 = vdwg.mxu0
    %737 = vmatpush.bf16.msra.mxu0 %v612
    %738 = vmatpush.bf16.msra.mxu0 %v608
    %739 = vmatpush.bf16.msra.mxu0 %v604
    %740 = vmatpush.bf16.msra.mxu0 %v600
    %741 = vmatpush.bf16.msra.mxu0 %v596
    %742 = vmatpush.bf16.msra.mxu0 %v592
    %743 = vmatpush.bf16.msra.mxu0 %v588
    %744 = vmatpush.bf16.msra.mxu0 %v584
    %745 = vmatmul.bf16.gmra.mxu0 %v389
    %v746 = vpop.f32.mrf.mxu0
    %v747 = vadd.f32 0.0, %v746
    %v748 = vpop.f32.mrf.mxu0
    %749 = vdwg.mxu0
    %750 = vmatpush.bf16.msra.mxu0 %v644
    %751 = vmatpush.bf16.msra.mxu0 %v640
    %752 = vmatpush.bf16.msra.mxu0 %v636
    %753 = vmatpush.bf16.msra.mxu0 %v632
    %754 = vmatpush.bf16.msra.mxu0 %v628
    %755 = vmatpush.bf16.msra.mxu0 %v624
    %756 = vmatpush.bf16.msra.mxu0 %v620
    %757 = vmatpush.bf16.msra.mxu0 %v616
    %758 = vmatmul.bf16.gmra.mxu0 %v390
    %v759 = vpop.f32.mrf.mxu0
    %v760 = vadd.f32 %v747, %v759
    %v761 = vpop.f32.mrf.mxu0
    %762 = vdwg.mxu0
    %763 = vmatpush.bf16.msra.mxu0 %v613
    %764 = vmatpush.bf16.msra.mxu0 %v609
    %765 = vmatpush.bf16.msra.mxu0 %v605
    %766 = vmatpush.bf16.msra.mxu0 %v601
    %767 = vmatpush.bf16.msra.mxu0 %v597
    %768 = vmatpush.bf16.msra.mxu0 %v593
    %769 = vmatpush.bf16.msra.mxu0 %v589
    %770 = vmatpush.bf16.msra.mxu0 %v585
    %771 = vmatmul.bf16.gmra.mxu0 %v389
    %v772 = vpop.f32.mrf.mxu0
    %v773 = vadd.f32 0.0, %v772
    %v774 = vpop.f32.mrf.mxu0
    %775 = vdwg.mxu0
    %776 = vmatpush.bf16.msra.mxu0 %v645
    %777 = vmatpush.bf16.msra.mxu0 %v641
    %778 = vmatpush.bf16.msra.mxu0 %v637
    %779 = vmatpush.bf16.msra.mxu0 %v633
    %780 = vmatpush.bf16.msra.mxu0 %v629
    %781 = vmatpush.bf16.msra.mxu0 %v625
    %782 = vmatpush.bf16.msra.mxu0 %v621
    %783 = vmatpush.bf16.msra.mxu0 %v617
    %784 = vmatmul.bf16.gmra.mxu0 %v390
    %v785 = vpop.f32.mrf.mxu0
    %v786 = vadd.f32 %v773, %v785
    %v787 = vpop.f32.mrf.mxu0
    %788 = vdwg.mxu0
    %789 = vmatpush.bf16.msra.mxu0 %v614
    %790 = vmatpush.bf16.msra.mxu0 %v610
    %791 = vmatpush.bf16.msra.mxu0 %v606
    %792 = vmatpush.bf16.msra.mxu0 %v602
    %793 = vmatpush.bf16.msra.mxu0 %v598
    %794 = vmatpush.bf16.msra.mxu0 %v594
    %795 = vmatpush.bf16.msra.mxu0 %v590
    %796 = vmatpush.bf16.msra.mxu0 %v586
    %797 = vmatmul.bf16.gmra.mxu0 %v389
    %v798 = vpop.f32.mrf.mxu0
    %v799 = vadd.f32 0.0, %v798
    %v800 = vpop.f32.mrf.mxu0
    %801 = vdwg.mxu0
    %802 = vmatpush.bf16.msra.mxu0 %v646
    %803 = vmatpush.bf16.msra.mxu0 %v642
    %804 = vmatpush.bf16.msra.mxu0 %v638
    %805 = vmatpush.bf16.msra.mxu0 %v634
    %806 = vmatpush.bf16.msra.mxu0 %v630
    %807 = vmatpush.bf16.msra.mxu0 %v626
    %808 = vmatpush.bf16.msra.mxu0 %v622
    %809 = vmatpush.bf16.msra.mxu0 %v618
    %810 = vmatmul.bf16.gmra.mxu0 %v390
    %v811 = vpop.f32.mrf.mxu0
    %v812 = vadd.f32 %v799, %v811
    %v813 = vpop.f32.mrf.mxu0
    %814 = vdwg.mxu0
    %v819 = vrot.slane %v760, 6
    %v820 = vrot.slane %v786, 4
    %v821 = vrot.slane %v812, 2
    %v822 = vsel %vm201, %v734, %v819
    %v823 = vsel %vm203, %v820, %v821
    %v824 = vsel %vm205, %v822, %v823
    %v826 = vadd.f32 %v206, %v824
    %v827 = vxor.u32 %v826, 2147483648
    %v828 = vmul.f32 %v827, 1.442695
    %v829 = vpow.pop %v828
    %v830 = vadd.f32 %v829, 1.0
    %v831 = vrcp.pop %v830
    %v832 = vmul.f32 %v830, %v831
    %v833 = vsub.f32 1.0, %v832
    %v834 = vmul.f32 %v831, %v833
    %v835 = vadd.f32 %v831, %v834
    %vm836 = vweird.f32 %v830
    %vm837 = vweird.f32 %v831
    %vm838 = vmor %vm836, %vm837
    %v839 = vsel %vm838, %v831, %v835
    %v840 = vand.u32 2147483647, %v830
    %vm841 = vcmp.eq.f32.partialorder %v840, 8.507059e+37
    %v842 = vand.u32 %v830, 2147483648
    %v843 = vor.u32 1.1754944e-38, %v842
    %v844 = vsel %vm841, %v843, %v839
    %v845 = vmul.f32 1.0, %v844
    %v847 = vrot.slane %v826, 6
    %v849 = vtanh.pop %v847
    %v851 = vrot.slane %v845, 2
    %v853 = vmul.f32 %v851, %v384
    %v854 = vmul.f32 %v845, %v849
    %v855 = vadd.f32 %v853, %v854
    %v856 = vtanh.pop %v855
    %v857 = vrot.slane %v845, 4
    %v859 = vmul.f32 %v857, %v856
    %v860 = vpack.c.bf16 %v859, %v859
    %v925 = vunpack.c.l.b16 %v245
    %v926 = vunpack.c.h.b16 %v245
    %v927 = vunpack.c.l.b16 %v246
    %v928 = vunpack.c.h.b16 %v246
    %v929 = vunpack.c.l.b16 %v249
    %v930 = vunpack.c.h.b16 %v249
    %v931 = vunpack.c.l.b16 %v250
    %v932 = vunpack.c.h.b16 %v250
    %v933 = vunpack.c.l.b16 %v253
    %v934 = vunpack.c.h.b16 %v253
    %v935 = vunpack.c.l.b16 %v254
    %v936 = vunpack.c.h.b16 %v254
    %v937 = vunpack.c.l.b16 %v257
    %v938 = vunpack.c.h.b16 %v257
    %v939 = vunpack.c.l.b16 %v258
    %v940 = vunpack.c.h.b16 %v258
    %v941 = vunpack.c.l.b16 %v261
    %v942 = vunpack.c.h.b16 %v261
    %v943 = vunpack.c.l.b16 %v262
    %v944 = vunpack.c.h.b16 %v262
    %v945 = vunpack.c.l.b16 %v265
    %v946 = vunpack.c.h.b16 %v265
    %v947 = vunpack.c.l.b16 %v266
    %v948 = vunpack.c.h.b16 %v266
    %v949 = vunpack.c.l.b16 %v269
    %v950 = vunpack.c.h.b16 %v269
    %v951 = vunpack.c.l.b16 %v270
    %v952 = vunpack.c.h.b16 %v270
    %v953 = vunpack.c.l.b16 %v273
    %v954 = vunpack.c.h.b16 %v273
    %v955 = vunpack.c.l.b16 %v274
    %v956 = vunpack.c.h.b16 %v274
    %v957 = vunpack.c.l.b16 %v277
    %v958 = vunpack.c.h.b16 %v277
    %v959 = vunpack.c.l.b16 %v278
    %v960 = vunpack.c.h.b16 %v278
    %v961 = vunpack.c.l.b16 %v281
    %v962 = vunpack.c.h.b16 %v281
    %v963 = vunpack.c.l.b16 %v282
    %v964 = vunpack.c.h.b16 %v282
    %v965 = vunpack.c.l.b16 %v285
    %v966 = vunpack.c.h.b16 %v285
    %v967 = vunpack.c.l.b16 %v286
    %v968 = vunpack.c.h.b16 %v286
    %v969 = vunpack.c.l.b16 %v289
    %v970 = vunpack.c.h.b16 %v289
    %v971 = vunpack.c.l.b16 %v290
    %v972 = vunpack.c.h.b16 %v290
    %v973 = vunpack.c.l.b16 %v293
    %v974 = vunpack.c.h.b16 %v293
    %v975 = vunpack.c.l.b16 %v294
    %v976 = vunpack.c.h.b16 %v294
    %v977 = vunpack.c.l.b16 %v297
    %v978 = vunpack.c.h.b16 %v297
    %v979 = vunpack.c.l.b16 %v298
    %v980 = vunpack.c.h.b16 %v298
    %v981 = vunpack.c.l.b16 %v301
    %v982 = vunpack.c.h.b16 %v301
    %v983 = vunpack.c.l.b16 %v302
    %v984 = vunpack.c.h.b16 %v302
    %v985 = vunpack.c.l.b16 %v305
    %v986 = vunpack.c.h.b16 %v305
    %v987 = vunpack.c.l.b16 %v306
    %v988 = vunpack.c.h.b16 %v306
    %v989 = vunpack.c.l.b16 %v309
    %v990 = vunpack.c.h.b16 %v309
    %v991 = vunpack.c.l.b16 %v310
    %v992 = vunpack.c.h.b16 %v310
    %v993 = vunpack.c.l.b16 %v313
    %v994 = vunpack.c.h.b16 %v313
    %v995 = vunpack.c.l.b16 %v314
    %v996 = vunpack.c.h.b16 %v314
    %v997 = vunpack.c.l.b16 %v317
    %v998 = vunpack.c.h.b16 %v317
    %v999 = vunpack.c.l.b16 %v318
    %v1000 = vunpack.c.h.b16 %v318
    %v1001 = vunpack.c.l.b16 %v321
    %v1002 = vunpack.c.h.b16 %v321
    %v1003 = vunpack.c.l.b16 %v322
    %v1004 = vunpack.c.h.b16 %v322
    %v1005 = vunpack.c.l.b16 %v325
    %v1006 = vunpack.c.h.b16 %v325
    %v1007 = vunpack.c.l.b16 %v326
    %v1008 = vunpack.c.h.b16 %v326
    %v1009 = vunpack.c.l.b16 %v329
    %v1010 = vunpack.c.h.b16 %v329
    %v1011 = vunpack.c.l.b16 %v330
    %v1012 = vunpack.c.h.b16 %v330
    %v1013 = vunpack.c.l.b16 %v333
    %v1014 = vunpack.c.h.b16 %v333
    %v1015 = vunpack.c.l.b16 %v334
    %v1016 = vunpack.c.h.b16 %v334
    %v1017 = vunpack.c.l.b16 %v337
    %v1018 = vunpack.c.h.b16 %v337
    %v1019 = vunpack.c.l.b16 %v338
    %v1020 = vunpack.c.h.b16 %v338
    %v1021 = vunpack.c.l.b16 %v341
    %v1022 = vunpack.c.h.b16 %v341
    %v1023 = vunpack.c.l.b16 %v342
    %v1024 = vunpack.c.h.b16 %v342
    %v1025 = vunpack.c.l.b16 %v345
    %v1026 = vunpack.c.h.b16 %v345
    %v1027 = vunpack.c.l.b16 %v346
    %v1028 = vunpack.c.h.b16 %v346
    %v1029 = vunpack.c.l.b16 %v349
    %v1030 = vunpack.c.h.b16 %v349
    %v1031 = vunpack.c.l.b16 %v350
    %v1032 = vunpack.c.h.b16 %v350
    %v1033 = vunpack.c.l.b16 %v353
    %v1034 = vunpack.c.h.b16 %v353
    %v1035 = vunpack.c.l.b16 %v354
    %v1036 = vunpack.c.h.b16 %v354
    %v1037 = vunpack.c.l.b16 %v357
    %v1038 = vunpack.c.h.b16 %v357
    %v1039 = vunpack.c.l.b16 %v358
    %v1040 = vunpack.c.h.b16 %v358
    %v1041 = vunpack.c.l.b16 %v361
    %v1042 = vunpack.c.h.b16 %v361
    %v1043 = vunpack.c.l.b16 %v362
    %v1044 = vunpack.c.h.b16 %v362
    %v1045 = vunpack.c.l.b16 %v365
    %v1046 = vunpack.c.h.b16 %v365
    %v1047 = vunpack.c.l.b16 %v366
    %v1048 = vunpack.c.h.b16 %v366
    %v1049 = vunpack.c.l.b16 %v369
    %v1050 = vunpack.c.h.b16 %v369
    %v1051 = vunpack.c.l.b16 %v370
    %v1052 = vunpack.c.h.b16 %v370
    %v1053 = vpack.c.b16 %v929, %v925
    %v1054 = vpack.c.b16 %v930, %v926
    %v1055 = vpack.c.b16 %v931, %v927
    %v1056 = vpack.c.b16 %v932, %v928
    %v1057 = vpack.c.b16 %v937, %v933
    %v1058 = vpack.c.b16 %v938, %v934
    %v1059 = vpack.c.b16 %v939, %v935
    %v1060 = vpack.c.b16 %v940, %v936
    %v1061 = vpack.c.b16 %v945, %v941
    %v1062 = vpack.c.b16 %v946, %v942
    %v1063 = vpack.c.b16 %v947, %v943
    %v1064 = vpack.c.b16 %v948, %v944
    %v1065 = vpack.c.b16 %v953, %v949
    %v1066 = vpack.c.b16 %v954, %v950
    %v1067 = vpack.c.b16 %v955, %v951
    %v1068 = vpack.c.b16 %v956, %v952
    %v1069 = vpack.c.b16 %v961, %v957
    %v1070 = vpack.c.b16 %v962, %v958
    %v1071 = vpack.c.b16 %v963, %v959
    %v1072 = vpack.c.b16 %v964, %v960
    %v1073 = vpack.c.b16 %v969, %v965
    %v1074 = vpack.c.b16 %v970, %v966
    %v1075 = vpack.c.b16 %v971, %v967
    %v1076 = vpack.c.b16 %v972, %v968
    %v1077 = vpack.c.b16 %v977, %v973
    %v1078 = vpack.c.b16 %v978, %v974
    %v1079 = vpack.c.b16 %v979, %v975
    %v1080 = vpack.c.b16 %v980, %v976
    %v1081 = vpack.c.b16 %v985, %v981
    %v1082 = vpack.c.b16 %v986, %v982
    %v1083 = vpack.c.b16 %v987, %v983
    %v1084 = vpack.c.b16 %v988, %v984
    %v1085 = vpack.c.b16 %v993, %v989
    %v1086 = vpack.c.b16 %v994, %v990
    %v1087 = vpack.c.b16 %v995, %v991
    %v1088 = vpack.c.b16 %v996, %v992
    %v1089 = vpack.c.b16 %v1001, %v997
    %v1090 = vpack.c.b16 %v1002, %v998
    %v1091 = vpack.c.b16 %v1003, %v999
    %v1092 = vpack.c.b16 %v1004, %v1000
    %v1093 = vpack.c.b16 %v1009, %v1005
    %v1094 = vpack.c.b16 %v1010, %v1006
    %v1095 = vpack.c.b16 %v1011, %v1007
    %v1096 = vpack.c.b16 %v1012, %v1008
    %v1097 = vpack.c.b16 %v1017, %v1013
    %v1098 = vpack.c.b16 %v1018, %v1014
    %v1099 = vpack.c.b16 %v1019, %v1015
    %v1100 = vpack.c.b16 %v1020, %v1016
    %v1101 = vpack.c.b16 %v1025, %v1021
    %v1102 = vpack.c.b16 %v1026, %v1022
    %v1103 = vpack.c.b16 %v1027, %v1023
    %v1104 = vpack.c.b16 %v1028, %v1024
    %v1105 = vpack.c.b16 %v1033, %v1029
    %v1106 = vpack.c.b16 %v1034, %v1030
    %v1107 = vpack.c.b16 %v1035, %v1031
    %v1108 = vpack.c.b16 %v1036, %v1032
    %v1109 = vpack.c.b16 %v1041, %v1037
    %v1110 = vpack.c.b16 %v1042, %v1038
    %v1111 = vpack.c.b16 %v1043, %v1039
    %v1112 = vpack.c.b16 %v1044, %v1040
    %v1113 = vpack.c.b16 %v1049, %v1045
    %v1114 = vpack.c.b16 %v1050, %v1046
    %v1115 = vpack.c.b16 %v1051, %v1047
    %v1116 = vpack.c.b16 %v1052, %v1048
    %1181 = vmatpush.bf16.msra.mxu0 %v1081
    %1182 = vmatpush.bf16.msra.mxu0 %v1077
    %1183 = vmatpush.bf16.msra.mxu0 %v1073
    %1184 = vmatpush.bf16.msra.mxu0 %v1069
    %1185 = vmatpush.bf16.msra.mxu0 %v1065
    %1186 = vmatpush.bf16.msra.mxu0 %v1061
    %1187 = vmatpush.bf16.msra.mxu0 %v1057
    %1188 = vmatpush.bf16.msra.mxu0 %v1053
    %1189 = vmatmul.bf16.gmra.mxu0 %v860
    %v1190 = vpop.f32.mrf.mxu0
    %v1191 = vadd.f32 0.0, %v1190
    %v1192 = vpop.f32.mrf.mxu0
    %1193 = vdwg.mxu0
    %1194 = vmatpush.bf16.msra.mxu0 %v1113
    %1195 = vmatpush.bf16.msra.mxu0 %v1109
    %1196 = vmatpush.bf16.msra.mxu0 %v1105
    %1197 = vmatpush.bf16.msra.mxu0 %v1101
    %1198 = vmatpush.bf16.msra.mxu0 %v1097
    %1199 = vmatpush.bf16.msra.mxu0 %v1093
    %1200 = vmatpush.bf16.msra.mxu0 %v1089
    %1201 = vmatpush.bf16.msra.mxu0 %v1085
    %1202 = vmatmul.bf16.gmra.mxu0 %v390
    %v1203 = vpop.f32.mrf.mxu0
    %v1204 = vadd.f32 %v1191, %v1203
    %v1205 = vpop.f32.mrf.mxu0
    %1206 = vdwg.mxu0
    %1207 = vmatpush.bf16.msra.mxu0 %v1082
    %1208 = vmatpush.bf16.msra.mxu0 %v1078
    %1209 = vmatpush.bf16.msra.mxu0 %v1074
    %1210 = vmatpush.bf16.msra.mxu0 %v1070
    %1211 = vmatpush.bf16.msra.mxu0 %v1066
    %1212 = vmatpush.bf16.msra.mxu0 %v1062
    %1213 = vmatpush.bf16.msra.mxu0 %v1058
    %1214 = vmatpush.bf16.msra.mxu0 %v1054
    %1215 = vmatmul.bf16.gmra.mxu0 %v860
    %v1216 = vpop.f32.mrf.mxu0
    %v1217 = vadd.f32 0.0, %v1216
    %v1218 = vpop.f32.mrf.mxu0
    %1219 = vdwg.mxu0
    %1220 = vmatpush.bf16.msra.mxu0 %v1114
    %1221 = vmatpush.bf16.msra.mxu0 %v1110
    %1222 = vmatpush.bf16.msra.mxu0 %v1106
    %1223 = vmatpush.bf16.msra.mxu0 %v1102
    %1224 = vmatpush.bf16.msra.mxu0 %v1098
    %1225 = vmatpush.bf16.msra.mxu0 %v1094
    %1226 = vmatpush.bf16.msra.mxu0 %v1090
    %1227 = vmatpush.bf16.msra.mxu0 %v1086
    %1228 = vmatmul.bf16.gmra.mxu0 %v390
    %v1229 = vpop.f32.mrf.mxu0
    %v1230 = vadd.f32 %v1217, %v1229
    %v1231 = vpop.f32.mrf.mxu0
    %1232 = vdwg.mxu0
    %1233 = vmatpush.bf16.msra.mxu0 %v1083
    %1234 = vmatpush.bf16.msra.mxu0 %v1079
    %1235 = vmatpush.bf16.msra.mxu0 %v1075
    %1236 = vmatpush.bf16.msra.mxu0 %v1071
    %1237 = vmatpush.bf16.msra.mxu0 %v1067
    %1238 = vmatpush.bf16.msra.mxu0 %v1063
    %1239 = vmatpush.bf16.msra.mxu0 %v1059
    %1240 = vmatpush.bf16.msra.mxu0 %v1055
    %1241 = vmatmul.bf16.gmra.mxu0 %v860
    %v1242 = vpop.f32.mrf.mxu0
    %v1243 = vadd.f32 0.0, %v1242
    %v1244 = vpop.f32.mrf.mxu0
    %1245 = vdwg.mxu0
    %1246 = vmatpush.bf16.msra.mxu0 %v1115
    %1247 = vmatpush.bf16.msra.mxu0 %v1111
    %1248 = vmatpush.bf16.msra.mxu0 %v1107
    %1249 = vmatpush.bf16.msra.mxu0 %v1103
    %1250 = vmatpush.bf16.msra.mxu0 %v1099
    %1251 = vmatpush.bf16.msra.mxu0 %v1095
    %1252 = vmatpush.bf16.msra.mxu0 %v1091
    %1253 = vmatpush.bf16.msra.mxu0 %v1087
    %1254 = vmatmul.bf16.gmra.mxu0 %v390
    %v1255 = vpop.f32.mrf.mxu0
    %v1256 = vadd.f32 %v1243, %v1255
    %v1257 = vpop.f32.mrf.mxu0
    %1258 = vdwg.mxu0
    %1259 = vmatpush.bf16.msra.mxu0 %v1084
    %1260 = vmatpush.bf16.msra.mxu0 %v1080
    %1261 = vmatpush.bf16.msra.mxu0 %v1076
    %1262 = vmatpush.bf16.msra.mxu0 %v1072
    %1263 = vmatpush.bf16.msra.mxu0 %v1068
    %1264 = vmatpush.bf16.msra.mxu0 %v1064
    %1265 = vmatpush.bf16.msra.mxu0 %v1060
    %1266 = vmatpush.bf16.msra.mxu0 %v1056
    %1267 = vmatmul.bf16.gmra.mxu0 %v860
    %v1268 = vpop.f32.mrf.mxu0
    %v1269 = vadd.f32 0.0, %v1268
    %v1270 = vpop.f32.mrf.mxu0
    %1271 = vdwg.mxu0
    %1272 = vmatpush.bf16.msra.mxu0 %v1116
    %1273 = vmatpush.bf16.msra.mxu0 %v1112
    %1274 = vmatpush.bf16.msra.mxu0 %v1108
    %1275 = vmatpush.bf16.msra.mxu0 %v1104
    %1276 = vmatpush.bf16.msra.mxu0 %v1100
    %1277 = vmatpush.bf16.msra.mxu0 %v1096
    %1278 = vmatpush.bf16.msra.mxu0 %v1092
    %1279 = vmatpush.bf16.msra.mxu0 %v1088
    %1280 = vmatmul.bf16.gmra.mxu0 %v390
    %v1281 = vpop.f32.mrf.mxu0
    %v1282 = vadd.f32 %v1269, %v1281
    %v1283 = vpop.f32.mrf.mxu0
    %1284 = vdwg.mxu0
    %1285 = vmatpush.bf16.msra.mxu0 %v611
    %1286 = vmatpush.bf16.msra.mxu0 %v607
    %1287 = vmatpush.bf16.msra.mxu0 %v603
    %1288 = vmatpush.bf16.msra.mxu0 %v599
    %1289 = vmatpush.bf16.msra.mxu0 %v595
    %1290 = vmatpush.bf16.msra.mxu0 %v591
    %1291 = vmatpush.bf16.msra.mxu0 %v587
    %1292 = vmatpush.bf16.msra.mxu0 %v583
    %1293 = vmatmul.bf16.gmra.mxu0 %v860
    %v1294 = vpop.f32.mrf.mxu0
    %v1295 = vadd.f32 0.0, %v1294
    %v1296 = vpop.f32.mrf.mxu0
    %1297 = vdwg.mxu0
    %1298 = vmatpush.bf16.msra.mxu0 %v643
    %1299 = vmatpush.bf16.msra.mxu0 %v639
    %1300 = vmatpush.bf16.msra.mxu0 %v635
    %1301 = vmatpush.bf16.msra.mxu0 %v631
    %1302 = vmatpush.bf16.msra.mxu0 %v627
    %1303 = vmatpush.bf16.msra.mxu0 %v623
    %1304 = vmatpush.bf16.msra.mxu0 %v619
    %1305 = vmatpush.bf16.msra.mxu0 %v615
    %1306 = vmatmul.bf16.gmra.mxu0 %v390
    %v1307 = vpop.f32.mrf.mxu0
    %v1308 = vadd.f32 %v1295, %v1307
    %v1309 = vpop.f32.mrf.mxu0
    %1310 = vdwg.mxu0
    %1311 = vmatpush.bf16.msra.mxu0 %v612
    %1312 = vmatpush.bf16.msra.mxu0 %v608
    %1313 = vmatpush.bf16.msra.mxu0 %v604
    %1314 = vmatpush.bf16.msra.mxu0 %v600
    %1315 = vmatpush.bf16.msra.mxu0 %v596
    %1316 = vmatpush.bf16.msra.mxu0 %v592
    %1317 = vmatpush.bf16.msra.mxu0 %v588
    %1318 = vmatpush.bf16.msra.mxu0 %v584
    %1319 = vmatmul.bf16.gmra.mxu0 %v860
    %v1320 = vpop.f32.mrf.mxu0
    %v1321 = vadd.f32 0.0, %v1320
    %v1322 = vpop.f32.mrf.mxu0
    %1323 = vdwg.mxu0
    %1324 = vmatpush.bf16.msra.mxu0 %v644
    %1325 = vmatpush.bf16.msra.mxu0 %v640
    %1326 = vmatpush.bf16.msra.mxu0 %v636
    %1327 = vmatpush.bf16.msra.mxu0 %v632
    %1328 = vmatpush.bf16.msra.mxu0 %v628
    %1329 = vmatpush.bf16.msra.mxu0 %v624
    %1330 = vmatpush.bf16.msra.mxu0 %v620
    %1331 = vmatpush.bf16.msra.mxu0 %v616
    %1332 = vmatmul.bf16.gmra.mxu0 %v390
    %v1333 = vpop.f32.mrf.mxu0
    %v1334 = vadd.f32 %v1321, %v1333
    %v1335 = vpop.f32.mrf.mxu0
    %1336 = vdwg.mxu0
    %1337 = vmatpush.bf16.msra.mxu0 %v613
    %1338 = vmatpush.bf16.msra.mxu0 %v609
    %1339 = vmatpush.bf16.msra.mxu0 %v605
    %1340 = vmatpush.bf16.msra.mxu0 %v601
    %1341 = vmatpush.bf16.msra.mxu0 %v597
    %1342 = vmatpush.bf16.msra.mxu0 %v593
    %1343 = vmatpush.bf16.msra.mxu0 %v589
    %1344 = vmatpush.bf16.msra.mxu0 %v585
    %1345 = vmatmul.bf16.gmra.mxu0 %v860
    %v1346 = vpop.f32.mrf.mxu0
    %v1347 = vadd.f32 0.0, %v1346
    %v1348 = vpop.f32.mrf.mxu0
    %1349 = vdwg.mxu0
    %1350 = vmatpush.bf16.msra.mxu0 %v645
    %1351 = vmatpush.bf16.msra.mxu0 %v641
    %1352 = vmatpush.bf16.msra.mxu0 %v637
    %1353 = vmatpush.bf16.msra.mxu0 %v633
    %1354 = vmatpush.bf16.msra.mxu0 %v629
    %1355 = vmatpush.bf16.msra.mxu0 %v625
    %1356 = vmatpush.bf16.msra.mxu0 %v621
    %1357 = vmatpush.bf16.msra.mxu0 %v617
    %1358 = vmatmul.bf16.gmra.mxu0 %v390
    %v1359 = vpop.f32.mrf.mxu0
    %v1360 = vadd.f32 %v1347, %v1359
    %v1361 = vpop.f32.mrf.mxu0
    %1362 = vdwg.mxu0
    %1363 = vmatpush.bf16.msra.mxu0 %v614
    %1364 = vmatpush.bf16.msra.mxu0 %v610
    %1365 = vmatpush.bf16.msra.mxu0 %v606
    %1366 = vmatpush.bf16.msra.mxu0 %v602
    %1367 = vmatpush.bf16.msra.mxu0 %v598
    %1368 = vmatpush.bf16.msra.mxu0 %v594
    %1369 = vmatpush.bf16.msra.mxu0 %v590
    %1370 = vmatpush.bf16.msra.mxu0 %v586
    %1371 = vmatmul.bf16.gmra.mxu0 %v860
    %v1372 = vpop.f32.mrf.mxu0
    %v1373 = vadd.f32 0.0, %v1372
    %v1374 = vpop.f32.mrf.mxu0
    %1375 = vdwg.mxu0
    %1376 = vmatpush.bf16.msra.mxu0 %v646
    %1377 = vmatpush.bf16.msra.mxu0 %v642
    %1378 = vmatpush.bf16.msra.mxu0 %v638
    %1379 = vmatpush.bf16.msra.mxu0 %v634
    %1380 = vmatpush.bf16.msra.mxu0 %v630
    %1381 = vmatpush.bf16.msra.mxu0 %v626
    %1382 = vmatpush.bf16.msra.mxu0 %v622
    %1383 = vmatpush.bf16.msra.mxu0 %v618
    %1384 = vmatmul.bf16.gmra.mxu0 %v390
    %v1385 = vpop.f32.mrf.mxu0
    %v1386 = vadd.f32 %v1373, %v1385
    %v1387 = vpop.f32.mrf.mxu0
    %1388 = vdwg.mxu0
    %v1389 = vadd.f32 %v1204, %v375
    %v1390 = vadd.f32 %v1230, %v376
    %v1391 = vadd.f32 %v1256, %v377
    %v1392 = vadd.f32 %v1282, %v378
    %v1393 = vxor.u32 %v1389, 2147483648
    %v1394 = vxor.u32 %v1390, 2147483648
    %v1395 = vxor.u32 %v1391, 2147483648
    %v1396 = vmul.f32 %v1393, 1.442695
    %v1397 = vpow.pop %v1396
    %v1398 = vmul.f32 %v1394, 1.442695
    %v1399 = vpow.pop %v1398
    %v1400 = vmul.f32 %v1395, 1.442695
    %v1401 = vpow.pop %v1400
    %v1402 = vadd.f32 %v1397, 1.0
    %v1403 = vadd.f32 %v1399, 1.0
    %v1404 = vadd.f32 %v1401, 1.0
    %v1405 = vrcp.pop %v1402
    %v1406 = vmul.f32 %v1402, %v1405
    %v1407 = vsub.f32 1.0, %v1406
    %v1408 = vmul.f32 %v1405, %v1407
    %v1409 = vadd.f32 %v1405, %v1408
    %vm1410 = vweird.f32 %v1402
    %vm1411 = vweird.f32 %v1405
    %vm1412 = vmor %vm1410, %vm1411
    %v1413 = vsel %vm1412, %v1405, %v1409
    %v1414 = vand.u32 2147483647, %v1402
    %vm1415 = vcmp.eq.f32.partialorder %v1414, 8.507059e+37
    %v1416 = vand.u32 %v1402, 2147483648
    %v1417 = vor.u32 1.1754944e-38, %v1416
    %v1418 = vsel %vm1415, %v1417, %v1413
    %v1419 = vmul.f32 1.0, %v1418
    %v1420 = vrcp.pop %v1403
    %v1421 = vmul.f32 %v1403, %v1420
    %v1422 = vsub.f32 1.0, %v1421
    %v1423 = vmul.f32 %v1420, %v1422
    %v1424 = vadd.f32 %v1420, %v1423
    %vm1425 = vweird.f32 %v1403
    %vm1426 = vweird.f32 %v1420
    %vm1427 = vmor %vm1425, %vm1426
    %v1428 = vsel %vm1427, %v1420, %v1424
    %v1429 = vand.u32 2147483647, %v1403
    %vm1430 = vcmp.eq.f32.partialorder %v1429, 8.507059e+37
    %v1431 = vand.u32 %v1403, 2147483648
    %v1432 = vor.u32 1.1754944e-38, %v1431
    %v1433 = vsel %vm1430, %v1432, %v1428
    %v1434 = vmul.f32 1.0, %v1433
    %v1435 = vrcp.pop %v1404
    %v1436 = vmul.f32 %v1404, %v1435
    %v1437 = vsub.f32 1.0, %v1436
    %v1438 = vmul.f32 %v1435, %v1437
    %v1439 = vadd.f32 %v1435, %v1438
    %vm1440 = vweird.f32 %v1404
    %vm1441 = vweird.f32 %v1435
    %vm1442 = vmor %vm1440, %vm1441
    %v1443 = vsel %vm1442, %v1435, %v1439
    %v1444 = vand.u32 2147483647, %v1404
    %vm1445 = vcmp.eq.f32.partialorder %v1444, 8.507059e+37
    %v1446 = vand.u32 %v1404, 2147483648
    %v1447 = vor.u32 1.1754944e-38, %v1446
    %v1448 = vsel %vm1445, %v1447, %v1443
    %v1449 = vmul.f32 1.0, %v1448
    %v1450 = vtanh.pop %v1392
    %v1451 = vmul.f32 %v1434, %v388
    %v1452 = vmul.f32 %v1419, %v1450
    %v1453 = vadd.f32 %v1451, %v1452
    %v1454 = vtanh.pop %v1453
    %v1455 = vmul.f32 %v1449, %v1454
    %v1460 = vrot.slane %v1334, 6
    %v1461 = vrot.slane %v1360, 4
    %v1462 = vrot.slane %v1386, 2
    %v1463 = vsel %vm201, %v1308, %v1460
    %v1464 = vsel %vm203, %v1461, %v1462
    %v1465 = vsel %vm205, %v1463, %v1464
    %v1467 = vadd.f32 %v213, %v1465
    %v1468 = vxor.u32 %v1467, 2147483648
    %v1469 = vmul.f32 %v1468, 1.442695
    %v1470 = vpow.pop %v1469
    %v1471 = vadd.f32 %v1470, 1.0
    %v1472 = vrcp.pop %v1471
    %v1473 = vmul.f32 %v1471, %v1472
    %v1474 = vsub.f32 1.0, %v1473
    %v1475 = vmul.f32 %v1472, %v1474
    %v1476 = vadd.f32 %v1472, %v1475
    %vm1477 = vweird.f32 %v1471
    %vm1478 = vweird.f32 %v1472
    %vm1479 = vmor %vm1477, %vm1478
    %v1480 = vsel %vm1479, %v1472, %v1476
    %v1481 = vand.u32 2147483647, %v1471
    %vm1482 = vcmp.eq.f32.partialorder %v1481, 8.507059e+37
    %v1483 = vand.u32 %v1471, 2147483648
    %v1484 = vor.u32 1.1754944e-38, %v1483
    %v1485 = vsel %vm1482, %v1484, %v1480
    %v1486 = vmul.f32 1.0, %v1485
    %v1488 = vrot.slane %v1467, 6
    %v1490 = vtanh.pop %v1488
    %v1492 = vrot.slane %v1486, 2
    %v1494 = vmul.f32 %v1492, %v855
    %v1495 = vmul.f32 %v1486, %v1490
    %v1496 = vadd.f32 %v1494, %v1495
    %v1497 = vtanh.pop %v1496
    %v1498 = vrot.slane %v1486, 4
    %v1500 = vmul.f32 %v1498, %v1497
    %v1501 = vpack.c.bf16 %v1500, %v1500
    %v1502 = vpack.c.bf16 %v1455, %v1455
    %1503 = vmatpush.bf16.msra.mxu0 %v1081
    %1504 = vmatpush.bf16.msra.mxu0 %v1077
    %1505 = vmatpush.bf16.msra.mxu0 %v1073
    %1506 = vmatpush.bf16.msra.mxu0 %v1069
    %1507 = vmatpush.bf16.msra.mxu0 %v1065
    %1508 = vmatpush.bf16.msra.mxu0 %v1061
    %1509 = vmatpush.bf16.msra.mxu0 %v1057
    %1510 = vmatpush.bf16.msra.mxu0 %v1053
    %1511 = vmatmul.bf16.gmra.mxu0 %v1501
    %v1512 = vpop.f32.mrf.mxu0
    %v1513 = vadd.f32 0.0, %v1512
    %v1514 = vpop.f32.mrf.mxu0
    %1515 = vdwg.mxu0
    %1516 = vmatpush.bf16.msra.mxu0 %v1113
    %1517 = vmatpush.bf16.msra.mxu0 %v1109
    %1518 = vmatpush.bf16.msra.mxu0 %v1105
    %1519 = vmatpush.bf16.msra.mxu0 %v1101
    %1520 = vmatpush.bf16.msra.mxu0 %v1097
    %1521 = vmatpush.bf16.msra.mxu0 %v1093
    %1522 = vmatpush.bf16.msra.mxu0 %v1089
    %1523 = vmatpush.bf16.msra.mxu0 %v1085
    %1524 = vmatmul.bf16.gmra.mxu0 %v1502
    %v1525 = vpop.f32.mrf.mxu0
    %v1526 = vadd.f32 %v1513, %v1525
    %v1527 = vpop.f32.mrf.mxu0
    %1528 = vdwg.mxu0
    %1529 = vmatpush.bf16.msra.mxu0 %v1082
    %1530 = vmatpush.bf16.msra.mxu0 %v1078
    %1531 = vmatpush.bf16.msra.mxu0 %v1074
    %1532 = vmatpush.bf16.msra.mxu0 %v1070
    %1533 = vmatpush.bf16.msra.mxu0 %v1066
    %1534 = vmatpush.bf16.msra.mxu0 %v1062
    %1535 = vmatpush.bf16.msra.mxu0 %v1058
    %1536 = vmatpush.bf16.msra.mxu0 %v1054
    %1537 = vmatmul.bf16.gmra.mxu0 %v1501
    %v1538 = vpop.f32.mrf.mxu0
    %v1539 = vadd.f32 0.0, %v1538
    %v1540 = vpop.f32.mrf.mxu0
    %1541 = vdwg.mxu0
    %1542 = vmatpush.bf16.msra.mxu0 %v1114
    %1543 = vmatpush.bf16.msra.mxu0 %v1110
    %1544 = vmatpush.bf16.msra.mxu0 %v1106
    %1545 = vmatpush.bf16.msra.mxu0 %v1102
    %1546 = vmatpush.bf16.msra.mxu0 %v1098
    %1547 = vmatpush.bf16.msra.mxu0 %v1094
    %1548 = vmatpush.bf16.msra.mxu0 %v1090
    %1549 = vmatpush.bf16.msra.mxu0 %v1086
    %1550 = vmatmul.bf16.gmra.mxu0 %v1502
    %v1551 = vpop.f32.mrf.mxu0
    %v1552 = vadd.f32 %v1539, %v1551
    %v1553 = vpop.f32.mrf.mxu0
    %1554 = vdwg.mxu0
    %1555 = vmatpush.bf16.msra.mxu0 %v1083
    %1556 = vmatpush.bf16.msra.mxu0 %v1079
    %1557 = vmatpush.bf16.msra.mxu0 %v1075
    %1558 = vmatpush.bf16.msra.mxu0 %v1071
    %1559 = vmatpush.bf16.msra.mxu0 %v1067
    %1560 = vmatpush.bf16.msra.mxu0 %v1063
    %1561 = vmatpush.bf16.msra.mxu0 %v1059
    %1562 = vmatpush.bf16.msra.mxu0 %v1055
    %1563 = vmatmul.bf16.gmra.mxu0 %v1501
    %v1564 = vpop.f32.mrf.mxu0
    %v1565 = vadd.f32 0.0, %v1564
    %v1566 = vpop.f32.mrf.mxu0
    %1567 = vdwg.mxu0
    %1568 = vmatpush.bf16.msra.mxu0 %v1115
    %1569 = vmatpush.bf16.msra.mxu0 %v1111
    %1570 = vmatpush.bf16.msra.mxu0 %v1107
    %1571 = vmatpush.bf16.msra.mxu0 %v1103
    %1572 = vmatpush.bf16.msra.mxu0 %v1099
    %1573 = vmatpush.bf16.msra.mxu0 %v1095
    %1574 = vmatpush.bf16.msra.mxu0 %v1091
    %1575 = vmatpush.bf16.msra.mxu0 %v1087
    %1576 = vmatmul.bf16.gmra.mxu0 %v1502
    %v1577 = vpop.f32.mrf.mxu0
    %v1578 = vadd.f32 %v1565, %v1577
    %v1579 = vpop.f32.mrf.mxu0
    %1580 = vdwg.mxu0
    %1581 = vmatpush.bf16.msra.mxu0 %v1084
    %1582 = vmatpush.bf16.msra.mxu0 %v1080
    %1583 = vmatpush.bf16.msra.mxu0 %v1076
    %1584 = vmatpush.bf16.msra.mxu0 %v1072
    %1585 = vmatpush.bf16.msra.mxu0 %v1068
    %1586 = vmatpush.bf16.msra.mxu0 %v1064
    %1587 = vmatpush.bf16.msra.mxu0 %v1060
    %1588 = vmatpush.bf16.msra.mxu0 %v1056
    %1589 = vmatmul.bf16.gmra.mxu0 %v1501
    %v1590 = vpop.f32.mrf.mxu0
    %v1591 = vadd.f32 0.0, %v1590
    %v1592 = vpop.f32.mrf.mxu0
    %1593 = vdwg.mxu0
    %1594 = vmatpush.bf16.msra.mxu0 %v1116
    %1595 = vmatpush.bf16.msra.mxu0 %v1112
    %1596 = vmatpush.bf16.msra.mxu0 %v1108
    %1597 = vmatpush.bf16.msra.mxu0 %v1104
    %1598 = vmatpush.bf16.msra.mxu0 %v1100
    %1599 = vmatpush.bf16.msra.mxu0 %v1096
    %1600 = vmatpush.bf16.msra.mxu0 %v1092
    %1601 = vmatpush.bf16.msra.mxu0 %v1088
    %1602 = vmatmul.bf16.gmra.mxu0 %v1502
    %v1603 = vpop.f32.mrf.mxu0
    %v1604 = vadd.f32 %v1591, %v1603
    %v1605 = vpop.f32.mrf.mxu0
    %1606 = vdwg.mxu0
    %1607 = vmatpush.bf16.msra.mxu0 %v611
    %1608 = vmatpush.bf16.msra.mxu0 %v607
    %1609 = vmatpush.bf16.msra.mxu0 %v603
    %1610 = vmatpush.bf16.msra.mxu0 %v599
    %1611 = vmatpush.bf16.msra.mxu0 %v595
    %1612 = vmatpush.bf16.msra.mxu0 %v591
    %1613 = vmatpush.bf16.msra.mxu0 %v587
    %1614 = vmatpush.bf16.msra.mxu0 %v583
    %1615 = vmatmul.bf16.gmra.mxu0 %v1501
    %v1616 = vpop.f32.mrf.mxu0
    %v1617 = vadd.f32 0.0, %v1616
    %v1618 = vpop.f32.mrf.mxu0
    %1619 = vdwg.mxu0
    %1620 = vmatpush.bf16.msra.mxu0 %v643
    %1621 = vmatpush.bf16.msra.mxu0 %v639
    %1622 = vmatpush.bf16.msra.mxu0 %v635
    %1623 = vmatpush.bf16.msra.mxu0 %v631
    %1624 = vmatpush.bf16.msra.mxu0 %v627
    %1625 = vmatpush.bf16.msra.mxu0 %v623
    %1626 = vmatpush.bf16.msra.mxu0 %v619
    %1627 = vmatpush.bf16.msra.mxu0 %v615
    %1628 = vmatmul.bf16.gmra.mxu0 %v1502
    %v1629 = vpop.f32.mrf.mxu0
    %v1630 = vadd.f32 %v1617, %v1629
    %v1631 = vpop.f32.mrf.mxu0
    %1632 = vdwg.mxu0
    %1633 = vmatpush.bf16.msra.mxu0 %v612
    %1634 = vmatpush.bf16.msra.mxu0 %v608
    %1635 = vmatpush.bf16.msra.mxu0 %v604
    %1636 = vmatpush.bf16.msra.mxu0 %v600
    %1637 = vmatpush.bf16.msra.mxu0 %v596
    %1638 = vmatpush.bf16.msra.mxu0 %v592
    %1639 = vmatpush.bf16.msra.mxu0 %v588
    %1640 = vmatpush.bf16.msra.mxu0 %v584
    %1641 = vmatmul.bf16.gmra.mxu0 %v1501
    %v1642 = vpop.f32.mrf.mxu0
    %v1643 = vadd.f32 0.0, %v1642
    %v1644 = vpop.f32.mrf.mxu0
    %1645 = vdwg.mxu0
    %1646 = vmatpush.bf16.msra.mxu0 %v644
    %1647 = vmatpush.bf16.msra.mxu0 %v640
    %1648 = vmatpush.bf16.msra.mxu0 %v636
    %1649 = vmatpush.bf16.msra.mxu0 %v632
    %1650 = vmatpush.bf16.msra.mxu0 %v628
    %1651 = vmatpush.bf16.msra.mxu0 %v624
    %1652 = vmatpush.bf16.msra.mxu0 %v620
    %1653 = vmatpush.bf16.msra.mxu0 %v616
    %1654 = vmatmul.bf16.gmra.mxu0 %v1502
    %v1655 = vpop.f32.mrf.mxu0
    %v1656 = vadd.f32 %v1643, %v1655
    %v1657 = vpop.f32.mrf.mxu0
    %1658 = vdwg.mxu0
    %1659 = vmatpush.bf16.msra.mxu0 %v613
    %1660 = vmatpush.bf16.msra.mxu0 %v609
    %1661 = vmatpush.bf16.msra.mxu0 %v605
    %1662 = vmatpush.bf16.msra.mxu0 %v601
    %1663 = vmatpush.bf16.msra.mxu0 %v597
    %1664 = vmatpush.bf16.msra.mxu0 %v593
    %1665 = vmatpush.bf16.msra.mxu0 %v589
    %1666 = vmatpush.bf16.msra.mxu0 %v585
    %1667 = vmatmul.bf16.gmra.mxu0 %v1501
    %v1668 = vpop.f32.mrf.mxu0
    %v1669 = vadd.f32 0.0, %v1668
    %v1670 = vpop.f32.mrf.mxu0
    %1671 = vdwg.mxu0
    %1672 = vmatpush.bf16.msra.mxu0 %v645
    %1673 = vmatpush.bf16.msra.mxu0 %v641
    %1674 = vmatpush.bf16.msra.mxu0 %v637
    %1675 = vmatpush.bf16.msra.mxu0 %v633
    %1676 = vmatpush.bf16.msra.mxu0 %v629
    %1677 = vmatpush.bf16.msra.mxu0 %v625
    %1678 = vmatpush.bf16.msra.mxu0 %v621
    %1679 = vmatpush.bf16.msra.mxu0 %v617
    %1680 = vmatmul.bf16.gmra.mxu0 %v1502
    %v1681 = vpop.f32.mrf.mxu0
    %v1682 = vadd.f32 %v1669, %v1681
    %v1683 = vpop.f32.mrf.mxu0
    %1684 = vdwg.mxu0
    %1685 = vmatpush.bf16.msra.mxu0 %v614
    %1686 = vmatpush.bf16.msra.mxu0 %v610
    %1687 = vmatpush.bf16.msra.mxu0 %v606
    %1688 = vmatpush.bf16.msra.mxu0 %v602
    %1689 = vmatpush.bf16.msra.mxu0 %v598
    %1690 = vmatpush.bf16.msra.mxu0 %v594
    %1691 = vmatpush.bf16.msra.mxu0 %v590
    %1692 = vmatpush.bf16.msra.mxu0 %v586
    %1693 = vmatmul.bf16.gmra.mxu0 %v1501
    %v1694 = vpop.f32.mrf.mxu0
    %v1695 = vadd.f32 0.0, %v1694
    %v1696 = vpop.f32.mrf.mxu0
    %1697 = vdwg.mxu0
    %1698 = vmatpush.bf16.msra.mxu0 %v646
    %1699 = vmatpush.bf16.msra.mxu0 %v642
    %1700 = vmatpush.bf16.msra.mxu0 %v638
    %1701 = vmatpush.bf16.msra.mxu0 %v634
    %1702 = vmatpush.bf16.msra.mxu0 %v630
    %1703 = vmatpush.bf16.msra.mxu0 %v626
    %1704 = vmatpush.bf16.msra.mxu0 %v622
    %1705 = vmatpush.bf16.msra.mxu0 %v618
    %1706 = vmatmul.bf16.gmra.mxu0 %v1502
    %v1707 = vpop.f32.mrf.mxu0
    %v1708 = vadd.f32 %v1695, %v1707
    %v1709 = vpop.f32.mrf.mxu0
    %1710 = vdwg.mxu0
    %v1711 = vadd.f32 %v1526, %v375
    %v1712 = vadd.f32 %v1552, %v376
    %v1713 = vadd.f32 %v1578, %v377
    %v1714 = vadd.f32 %v1604, %v378
    %v1715 = vxor.u32 %v1711, 2147483648
    %v1716 = vxor.u32 %v1712, 2147483648
    %v1717 = vxor.u32 %v1713, 2147483648
    %v1718 = vmul.f32 %v1715, 1.442695
    %v1719 = vpow.pop %v1718
    %v1720 = vmul.f32 %v1716, 1.442695
    %v1721 = vpow.pop %v1720
    %v1722 = vmul.f32 %v1717, 1.442695
    %v1723 = vpow.pop %v1722
    %v1724 = vadd.f32 %v1719, 1.0
    %v1725 = vadd.f32 %v1721, 1.0
    %v1726 = vadd.f32 %v1723, 1.0
    %v1727 = vrcp.pop %v1724
    %v1728 = vmul.f32 %v1724, %v1727
    %v1729 = vsub.f32 1.0, %v1728
    %v1730 = vmul.f32 %v1727, %v1729
    %v1731 = vadd.f32 %v1727, %v1730
    %vm1732 = vweird.f32 %v1724
    %vm1733 = vweird.f32 %v1727
    %vm1734 = vmor %vm1732, %vm1733
    %v1735 = vsel %vm1734, %v1727, %v1731
    %v1736 = vand.u32 2147483647, %v1724
    %vm1737 = vcmp.eq.f32.partialorder %v1736, 8.507059e+37
    %v1738 = vand.u32 %v1724, 2147483648
    %v1739 = vor.u32 1.1754944e-38, %v1738
    %v1740 = vsel %vm1737, %v1739, %v1735
    %v1741 = vmul.f32 1.0, %v1740
    %v1742 = vrcp.pop %v1725
    %v1743 = vmul.f32 %v1725, %v1742
    %v1744 = vsub.f32 1.0, %v1743
    %v1745 = vmul.f32 %v1742, %v1744
    %v1746 = vadd.f32 %v1742, %v1745
    %vm1747 = vweird.f32 %v1725
    %vm1748 = vweird.f32 %v1742
    %vm1749 = vmor %vm1747, %vm1748
    %v1750 = vsel %vm1749, %v1742, %v1746
    %v1751 = vand.u32 2147483647, %v1725
    %vm1752 = vcmp.eq.f32.partialorder %v1751, 8.507059e+37
    %v1753 = vand.u32 %v1725, 2147483648
    %v1754 = vor.u32 1.1754944e-38, %v1753
    %v1755 = vsel %vm1752, %v1754, %v1750
    %v1756 = vmul.f32 1.0, %v1755
    %v1757 = vrcp.pop %v1726
    %v1758 = vmul.f32 %v1726, %v1757
    %v1759 = vsub.f32 1.0, %v1758
    %v1760 = vmul.f32 %v1757, %v1759
    %v1761 = vadd.f32 %v1757, %v1760
    %vm1762 = vweird.f32 %v1726
    %vm1763 = vweird.f32 %v1757
    %vm1764 = vmor %vm1762, %vm1763
    %v1765 = vsel %vm1764, %v1757, %v1761
    %v1766 = vand.u32 2147483647, %v1726
    %vm1767 = vcmp.eq.f32.partialorder %v1766, 8.507059e+37
    %v1768 = vand.u32 %v1726, 2147483648
    %v1769 = vor.u32 1.1754944e-38, %v1768
    %v1770 = vsel %vm1767, %v1769, %v1765
    %v1771 = vmul.f32 1.0, %v1770
    %v1772 = vtanh.pop %v1714
    %v1773 = vmul.f32 %v1756, %v1453
    %v1774 = vmul.f32 %v1741, %v1772
    %v1775 = vadd.f32 %v1773, %v1774
    %v1776 = vtanh.pop %v1775
    %v1777 = vmul.f32 %v1771, %v1776
    %v1782 = vrot.slane %v1656, 6
    %v1783 = vrot.slane %v1682, 4
    %v1784 = vrot.slane %v1708, 2
    %v1785 = vsel %vm201, %v1630, %v1782
    %v1786 = vsel %vm203, %v1783, %v1784
    %v1787 = vsel %vm205, %v1785, %v1786
    %v1789 = vadd.f32 %v217, %v1787
    %v1790 = vxor.u32 %v1789, 2147483648
    %v1791 = vmul.f32 %v1790, 1.442695
    %v1792 = vpow.pop %v1791
    %v1793 = vadd.f32 %v1792, 1.0
    %v1794 = vrcp.pop %v1793
    %v1795 = vmul.f32 %v1793, %v1794
    %v1796 = vsub.f32 1.0, %v1795
    %v1797 = vmul.f32 %v1794, %v1796
    %v1798 = vadd.f32 %v1794, %v1797
    %vm1799 = vweird.f32 %v1793
    %vm1800 = vweird.f32 %v1794
    %vm1801 = vmor %vm1799, %vm1800
    %v1802 = vsel %vm1801, %v1794, %v1798
    %v1803 = vand.u32 2147483647, %v1793
    %vm1804 = vcmp.eq.f32.partialorder %v1803, 8.507059e+37
    %v1805 = vand.u32 %v1793, 2147483648
    %v1806 = vor.u32 1.1754944e-38, %v1805
    %v1807 = vsel %vm1804, %v1806, %v1802
    %v1808 = vmul.f32 1.0, %v1807
    %v1810 = vrot.slane %v1789, 6
    %v1812 = vtanh.pop %v1810
    %v1814 = vrot.slane %v1808, 2
    %v1816 = vmul.f32 %v1814, %v1496
    %v1817 = vmul.f32 %v1808, %v1812
    %v1818 = vadd.f32 %v1816, %v1817
    %v1819 = vtanh.pop %v1818
    %v1820 = vrot.slane %v1808, 4
    %v1822 = vmul.f32 %v1820, %v1819
    %v1823 = vpack.c.bf16 %v1822, %v1822
    %v1824 = vpack.c.bf16 %v1777, %v1777
    %1825 = vmatpush.bf16.msra.mxu0 %v1081
    %1826 = vmatpush.bf16.msra.mxu0 %v1077
    %1827 = vmatpush.bf16.msra.mxu0 %v1073
    %1828 = vmatpush.bf16.msra.mxu0 %v1069
    %1829 = vmatpush.bf16.msra.mxu0 %v1065
    %1830 = vmatpush.bf16.msra.mxu0 %v1061
    %1831 = vmatpush.bf16.msra.mxu0 %v1057
    %1832 = vmatpush.bf16.msra.mxu0 %v1053
    %1833 = vmatmul.bf16.gmra.mxu0 %v1823
    %v1834 = vpop.f32.mrf.mxu0
    %v1835 = vadd.f32 0.0, %v1834
    %v1836 = vpop.f32.mrf.mxu0
    %1837 = vdwg.mxu0
    %1838 = vmatpush.bf16.msra.mxu0 %v1113
    %1839 = vmatpush.bf16.msra.mxu0 %v1109
    %1840 = vmatpush.bf16.msra.mxu0 %v1105
    %1841 = vmatpush.bf16.msra.mxu0 %v1101
    %1842 = vmatpush.bf16.msra.mxu0 %v1097
    %1843 = vmatpush.bf16.msra.mxu0 %v1093
    %1844 = vmatpush.bf16.msra.mxu0 %v1089
    %1845 = vmatpush.bf16.msra.mxu0 %v1085
    %1846 = vmatmul.bf16.gmra.mxu0 %v1824
    %v1847 = vpop.f32.mrf.mxu0
    %v1848 = vadd.f32 %v1835, %v1847
    %v1849 = vpop.f32.mrf.mxu0
    %1850 = vdwg.mxu0
    %1851 = vmatpush.bf16.msra.mxu0 %v1082
    %1852 = vmatpush.bf16.msra.mxu0 %v1078
    %1853 = vmatpush.bf16.msra.mxu0 %v1074
    %1854 = vmatpush.bf16.msra.mxu0 %v1070
    %1855 = vmatpush.bf16.msra.mxu0 %v1066
    %1856 = vmatpush.bf16.msra.mxu0 %v1062
    %1857 = vmatpush.bf16.msra.mxu0 %v1058
    %1858 = vmatpush.bf16.msra.mxu0 %v1054
    %1859 = vmatmul.bf16.gmra.mxu0 %v1823
    %v1860 = vpop.f32.mrf.mxu0
    %v1861 = vadd.f32 0.0, %v1860
    %v1862 = vpop.f32.mrf.mxu0
    %1863 = vdwg.mxu0
    %1864 = vmatpush.bf16.msra.mxu0 %v1114
    %1865 = vmatpush.bf16.msra.mxu0 %v1110
    %1866 = vmatpush.bf16.msra.mxu0 %v1106
    %1867 = vmatpush.bf16.msra.mxu0 %v1102
    %1868 = vmatpush.bf16.msra.mxu0 %v1098
    %1869 = vmatpush.bf16.msra.mxu0 %v1094
    %1870 = vmatpush.bf16.msra.mxu0 %v1090
    %1871 = vmatpush.bf16.msra.mxu0 %v1086
    %1872 = vmatmul.bf16.gmra.mxu0 %v1824
    %v1873 = vpop.f32.mrf.mxu0
    %v1874 = vadd.f32 %v1861, %v1873
    %v1875 = vpop.f32.mrf.mxu0
    %1876 = vdwg.mxu0
    %1877 = vmatpush.bf16.msra.mxu0 %v1083
    %1878 = vmatpush.bf16.msra.mxu0 %v1079
    %1879 = vmatpush.bf16.msra.mxu0 %v1075
    %1880 = vmatpush.bf16.msra.mxu0 %v1071
    %1881 = vmatpush.bf16.msra.mxu0 %v1067
    %1882 = vmatpush.bf16.msra.mxu0 %v1063
    %1883 = vmatpush.bf16.msra.mxu0 %v1059
    %1884 = vmatpush.bf16.msra.mxu0 %v1055
    %1885 = vmatmul.bf16.gmra.mxu0 %v1823
    %v1886 = vpop.f32.mrf.mxu0
    %v1887 = vadd.f32 0.0, %v1886
    %v1888 = vpop.f32.mrf.mxu0
    %1889 = vdwg.mxu0
    %1890 = vmatpush.bf16.msra.mxu0 %v1115
    %1891 = vmatpush.bf16.msra.mxu0 %v1111
    %1892 = vmatpush.bf16.msra.mxu0 %v1107
    %1893 = vmatpush.bf16.msra.mxu0 %v1103
    %1894 = vmatpush.bf16.msra.mxu0 %v1099
    %1895 = vmatpush.bf16.msra.mxu0 %v1095
    %1896 = vmatpush.bf16.msra.mxu0 %v1091
    %1897 = vmatpush.bf16.msra.mxu0 %v1087
    %1898 = vmatmul.bf16.gmra.mxu0 %v1824
    %v1899 = vpop.f32.mrf.mxu0
    %v1900 = vadd.f32 %v1887, %v1899
    %v1901 = vpop.f32.mrf.mxu0
    %1902 = vdwg.mxu0
    %1903 = vmatpush.bf16.msra.mxu0 %v1084
    %1904 = vmatpush.bf16.msra.mxu0 %v1080
    %1905 = vmatpush.bf16.msra.mxu0 %v1076
    %1906 = vmatpush.bf16.msra.mxu0 %v1072
    %1907 = vmatpush.bf16.msra.mxu0 %v1068
    %1908 = vmatpush.bf16.msra.mxu0 %v1064
    %1909 = vmatpush.bf16.msra.mxu0 %v1060
    %1910 = vmatpush.bf16.msra.mxu0 %v1056
    %1911 = vmatmul.bf16.gmra.mxu0 %v1823
    %v1912 = vpop.f32.mrf.mxu0
    %v1913 = vadd.f32 0.0, %v1912
    %v1914 = vpop.f32.mrf.mxu0
    %1915 = vdwg.mxu0
    %1916 = vmatpush.bf16.msra.mxu0 %v1116
    %1917 = vmatpush.bf16.msra.mxu0 %v1112
    %1918 = vmatpush.bf16.msra.mxu0 %v1108
    %1919 = vmatpush.bf16.msra.mxu0 %v1104
    %1920 = vmatpush.bf16.msra.mxu0 %v1100
    %1921 = vmatpush.bf16.msra.mxu0 %v1096
    %1922 = vmatpush.bf16.msra.mxu0 %v1092
    %1923 = vmatpush.bf16.msra.mxu0 %v1088
    %1924 = vmatmul.bf16.gmra.mxu0 %v1824
    %v1925 = vpop.f32.mrf.mxu0
    %v1926 = vadd.f32 %v1913, %v1925
    %v1927 = vpop.f32.mrf.mxu0
    %1928 = vdwg.mxu0
    %1929 = vmatpush.bf16.msra.mxu0 %v611
    %1930 = vmatpush.bf16.msra.mxu0 %v607
    %1931 = vmatpush.bf16.msra.mxu0 %v603
    %1932 = vmatpush.bf16.msra.mxu0 %v599
    %1933 = vmatpush.bf16.msra.mxu0 %v595
    %1934 = vmatpush.bf16.msra.mxu0 %v591
    %1935 = vmatpush.bf16.msra.mxu0 %v587
    %1936 = vmatpush.bf16.msra.mxu0 %v583
    %1937 = vmatmul.bf16.gmra.mxu0 %v1823
    %v1938 = vpop.f32.mrf.mxu0
    %v1939 = vadd.f32 0.0, %v1938
    %v1940 = vpop.f32.mrf.mxu0
    %1941 = vdwg.mxu0
    %1942 = vmatpush.bf16.msra.mxu0 %v643
    %1943 = vmatpush.bf16.msra.mxu0 %v639
    %1944 = vmatpush.bf16.msra.mxu0 %v635
    %1945 = vmatpush.bf16.msra.mxu0 %v631
    %1946 = vmatpush.bf16.msra.mxu0 %v627
    %1947 = vmatpush.bf16.msra.mxu0 %v623
    %1948 = vmatpush.bf16.msra.mxu0 %v619
    %1949 = vmatpush.bf16.msra.mxu0 %v615
    %1950 = vmatmul.bf16.gmra.mxu0 %v1824
    %v1951 = vpop.f32.mrf.mxu0
    %v1952 = vadd.f32 %v1939, %v1951
    %v1953 = vpop.f32.mrf.mxu0
    %1954 = vdwg.mxu0
    %1955 = vmatpush.bf16.msra.mxu0 %v612
    %1956 = vmatpush.bf16.msra.mxu0 %v608
    %1957 = vmatpush.bf16.msra.mxu0 %v604
    %1958 = vmatpush.bf16.msra.mxu0 %v600
    %1959 = vmatpush.bf16.msra.mxu0 %v596
    %1960 = vmatpush.bf16.msra.mxu0 %v592
    %1961 = vmatpush.bf16.msra.mxu0 %v588
    %1962 = vmatpush.bf16.msra.mxu0 %v584
    %1963 = vmatmul.bf16.gmra.mxu0 %v1823
    %v1964 = vpop.f32.mrf.mxu0
    %v1965 = vadd.f32 0.0, %v1964
    %v1966 = vpop.f32.mrf.mxu0
    %1967 = vdwg.mxu0
    %1968 = vmatpush.bf16.msra.mxu0 %v644
    %1969 = vmatpush.bf16.msra.mxu0 %v640
    %1970 = vmatpush.bf16.msra.mxu0 %v636
    %1971 = vmatpush.bf16.msra.mxu0 %v632
    %1972 = vmatpush.bf16.msra.mxu0 %v628
    %1973 = vmatpush.bf16.msra.mxu0 %v624
    %1974 = vmatpush.bf16.msra.mxu0 %v620
    %1975 = vmatpush.bf16.msra.mxu0 %v616
    %1976 = vmatmul.bf16.gmra.mxu0 %v1824
    %v1977 = vpop.f32.mrf.mxu0
    %v1978 = vadd.f32 %v1965, %v1977
    %v1979 = vpop.f32.mrf.mxu0
    %1980 = vdwg.mxu0
    %1981 = vmatpush.bf16.msra.mxu0 %v613
    %1982 = vmatpush.bf16.msra.mxu0 %v609
    %1983 = vmatpush.bf16.msra.mxu0 %v605
    %1984 = vmatpush.bf16.msra.mxu0 %v601
    %1985 = vmatpush.bf16.msra.mxu0 %v597
    %1986 = vmatpush.bf16.msra.mxu0 %v593
    %1987 = vmatpush.bf16.msra.mxu0 %v589
    %1988 = vmatpush.bf16.msra.mxu0 %v585
    %1989 = vmatmul.bf16.gmra.mxu0 %v1823
    %v1990 = vpop.f32.mrf.mxu0
    %v1991 = vadd.f32 0.0, %v1990
    %v1992 = vpop.f32.mrf.mxu0
    %1993 = vdwg.mxu0
    %1994 = vmatpush.bf16.msra.mxu0 %v645
    %1995 = vmatpush.bf16.msra.mxu0 %v641
    %1996 = vmatpush.bf16.msra.mxu0 %v637
    %1997 = vmatpush.bf16.msra.mxu0 %v633
    %1998 = vmatpush.bf16.msra.mxu0 %v629
    %1999 = vmatpush.bf16.msra.mxu0 %v625
    %2000 = vmatpush.bf16.msra.mxu0 %v621
    %2001 = vmatpush.bf16.msra.mxu0 %v617
    %2002 = vmatmul.bf16.gmra.mxu0 %v1824
    %v2003 = vpop.f32.mrf.mxu0
    %v2004 = vadd.f32 %v1991, %v2003
    %v2005 = vpop.f32.mrf.mxu0
    %2006 = vdwg.mxu0
    %2007 = vmatpush.bf16.msra.mxu0 %v614
    %2008 = vmatpush.bf16.msra.mxu0 %v610
    %2009 = vmatpush.bf16.msra.mxu0 %v606
    %2010 = vmatpush.bf16.msra.mxu0 %v602
    %2011 = vmatpush.bf16.msra.mxu0 %v598
    %2012 = vmatpush.bf16.msra.mxu0 %v594
    %2013 = vmatpush.bf16.msra.mxu0 %v590
    %2014 = vmatpush.bf16.msra.mxu0 %v586
    %2015 = vmatmul.bf16.gmra.mxu0 %v1823
    %v2016 = vpop.f32.mrf.mxu0
    %v2017 = vadd.f32 0.0, %v2016
    %v2018 = vpop.f32.mrf.mxu0
    %2019 = vdwg.mxu0
    %2020 = vmatpush.bf16.msra.mxu0 %v646
    %2021 = vmatpush.bf16.msra.mxu0 %v642
    %2022 = vmatpush.bf16.msra.mxu0 %v638
    %2023 = vmatpush.bf16.msra.mxu0 %v634
    %2024 = vmatpush.bf16.msra.mxu0 %v630
    %2025 = vmatpush.bf16.msra.mxu0 %v626
    %2026 = vmatpush.bf16.msra.mxu0 %v622
    %2027 = vmatpush.bf16.msra.mxu0 %v618
    %2028 = vmatmul.bf16.gmra.mxu0 %v1824
    %v2029 = vpop.f32.mrf.mxu0
    %v2030 = vadd.f32 %v2017, %v2029
    %v2031 = vpop.f32.mrf.mxu0
    %2032 = vdwg.mxu0
    %v2033 = vadd.f32 %v1848, %v375
    %v2034 = vadd.f32 %v1874, %v376
    %v2035 = vadd.f32 %v1900, %v377
    %v2036 = vadd.f32 %v1926, %v378
    %v2037 = vxor.u32 %v2033, 2147483648
    %v2038 = vxor.u32 %v2034, 2147483648
    %v2039 = vxor.u32 %v2035, 2147483648
    %v2040 = vmul.f32 %v2037, 1.442695
    %v2041 = vpow.pop %v2040
    %v2042 = vmul.f32 %v2038, 1.442695
    %v2043 = vpow.pop %v2042
    %v2044 = vmul.f32 %v2039, 1.442695
    %v2045 = vpow.pop %v2044
    %v2046 = vadd.f32 %v2041, 1.0
    %v2047 = vadd.f32 %v2043, 1.0
    %v2048 = vadd.f32 %v2045, 1.0
    %v2049 = vrcp.pop %v2046
    %v2050 = vmul.f32 %v2046, %v2049
    %v2051 = vsub.f32 1.0, %v2050
    %v2052 = vmul.f32 %v2049, %v2051
    %v2053 = vadd.f32 %v2049, %v2052
    %vm2054 = vweird.f32 %v2046
    %vm2055 = vweird.f32 %v2049
    %vm2056 = vmor %vm2054, %vm2055
    %v2057 = vsel %vm2056, %v2049, %v2053
    %v2058 = vand.u32 2147483647, %v2046
    %vm2059 = vcmp.eq.f32.partialorder %v2058, 8.507059e+37
    %v2060 = vand.u32 %v2046, 2147483648
    %v2061 = vor.u32 1.1754944e-38, %v2060
    %v2062 = vsel %vm2059, %v2061, %v2057
    %v2063 = vmul.f32 1.0, %v2062
    %v2064 = vrcp.pop %v2047
    %v2065 = vmul.f32 %v2047, %v2064
    %v2066 = vsub.f32 1.0, %v2065
    %v2067 = vmul.f32 %v2064, %v2066
    %v2068 = vadd.f32 %v2064, %v2067
    %vm2069 = vweird.f32 %v2047
    %vm2070 = vweird.f32 %v2064
    %vm2071 = vmor %vm2069, %vm2070
    %v2072 = vsel %vm2071, %v2064, %v2068
    %v2073 = vand.u32 2147483647, %v2047
    %vm2074 = vcmp.eq.f32.partialorder %v2073, 8.507059e+37
    %v2075 = vand.u32 %v2047, 2147483648
    %v2076 = vor.u32 1.1754944e-38, %v2075
    %v2077 = vsel %vm2074, %v2076, %v2072
    %v2078 = vmul.f32 1.0, %v2077
    %v2079 = vrcp.pop %v2048
    %v2080 = vmul.f32 %v2048, %v2079
    %v2081 = vsub.f32 1.0, %v2080
    %v2082 = vmul.f32 %v2079, %v2081
    %v2083 = vadd.f32 %v2079, %v2082
    %vm2084 = vweird.f32 %v2048
    %vm2085 = vweird.f32 %v2079
    %vm2086 = vmor %vm2084, %vm2085
    %v2087 = vsel %vm2086, %v2079, %v2083
    %v2088 = vand.u32 2147483647, %v2048
    %vm2089 = vcmp.eq.f32.partialorder %v2088, 8.507059e+37
    %v2090 = vand.u32 %v2048, 2147483648
    %v2091 = vor.u32 1.1754944e-38, %v2090
    %v2092 = vsel %vm2089, %v2091, %v2087
    %v2093 = vmul.f32 1.0, %v2092
    %v2094 = vtanh.pop %v2036
    %v2095 = vmul.f32 %v2078, %v1775
    %v2096 = vmul.f32 %v2063, %v2094
    %v2097 = vadd.f32 %v2095, %v2096
    %v2098 = vtanh.pop %v2097
    %v2099 = vmul.f32 %v2093, %v2098
    %v2104 = vrot.slane %v1978, 6
    %v2105 = vrot.slane %v2004, 4
    %v2106 = vrot.slane %v2030, 2
    %v2107 = vsel %vm201, %v1952, %v2104
    %v2108 = vsel %vm203, %v2105, %v2106
    %v2109 = vsel %vm205, %v2107, %v2108
    %v2111 = vadd.f32 %v221, %v2109
    %v2112 = vxor.u32 %v2111, 2147483648
    %v2113 = vmul.f32 %v2112, 1.442695
    %v2114 = vpow.pop %v2113
    %v2115 = vadd.f32 %v2114, 1.0
    %v2116 = vrcp.pop %v2115
    %v2117 = vmul.f32 %v2115, %v2116
    %v2118 = vsub.f32 1.0, %v2117
    %v2119 = vmul.f32 %v2116, %v2118
    %v2120 = vadd.f32 %v2116, %v2119
    %vm2121 = vweird.f32 %v2115
    %vm2122 = vweird.f32 %v2116
    %vm2123 = vmor %vm2121, %vm2122
    %v2124 = vsel %vm2123, %v2116, %v2120
    %v2125 = vand.u32 2147483647, %v2115
    %vm2126 = vcmp.eq.f32.partialorder %v2125, 8.507059e+37
    %v2127 = vand.u32 %v2115, 2147483648
    %v2128 = vor.u32 1.1754944e-38, %v2127
    %v2129 = vsel %vm2126, %v2128, %v2124
    %v2130 = vmul.f32 1.0, %v2129
    %v2132 = vrot.slane %v2111, 6
    %v2134 = vtanh.pop %v2132
    %v2136 = vrot.slane %v2130, 2
    %v2138 = vmul.f32 %v2136, %v1818
    %v2139 = vmul.f32 %v2130, %v2134
    %v2140 = vadd.f32 %v2138, %v2139
    %v2141 = vtanh.pop %v2140
    %v2142 = vrot.slane %v2130, 4
    %v2144 = vmul.f32 %v2142, %v2141
    %v2145 = vpack.c.bf16 %v2144, %v2144
    %v2146 = vpack.c.bf16 %v2099, %v2099
    %2147 = vmatpush.bf16.msra.mxu0 %v1081
    %2148 = vmatpush.bf16.msra.mxu0 %v1077
    %2149 = vmatpush.bf16.msra.mxu0 %v1073
    %2150 = vmatpush.bf16.msra.mxu0 %v1069
    %2151 = vmatpush.bf16.msra.mxu0 %v1065
    %2152 = vmatpush.bf16.msra.mxu0 %v1061
    %2153 = vmatpush.bf16.msra.mxu0 %v1057
    %2154 = vmatpush.bf16.msra.mxu0 %v1053
    %2155 = vmatmul.bf16.gmra.mxu0 %v2145
    %v2156 = vpop.f32.mrf.mxu0
    %v2157 = vadd.f32 0.0, %v2156
    %v2158 = vpop.f32.mrf.mxu0
    %2159 = vdwg.mxu0
    %2160 = vmatpush.bf16.msra.mxu0 %v1113
    %2161 = vmatpush.bf16.msra.mxu0 %v1109
    %2162 = vmatpush.bf16.msra.mxu0 %v1105
    %2163 = vmatpush.bf16.msra.mxu0 %v1101
    %2164 = vmatpush.bf16.msra.mxu0 %v1097
    %2165 = vmatpush.bf16.msra.mxu0 %v1093
    %2166 = vmatpush.bf16.msra.mxu0 %v1089
    %2167 = vmatpush.bf16.msra.mxu0 %v1085
    %2168 = vmatmul.bf16.gmra.mxu0 %v2146
    %v2169 = vpop.f32.mrf.mxu0
    %v2170 = vadd.f32 %v2157, %v2169
    %v2171 = vpop.f32.mrf.mxu0
    %2172 = vdwg.mxu0
    %2173 = vmatpush.bf16.msra.mxu0 %v1082
    %2174 = vmatpush.bf16.msra.mxu0 %v1078
    %2175 = vmatpush.bf16.msra.mxu0 %v1074
    %2176 = vmatpush.bf16.msra.mxu0 %v1070
    %2177 = vmatpush.bf16.msra.mxu0 %v1066
    %2178 = vmatpush.bf16.msra.mxu0 %v1062
    %2179 = vmatpush.bf16.msra.mxu0 %v1058
    %2180 = vmatpush.bf16.msra.mxu0 %v1054
    %2181 = vmatmul.bf16.gmra.mxu0 %v2145
    %v2182 = vpop.f32.mrf.mxu0
    %v2183 = vadd.f32 0.0, %v2182
    %v2184 = vpop.f32.mrf.mxu0
    %2185 = vdwg.mxu0
    %2186 = vmatpush.bf16.msra.mxu0 %v1114
    %2187 = vmatpush.bf16.msra.mxu0 %v1110
    %2188 = vmatpush.bf16.msra.mxu0 %v1106
    %2189 = vmatpush.bf16.msra.mxu0 %v1102
    %2190 = vmatpush.bf16.msra.mxu0 %v1098
    %2191 = vmatpush.bf16.msra.mxu0 %v1094
    %2192 = vmatpush.bf16.msra.mxu0 %v1090
    %2193 = vmatpush.bf16.msra.mxu0 %v1086
    %2194 = vmatmul.bf16.gmra.mxu0 %v2146
    %v2195 = vpop.f32.mrf.mxu0
    %v2196 = vadd.f32 %v2183, %v2195
    %v2197 = vpop.f32.mrf.mxu0
    %2198 = vdwg.mxu0
    %2199 = vmatpush.bf16.msra.mxu0 %v1083
    %2200 = vmatpush.bf16.msra.mxu0 %v1079
    %2201 = vmatpush.bf16.msra.mxu0 %v1075
    %2202 = vmatpush.bf16.msra.mxu0 %v1071
    %2203 = vmatpush.bf16.msra.mxu0 %v1067
    %2204 = vmatpush.bf16.msra.mxu0 %v1063
    %2205 = vmatpush.bf16.msra.mxu0 %v1059
    %2206 = vmatpush.bf16.msra.mxu0 %v1055
    %2207 = vmatmul.bf16.gmra.mxu0 %v2145
    %v2208 = vpop.f32.mrf.mxu0
    %v2209 = vadd.f32 0.0, %v2208
    %v2210 = vpop.f32.mrf.mxu0
    %2211 = vdwg.mxu0
    %2212 = vmatpush.bf16.msra.mxu0 %v1115
    %2213 = vmatpush.bf16.msra.mxu0 %v1111
    %2214 = vmatpush.bf16.msra.mxu0 %v1107
    %2215 = vmatpush.bf16.msra.mxu0 %v1103
    %2216 = vmatpush.bf16.msra.mxu0 %v1099
    %2217 = vmatpush.bf16.msra.mxu0 %v1095
    %2218 = vmatpush.bf16.msra.mxu0 %v1091
    %2219 = vmatpush.bf16.msra.mxu0 %v1087
    %2220 = vmatmul.bf16.gmra.mxu0 %v2146
    %v2221 = vpop.f32.mrf.mxu0
    %v2222 = vadd.f32 %v2209, %v2221
    %v2223 = vpop.f32.mrf.mxu0
    %2224 = vdwg.mxu0
    %2225 = vmatpush.bf16.msra.mxu0 %v1084
    %2226 = vmatpush.bf16.msra.mxu0 %v1080
    %2227 = vmatpush.bf16.msra.mxu0 %v1076
    %2228 = vmatpush.bf16.msra.mxu0 %v1072
    %2229 = vmatpush.bf16.msra.mxu0 %v1068
    %2230 = vmatpush.bf16.msra.mxu0 %v1064
    %2231 = vmatpush.bf16.msra.mxu0 %v1060
    %2232 = vmatpush.bf16.msra.mxu0 %v1056
    %2233 = vmatmul.bf16.gmra.mxu0 %v2145
    %v2234 = vpop.f32.mrf.mxu0
    %v2235 = vadd.f32 0.0, %v2234
    %v2236 = vpop.f32.mrf.mxu0
    %2237 = vdwg.mxu0
    %2238 = vmatpush.bf16.msra.mxu0 %v1116
    %2239 = vmatpush.bf16.msra.mxu0 %v1112
    %2240 = vmatpush.bf16.msra.mxu0 %v1108
    %2241 = vmatpush.bf16.msra.mxu0 %v1104
    %2242 = vmatpush.bf16.msra.mxu0 %v1100
    %2243 = vmatpush.bf16.msra.mxu0 %v1096
    %2244 = vmatpush.bf16.msra.mxu0 %v1092
    %2245 = vmatpush.bf16.msra.mxu0 %v1088
    %2246 = vmatmul.bf16.gmra.mxu0 %v2146
    %v2247 = vpop.f32.mrf.mxu0
    %v2248 = vadd.f32 %v2235, %v2247
    %v2249 = vpop.f32.mrf.mxu0
    %2250 = vdwg.mxu0
    %2251 = vmatpush.bf16.msra.mxu0 %v611
    %2252 = vmatpush.bf16.msra.mxu0 %v607
    %2253 = vmatpush.bf16.msra.mxu0 %v603
    %2254 = vmatpush.bf16.msra.mxu0 %v599
    %2255 = vmatpush.bf16.msra.mxu0 %v595
    %2256 = vmatpush.bf16.msra.mxu0 %v591
    %2257 = vmatpush.bf16.msra.mxu0 %v587
    %2258 = vmatpush.bf16.msra.mxu0 %v583
    %2259 = vmatmul.bf16.gmra.mxu0 %v2145
    %v2260 = vpop.f32.mrf.mxu0
    %v2261 = vadd.f32 0.0, %v2260
    %v2262 = vpop.f32.mrf.mxu0
    %2263 = vdwg.mxu0
    %2264 = vmatpush.bf16.msra.mxu0 %v643
    %2265 = vmatpush.bf16.msra.mxu0 %v639
    %2266 = vmatpush.bf16.msra.mxu0 %v635
    %2267 = vmatpush.bf16.msra.mxu0 %v631
    %2268 = vmatpush.bf16.msra.mxu0 %v627
    %2269 = vmatpush.bf16.msra.mxu0 %v623
    %2270 = vmatpush.bf16.msra.mxu0 %v619
    %2271 = vmatpush.bf16.msra.mxu0 %v615
    %2272 = vmatmul.bf16.gmra.mxu0 %v2146
    %v2273 = vpop.f32.mrf.mxu0
    %v2274 = vadd.f32 %v2261, %v2273
    %v2275 = vpop.f32.mrf.mxu0
    %2276 = vdwg.mxu0
    %2277 = vmatpush.bf16.msra.mxu0 %v612
    %2278 = vmatpush.bf16.msra.mxu0 %v608
    %2279 = vmatpush.bf16.msra.mxu0 %v604
    %2280 = vmatpush.bf16.msra.mxu0 %v600
    %2281 = vmatpush.bf16.msra.mxu0 %v596
    %2282 = vmatpush.bf16.msra.mxu0 %v592
    %2283 = vmatpush.bf16.msra.mxu0 %v588
    %2284 = vmatpush.bf16.msra.mxu0 %v584
    %2285 = vmatmul.bf16.gmra.mxu0 %v2145
    %v2286 = vpop.f32.mrf.mxu0
    %v2287 = vadd.f32 0.0, %v2286
    %v2288 = vpop.f32.mrf.mxu0
    %2289 = vdwg.mxu0
    %2290 = vmatpush.bf16.msra.mxu0 %v644
    %2291 = vmatpush.bf16.msra.mxu0 %v640
    %2292 = vmatpush.bf16.msra.mxu0 %v636
    %2293 = vmatpush.bf16.msra.mxu0 %v632
    %2294 = vmatpush.bf16.msra.mxu0 %v628
    %2295 = vmatpush.bf16.msra.mxu0 %v624
    %2296 = vmatpush.bf16.msra.mxu0 %v620
    %2297 = vmatpush.bf16.msra.mxu0 %v616
    %2298 = vmatmul.bf16.gmra.mxu0 %v2146
    %v2299 = vpop.f32.mrf.mxu0
    %v2300 = vadd.f32 %v2287, %v2299
    %v2301 = vpop.f32.mrf.mxu0
    %2302 = vdwg.mxu0
    %2303 = vmatpush.bf16.msra.mxu0 %v613
    %2304 = vmatpush.bf16.msra.mxu0 %v609
    %2305 = vmatpush.bf16.msra.mxu0 %v605
    %2306 = vmatpush.bf16.msra.mxu0 %v601
    %2307 = vmatpush.bf16.msra.mxu0 %v597
    %2308 = vmatpush.bf16.msra.mxu0 %v593
    %2309 = vmatpush.bf16.msra.mxu0 %v589
    %2310 = vmatpush.bf16.msra.mxu0 %v585
    %2311 = vmatmul.bf16.gmra.mxu0 %v2145
    %v2312 = vpop.f32.mrf.mxu0
    %v2313 = vadd.f32 0.0, %v2312
    %v2314 = vpop.f32.mrf.mxu0
    %2315 = vdwg.mxu0
    %2316 = vmatpush.bf16.msra.mxu0 %v645
    %2317 = vmatpush.bf16.msra.mxu0 %v641
    %2318 = vmatpush.bf16.msra.mxu0 %v637
    %2319 = vmatpush.bf16.msra.mxu0 %v633
    %2320 = vmatpush.bf16.msra.mxu0 %v629
    %2321 = vmatpush.bf16.msra.mxu0 %v625
    %2322 = vmatpush.bf16.msra.mxu0 %v621
    %2323 = vmatpush.bf16.msra.mxu0 %v617
    %2324 = vmatmul.bf16.gmra.mxu0 %v2146
    %v2325 = vpop.f32.mrf.mxu0
    %v2326 = vadd.f32 %v2313, %v2325
    %v2327 = vpop.f32.mrf.mxu0
    %2328 = vdwg.mxu0
    %2329 = vmatpush.bf16.msra.mxu0 %v614
    %2330 = vmatpush.bf16.msra.mxu0 %v610
    %2331 = vmatpush.bf16.msra.mxu0 %v606
    %2332 = vmatpush.bf16.msra.mxu0 %v602
    %2333 = vmatpush.bf16.msra.mxu0 %v598
    %2334 = vmatpush.bf16.msra.mxu0 %v594
    %2335 = vmatpush.bf16.msra.mxu0 %v590
    %2336 = vmatpush.bf16.msra.mxu0 %v586
    %2337 = vmatmul.bf16.gmra.mxu0 %v2145
    %v2338 = vpop.f32.mrf.mxu0
    %v2339 = vadd.f32 0.0, %v2338
    %v2340 = vpop.f32.mrf.mxu0
    %2341 = vdwg.mxu0
    %2342 = vmatpush.bf16.msra.mxu0 %v646
    %2343 = vmatpush.bf16.msra.mxu0 %v642
    %2344 = vmatpush.bf16.msra.mxu0 %v638
    %2345 = vmatpush.bf16.msra.mxu0 %v634
    %2346 = vmatpush.bf16.msra.mxu0 %v630
    %2347 = vmatpush.bf16.msra.mxu0 %v626
    %2348 = vmatpush.bf16.msra.mxu0 %v622
    %2349 = vmatpush.bf16.msra.mxu0 %v618
    %2350 = vmatmul.bf16.gmra.mxu0 %v2146
    %v2351 = vpop.f32.mrf.mxu0
    %v2352 = vadd.f32 %v2339, %v2351
    %v2353 = vpop.f32.mrf.mxu0
    %2354 = vdwg.mxu0
    %v2355 = vadd.f32 %v2170, %v375
    %v2356 = vadd.f32 %v2196, %v376
    %v2357 = vadd.f32 %v2222, %v377
    %v2358 = vadd.f32 %v2248, %v378
    %v2359 = vxor.u32 %v2355, 2147483648
    %v2360 = vxor.u32 %v2356, 2147483648
    %v2361 = vxor.u32 %v2357, 2147483648
    %v2362 = vmul.f32 %v2359, 1.442695
    %v2363 = vpow.pop %v2362
    %v2364 = vmul.f32 %v2360, 1.442695
    %v2365 = vpow.pop %v2364
    %v2366 = vmul.f32 %v2361, 1.442695
    %v2367 = vpow.pop %v2366
    %v2368 = vadd.f32 %v2363, 1.0
    %v2369 = vadd.f32 %v2365, 1.0
    %v2370 = vadd.f32 %v2367, 1.0
    %v2371 = vrcp.pop %v2368
    %v2372 = vmul.f32 %v2368, %v2371
    %v2373 = vsub.f32 1.0, %v2372
    %v2374 = vmul.f32 %v2371, %v2373
    %v2375 = vadd.f32 %v2371, %v2374
    %vm2376 = vweird.f32 %v2368
    %vm2377 = vweird.f32 %v2371
    %vm2378 = vmor %vm2376, %vm2377
    %v2379 = vsel %vm2378, %v2371, %v2375
    %v2380 = vand.u32 2147483647, %v2368
    %vm2381 = vcmp.eq.f32.partialorder %v2380, 8.507059e+37
    %v2382 = vand.u32 %v2368, 2147483648
    %v2383 = vor.u32 1.1754944e-38, %v2382
    %v2384 = vsel %vm2381, %v2383, %v2379
    %v2385 = vmul.f32 1.0, %v2384
    %v2386 = vrcp.pop %v2369
    %v2387 = vmul.f32 %v2369, %v2386
    %v2388 = vsub.f32 1.0, %v2387
    %v2389 = vmul.f32 %v2386, %v2388
    %v2390 = vadd.f32 %v2386, %v2389
    %vm2391 = vweird.f32 %v2369
    %vm2392 = vweird.f32 %v2386
    %vm2393 = vmor %vm2391, %vm2392
    %v2394 = vsel %vm2393, %v2386, %v2390
    %v2395 = vand.u32 2147483647, %v2369
    %vm2396 = vcmp.eq.f32.partialorder %v2395, 8.507059e+37
    %v2397 = vand.u32 %v2369, 2147483648
    %v2398 = vor.u32 1.1754944e-38, %v2397
    %v2399 = vsel %vm2396, %v2398, %v2394
    %v2400 = vmul.f32 1.0, %v2399
    %v2401 = vrcp.pop %v2370
    %v2402 = vmul.f32 %v2370, %v2401
    %v2403 = vsub.f32 1.0, %v2402
    %v2404 = vmul.f32 %v2401, %v2403
    %v2405 = vadd.f32 %v2401, %v2404
    %vm2406 = vweird.f32 %v2370
    %vm2407 = vweird.f32 %v2401
    %vm2408 = vmor %vm2406, %vm2407
    %v2409 = vsel %vm2408, %v2401, %v2405
    %v2410 = vand.u32 2147483647, %v2370
    %vm2411 = vcmp.eq.f32.partialorder %v2410, 8.507059e+37
    %v2412 = vand.u32 %v2370, 2147483648
    %v2413 = vor.u32 1.1754944e-38, %v2412
    %v2414 = vsel %vm2411, %v2413, %v2409
    %v2415 = vmul.f32 1.0, %v2414
    %v2416 = vtanh.pop %v2358
    %v2417 = vmul.f32 %v2400, %v2097
    %v2418 = vmul.f32 %v2385, %v2416
    %v2419 = vadd.f32 %v2417, %v2418
    %v2420 = vtanh.pop %v2419
    %v2421 = vmul.f32 %v2415, %v2420
    %v2426 = vrot.slane %v2300, 6
    %v2427 = vrot.slane %v2326, 4
    %v2428 = vrot.slane %v2352, 2
    %v2429 = vsel %vm201, %v2274, %v2426
    %v2430 = vsel %vm203, %v2427, %v2428
    %v2431 = vsel %vm205, %v2429, %v2430
    %v2433 = vadd.f32 %v224, %v2431
    %v2434 = vxor.u32 %v2433, 2147483648
    %v2435 = vmul.f32 %v2434, 1.442695
    %v2436 = vpow.pop %v2435
    %v2437 = vadd.f32 %v2436, 1.0
    %v2438 = vrcp.pop %v2437
    %v2439 = vmul.f32 %v2437, %v2438
    %v2440 = vsub.f32 1.0, %v2439
    %v2441 = vmul.f32 %v2438, %v2440
    %v2442 = vadd.f32 %v2438, %v2441
    %vm2443 = vweird.f32 %v2437
    %vm2444 = vweird.f32 %v2438
    %vm2445 = vmor %vm2443, %vm2444
    %v2446 = vsel %vm2445, %v2438, %v2442
    %v2447 = vand.u32 2147483647, %v2437
    %vm2448 = vcmp.eq.f32.partialorder %v2447, 8.507059e+37
    %v2449 = vand.u32 %v2437, 2147483648
    %v2450 = vor.u32 1.1754944e-38, %v2449
    %v2451 = vsel %vm2448, %v2450, %v2446
    %v2452 = vmul.f32 1.0, %v2451
    %v2454 = vrot.slane %v2433, 6
    %v2456 = vtanh.pop %v2454
    %v2458 = vrot.slane %v2452, 2
    %v2460 = vmul.f32 %v2458, %v2140
    %v2461 = vmul.f32 %v2452, %v2456
    %v2462 = vadd.f32 %v2460, %v2461
    %v2463 = vtanh.pop %v2462
    %v2464 = vrot.slane %v2452, 4
    %v2466 = vmul.f32 %v2464, %v2463
    %v2467 = vpack.c.bf16 %v2466, %v2466
    %v2468 = vpack.c.bf16 %v2421, %v2421
    %2469 = vmatpush.bf16.msra.mxu0 %v1081
    %2470 = vmatpush.bf16.msra.mxu0 %v1077
    %2471 = vmatpush.bf16.msra.mxu0 %v1073
    %2472 = vmatpush.bf16.msra.mxu0 %v1069
    %2473 = vmatpush.bf16.msra.mxu0 %v1065
    %2474 = vmatpush.bf16.msra.mxu0 %v1061
    %2475 = vmatpush.bf16.msra.mxu0 %v1057
    %2476 = vmatpush.bf16.msra.mxu0 %v1053
    %2477 = vmatmul.bf16.gmra.mxu0 %v2467
    %v2478 = vpop.f32.mrf.mxu0
    %v2479 = vadd.f32 0.0, %v2478
    %v2480 = vpop.f32.mrf.mxu0
    %2481 = vdwg.mxu0
    %2482 = vmatpush.bf16.msra.mxu0 %v1113
    %2483 = vmatpush.bf16.msra.mxu0 %v1109
    %2484 = vmatpush.bf16.msra.mxu0 %v1105
    %2485 = vmatpush.bf16.msra.mxu0 %v1101
    %2486 = vmatpush.bf16.msra.mxu0 %v1097
    %2487 = vmatpush.bf16.msra.mxu0 %v1093
    %2488 = vmatpush.bf16.msra.mxu0 %v1089
    %2489 = vmatpush.bf16.msra.mxu0 %v1085
    %2490 = vmatmul.bf16.gmra.mxu0 %v2468
    %v2491 = vpop.f32.mrf.mxu0
    %v2492 = vadd.f32 %v2479, %v2491
    %v2493 = vpop.f32.mrf.mxu0
    %2494 = vdwg.mxu0
    %2495 = vmatpush.bf16.msra.mxu0 %v1082
    %2496 = vmatpush.bf16.msra.mxu0 %v1078
    %2497 = vmatpush.bf16.msra.mxu0 %v1074
    %2498 = vmatpush.bf16.msra.mxu0 %v1070
    %2499 = vmatpush.bf16.msra.mxu0 %v1066
    %2500 = vmatpush.bf16.msra.mxu0 %v1062
    %2501 = vmatpush.bf16.msra.mxu0 %v1058
    %2502 = vmatpush.bf16.msra.mxu0 %v1054
    %2503 = vmatmul.bf16.gmra.mxu0 %v2467
    %v2504 = vpop.f32.mrf.mxu0
    %v2505 = vadd.f32 0.0, %v2504
    %v2506 = vpop.f32.mrf.mxu0
    %2507 = vdwg.mxu0
    %2508 = vmatpush.bf16.msra.mxu0 %v1114
    %2509 = vmatpush.bf16.msra.mxu0 %v1110
    %2510 = vmatpush.bf16.msra.mxu0 %v1106
    %2511 = vmatpush.bf16.msra.mxu0 %v1102
    %2512 = vmatpush.bf16.msra.mxu0 %v1098
    %2513 = vmatpush.bf16.msra.mxu0 %v1094
    %2514 = vmatpush.bf16.msra.mxu0 %v1090
    %2515 = vmatpush.bf16.msra.mxu0 %v1086
    %2516 = vmatmul.bf16.gmra.mxu0 %v2468
    %v2517 = vpop.f32.mrf.mxu0
    %v2518 = vadd.f32 %v2505, %v2517
    %v2519 = vpop.f32.mrf.mxu0
    %2520 = vdwg.mxu0
    %2521 = vmatpush.bf16.msra.mxu0 %v1083
    %2522 = vmatpush.bf16.msra.mxu0 %v1079
    %2523 = vmatpush.bf16.msra.mxu0 %v1075
    %2524 = vmatpush.bf16.msra.mxu0 %v1071
    %2525 = vmatpush.bf16.msra.mxu0 %v1067
    %2526 = vmatpush.bf16.msra.mxu0 %v1063
    %2527 = vmatpush.bf16.msra.mxu0 %v1059
    %2528 = vmatpush.bf16.msra.mxu0 %v1055
    %2529 = vmatmul.bf16.gmra.mxu0 %v2467
    %v2530 = vpop.f32.mrf.mxu0
    %v2531 = vadd.f32 0.0, %v2530
    %v2532 = vpop.f32.mrf.mxu0
    %2533 = vdwg.mxu0
    %2534 = vmatpush.bf16.msra.mxu0 %v1115
    %2535 = vmatpush.bf16.msra.mxu0 %v1111
    %2536 = vmatpush.bf16.msra.mxu0 %v1107
    %2537 = vmatpush.bf16.msra.mxu0 %v1103
    %2538 = vmatpush.bf16.msra.mxu0 %v1099
    %2539 = vmatpush.bf16.msra.mxu0 %v1095
    %2540 = vmatpush.bf16.msra.mxu0 %v1091
    %2541 = vmatpush.bf16.msra.mxu0 %v1087
    %2542 = vmatmul.bf16.gmra.mxu0 %v2468
    %v2543 = vpop.f32.mrf.mxu0
    %v2544 = vadd.f32 %v2531, %v2543
    %v2545 = vpop.f32.mrf.mxu0
    %2546 = vdwg.mxu0
    %2547 = vmatpush.bf16.msra.mxu0 %v1084
    %2548 = vmatpush.bf16.msra.mxu0 %v1080
    %2549 = vmatpush.bf16.msra.mxu0 %v1076
    %2550 = vmatpush.bf16.msra.mxu0 %v1072
    %2551 = vmatpush.bf16.msra.mxu0 %v1068
    %2552 = vmatpush.bf16.msra.mxu0 %v1064
    %2553 = vmatpush.bf16.msra.mxu0 %v1060
    %2554 = vmatpush.bf16.msra.mxu0 %v1056
    %2555 = vmatmul.bf16.gmra.mxu0 %v2467
    %v2556 = vpop.f32.mrf.mxu0
    %v2557 = vadd.f32 0.0, %v2556
    %v2558 = vpop.f32.mrf.mxu0
    %2559 = vdwg.mxu0
    %2560 = vmatpush.bf16.msra.mxu0 %v1116
    %2561 = vmatpush.bf16.msra.mxu0 %v1112
    %2562 = vmatpush.bf16.msra.mxu0 %v1108
    %2563 = vmatpush.bf16.msra.mxu0 %v1104
    %2564 = vmatpush.bf16.msra.mxu0 %v1100
    %2565 = vmatpush.bf16.msra.mxu0 %v1096
    %2566 = vmatpush.bf16.msra.mxu0 %v1092
    %2567 = vmatpush.bf16.msra.mxu0 %v1088
    %2568 = vmatmul.bf16.gmra.mxu0 %v2468
    %v2569 = vpop.f32.mrf.mxu0
    %v2570 = vadd.f32 %v2557, %v2569
    %v2571 = vpop.f32.mrf.mxu0
    %2572 = vdwg.mxu0
    %2573 = vmatpush.bf16.msra.mxu0 %v611
    %2574 = vmatpush.bf16.msra.mxu0 %v607
    %2575 = vmatpush.bf16.msra.mxu0 %v603
    %2576 = vmatpush.bf16.msra.mxu0 %v599
    %2577 = vmatpush.bf16.msra.mxu0 %v595
    %2578 = vmatpush.bf16.msra.mxu0 %v591
    %2579 = vmatpush.bf16.msra.mxu0 %v587
    %2580 = vmatpush.bf16.msra.mxu0 %v583
    %2581 = vmatmul.bf16.gmra.mxu0 %v2467
    %v2582 = vpop.f32.mrf.mxu0
    %v2583 = vadd.f32 0.0, %v2582
    %v2584 = vpop.f32.mrf.mxu0
    %2585 = vdwg.mxu0
    %2586 = vmatpush.bf16.msra.mxu0 %v643
    %2587 = vmatpush.bf16.msra.mxu0 %v639
    %2588 = vmatpush.bf16.msra.mxu0 %v635
    %2589 = vmatpush.bf16.msra.mxu0 %v631
    %2590 = vmatpush.bf16.msra.mxu0 %v627
    %2591 = vmatpush.bf16.msra.mxu0 %v623
    %2592 = vmatpush.bf16.msra.mxu0 %v619
    %2593 = vmatpush.bf16.msra.mxu0 %v615
    %2594 = vmatmul.bf16.gmra.mxu0 %v2468
    %v2595 = vpop.f32.mrf.mxu0
    %v2596 = vadd.f32 %v2583, %v2595
    %v2597 = vpop.f32.mrf.mxu0
    %2598 = vdwg.mxu0
    %2599 = vmatpush.bf16.msra.mxu0 %v612
    %2600 = vmatpush.bf16.msra.mxu0 %v608
    %2601 = vmatpush.bf16.msra.mxu0 %v604
    %2602 = vmatpush.bf16.msra.mxu0 %v600
    %2603 = vmatpush.bf16.msra.mxu0 %v596
    %2604 = vmatpush.bf16.msra.mxu0 %v592
    %2605 = vmatpush.bf16.msra.mxu0 %v588
    %2606 = vmatpush.bf16.msra.mxu0 %v584
    %2607 = vmatmul.bf16.gmra.mxu0 %v2467
    %v2608 = vpop.f32.mrf.mxu0
    %v2609 = vadd.f32 0.0, %v2608
    %v2610 = vpop.f32.mrf.mxu0
    %2611 = vdwg.mxu0
    %2612 = vmatpush.bf16.msra.mxu0 %v644
    %2613 = vmatpush.bf16.msra.mxu0 %v640
    %2614 = vmatpush.bf16.msra.mxu0 %v636
    %2615 = vmatpush.bf16.msra.mxu0 %v632
    %2616 = vmatpush.bf16.msra.mxu0 %v628
    %2617 = vmatpush.bf16.msra.mxu0 %v624
    %2618 = vmatpush.bf16.msra.mxu0 %v620
    %2619 = vmatpush.bf16.msra.mxu0 %v616
    %2620 = vmatmul.bf16.gmra.mxu0 %v2468
    %v2621 = vpop.f32.mrf.mxu0
    %v2622 = vadd.f32 %v2609, %v2621
    %v2623 = vpop.f32.mrf.mxu0
    %2624 = vdwg.mxu0
    %2625 = vmatpush.bf16.msra.mxu0 %v613
    %2626 = vmatpush.bf16.msra.mxu0 %v609
    %2627 = vmatpush.bf16.msra.mxu0 %v605
    %2628 = vmatpush.bf16.msra.mxu0 %v601
    %2629 = vmatpush.bf16.msra.mxu0 %v597
    %2630 = vmatpush.bf16.msra.mxu0 %v593
    %2631 = vmatpush.bf16.msra.mxu0 %v589
    %2632 = vmatpush.bf16.msra.mxu0 %v585
    %2633 = vmatmul.bf16.gmra.mxu0 %v2467
    %v2634 = vpop.f32.mrf.mxu0
    %v2635 = vadd.f32 0.0, %v2634
    %v2636 = vpop.f32.mrf.mxu0
    %2637 = vdwg.mxu0
    %2638 = vmatpush.bf16.msra.mxu0 %v645
    %2639 = vmatpush.bf16.msra.mxu0 %v641
    %2640 = vmatpush.bf16.msra.mxu0 %v637
    %2641 = vmatpush.bf16.msra.mxu0 %v633
    %2642 = vmatpush.bf16.msra.mxu0 %v629
    %2643 = vmatpush.bf16.msra.mxu0 %v625
    %2644 = vmatpush.bf16.msra.mxu0 %v621
    %2645 = vmatpush.bf16.msra.mxu0 %v617
    %2646 = vmatmul.bf16.gmra.mxu0 %v2468
    %v2647 = vpop.f32.mrf.mxu0
    %v2648 = vadd.f32 %v2635, %v2647
    %v2649 = vpop.f32.mrf.mxu0
    %2650 = vdwg.mxu0
    %2651 = vmatpush.bf16.msra.mxu0 %v614
    %2652 = vmatpush.bf16.msra.mxu0 %v610
    %2653 = vmatpush.bf16.msra.mxu0 %v606
    %2654 = vmatpush.bf16.msra.mxu0 %v602
    %2655 = vmatpush.bf16.msra.mxu0 %v598
    %2656 = vmatpush.bf16.msra.mxu0 %v594
    %2657 = vmatpush.bf16.msra.mxu0 %v590
    %2658 = vmatpush.bf16.msra.mxu0 %v586
    %2659 = vmatmul.bf16.gmra.mxu0 %v2467
    %v2660 = vpop.f32.mrf.mxu0
    %v2661 = vadd.f32 0.0, %v2660
    %v2662 = vpop.f32.mrf.mxu0
    %2663 = vdwg.mxu0
    %2664 = vmatpush.bf16.msra.mxu0 %v646
    %2665 = vmatpush.bf16.msra.mxu0 %v642
    %2666 = vmatpush.bf16.msra.mxu0 %v638
    %2667 = vmatpush.bf16.msra.mxu0 %v634
    %2668 = vmatpush.bf16.msra.mxu0 %v630
    %2669 = vmatpush.bf16.msra.mxu0 %v626
    %2670 = vmatpush.bf16.msra.mxu0 %v622
    %2671 = vmatpush.bf16.msra.mxu0 %v618
    %2672 = vmatmul.bf16.gmra.mxu0 %v2468
    %v2673 = vpop.f32.mrf.mxu0
    %v2674 = vadd.f32 %v2661, %v2673
    %v2675 = vpop.f32.mrf.mxu0
    %2676 = vdwg.mxu0
    %v2677 = vadd.f32 %v2492, %v375
    %v2678 = vadd.f32 %v2518, %v376
    %v2679 = vadd.f32 %v2544, %v377
    %v2680 = vadd.f32 %v2570, %v378
    %v2681 = vxor.u32 %v2677, 2147483648
    %v2682 = vxor.u32 %v2678, 2147483648
    %v2683 = vxor.u32 %v2679, 2147483648
    %v2684 = vmul.f32 %v2681, 1.442695
    %v2685 = vpow.pop %v2684
    %v2686 = vmul.f32 %v2682, 1.442695
    %v2687 = vpow.pop %v2686
    %v2688 = vmul.f32 %v2683, 1.442695
    %v2689 = vpow.pop %v2688
    %v2690 = vadd.f32 %v2685, 1.0
    %v2691 = vadd.f32 %v2687, 1.0
    %v2692 = vadd.f32 %v2689, 1.0
    %v2693 = vrcp.pop %v2690
    %v2694 = vmul.f32 %v2690, %v2693
    %v2695 = vsub.f32 1.0, %v2694
    %v2696 = vmul.f32 %v2693, %v2695
    %v2697 = vadd.f32 %v2693, %v2696
    %vm2698 = vweird.f32 %v2690
    %vm2699 = vweird.f32 %v2693
    %vm2700 = vmor %vm2698, %vm2699
    %v2701 = vsel %vm2700, %v2693, %v2697
    %v2702 = vand.u32 2147483647, %v2690
    %vm2703 = vcmp.eq.f32.partialorder %v2702, 8.507059e+37
    %v2704 = vand.u32 %v2690, 2147483648
    %v2705 = vor.u32 1.1754944e-38, %v2704
    %v2706 = vsel %vm2703, %v2705, %v2701
    %v2707 = vmul.f32 1.0, %v2706
    %v2708 = vrcp.pop %v2691
    %v2709 = vmul.f32 %v2691, %v2708
    %v2710 = vsub.f32 1.0, %v2709
    %v2711 = vmul.f32 %v2708, %v2710
    %v2712 = vadd.f32 %v2708, %v2711
    %vm2713 = vweird.f32 %v2691
    %vm2714 = vweird.f32 %v2708
    %vm2715 = vmor %vm2713, %vm2714
    %v2716 = vsel %vm2715, %v2708, %v2712
    %v2717 = vand.u32 2147483647, %v2691
    %vm2718 = vcmp.eq.f32.partialorder %v2717, 8.507059e+37
    %v2719 = vand.u32 %v2691, 2147483648
    %v2720 = vor.u32 1.1754944e-38, %v2719
    %v2721 = vsel %vm2718, %v2720, %v2716
    %v2722 = vmul.f32 1.0, %v2721
    %v2723 = vrcp.pop %v2692
    %v2724 = vmul.f32 %v2692, %v2723
    %v2725 = vsub.f32 1.0, %v2724
    %v2726 = vmul.f32 %v2723, %v2725
    %v2727 = vadd.f32 %v2723, %v2726
    %vm2728 = vweird.f32 %v2692
    %vm2729 = vweird.f32 %v2723
    %vm2730 = vmor %vm2728, %vm2729
    %v2731 = vsel %vm2730, %v2723, %v2727
    %v2732 = vand.u32 2147483647, %v2692
    %vm2733 = vcmp.eq.f32.partialorder %v2732, 8.507059e+37
    %v2734 = vand.u32 %v2692, 2147483648
    %v2735 = vor.u32 1.1754944e-38, %v2734
    %v2736 = vsel %vm2733, %v2735, %v2731
    %v2737 = vmul.f32 1.0, %v2736
    %v2738 = vtanh.pop %v2680
    %v2739 = vmul.f32 %v2722, %v2419
    %v2740 = vmul.f32 %v2707, %v2738
    %v2741 = vadd.f32 %v2739, %v2740
    %v2742 = vtanh.pop %v2741
    %v2743 = vmul.f32 %v2737, %v2742
    %v2748 = vrot.slane %v2622, 6
    %v2749 = vrot.slane %v2648, 4
    %v2750 = vrot.slane %v2674, 2
    %v2751 = vsel %vm201, %v2596, %v2748
    %v2752 = vsel %vm203, %v2749, %v2750
    %v2753 = vsel %vm205, %v2751, %v2752
    %v2755 = vadd.f32 %v228, %v2753
    %v2756 = vxor.u32 %v2755, 2147483648
    %v2757 = vmul.f32 %v2756, 1.442695
    %v2758 = vpow.pop %v2757
    %v2759 = vadd.f32 %v2758, 1.0
    %v2760 = vrcp.pop %v2759
    %v2761 = vmul.f32 %v2759, %v2760
    %v2762 = vsub.f32 1.0, %v2761
    %v2763 = vmul.f32 %v2760, %v2762
    %v2764 = vadd.f32 %v2760, %v2763
    %vm2765 = vweird.f32 %v2759
    %vm2766 = vweird.f32 %v2760
    %vm2767 = vmor %vm2765, %vm2766
    %v2768 = vsel %vm2767, %v2760, %v2764
    %v2769 = vand.u32 2147483647, %v2759
    %vm2770 = vcmp.eq.f32.partialorder %v2769, 8.507059e+37
    %v2771 = vand.u32 %v2759, 2147483648
    %v2772 = vor.u32 1.1754944e-38, %v2771
    %v2773 = vsel %vm2770, %v2772, %v2768
    %v2774 = vmul.f32 1.0, %v2773
    %v2776 = vrot.slane %v2755, 6
    %v2778 = vtanh.pop %v2776
    %v2780 = vrot.slane %v2774, 2
    %v2782 = vmul.f32 %v2780, %v2462
    %v2783 = vmul.f32 %v2774, %v2778
    %v2784 = vadd.f32 %v2782, %v2783
    %v2785 = vtanh.pop %v2784
    %v2786 = vrot.slane %v2774, 4
    %v2788 = vmul.f32 %v2786, %v2785
    %v2789 = vpack.c.bf16 %v2788, %v2788
    %v2790 = vpack.c.bf16 %v2743, %v2743
    %2791 = vmatpush.bf16.msra.mxu0 %v1081
    %2792 = vmatpush.bf16.msra.mxu0 %v1077
    %2793 = vmatpush.bf16.msra.mxu0 %v1073
    %2794 = vmatpush.bf16.msra.mxu0 %v1069
    %2795 = vmatpush.bf16.msra.mxu0 %v1065
    %2796 = vmatpush.bf16.msra.mxu0 %v1061
    %2797 = vmatpush.bf16.msra.mxu0 %v1057
    %2798 = vmatpush.bf16.msra.mxu0 %v1053
    %2799 = vmatmul.bf16.gmra.mxu0 %v2789
    %v2800 = vpop.f32.mrf.mxu0
    %v2801 = vadd.f32 0.0, %v2800
    %v2802 = vpop.f32.mrf.mxu0
    %2803 = vdwg.mxu0
    %2804 = vmatpush.bf16.msra.mxu0 %v1113
    %2805 = vmatpush.bf16.msra.mxu0 %v1109
    %2806 = vmatpush.bf16.msra.mxu0 %v1105
    %2807 = vmatpush.bf16.msra.mxu0 %v1101
    %2808 = vmatpush.bf16.msra.mxu0 %v1097
    %2809 = vmatpush.bf16.msra.mxu0 %v1093
    %2810 = vmatpush.bf16.msra.mxu0 %v1089
    %2811 = vmatpush.bf16.msra.mxu0 %v1085
    %2812 = vmatmul.bf16.gmra.mxu0 %v2790
    %v2813 = vpop.f32.mrf.mxu0
    %v2814 = vadd.f32 %v2801, %v2813
    %v2815 = vpop.f32.mrf.mxu0
    %2816 = vdwg.mxu0
    %2817 = vmatpush.bf16.msra.mxu0 %v1082
    %2818 = vmatpush.bf16.msra.mxu0 %v1078
    %2819 = vmatpush.bf16.msra.mxu0 %v1074
    %2820 = vmatpush.bf16.msra.mxu0 %v1070
    %2821 = vmatpush.bf16.msra.mxu0 %v1066
    %2822 = vmatpush.bf16.msra.mxu0 %v1062
    %2823 = vmatpush.bf16.msra.mxu0 %v1058
    %2824 = vmatpush.bf16.msra.mxu0 %v1054
    %2825 = vmatmul.bf16.gmra.mxu0 %v2789
    %v2826 = vpop.f32.mrf.mxu0
    %v2827 = vadd.f32 0.0, %v2826
    %v2828 = vpop.f32.mrf.mxu0
    %2829 = vdwg.mxu0
    %2830 = vmatpush.bf16.msra.mxu0 %v1114
    %2831 = vmatpush.bf16.msra.mxu0 %v1110
    %2832 = vmatpush.bf16.msra.mxu0 %v1106
    %2833 = vmatpush.bf16.msra.mxu0 %v1102
    %2834 = vmatpush.bf16.msra.mxu0 %v1098
    %2835 = vmatpush.bf16.msra.mxu0 %v1094
    %2836 = vmatpush.bf16.msra.mxu0 %v1090
    %2837 = vmatpush.bf16.msra.mxu0 %v1086
    %2838 = vmatmul.bf16.gmra.mxu0 %v2790
    %v2839 = vpop.f32.mrf.mxu0
    %v2840 = vadd.f32 %v2827, %v2839
    %v2841 = vpop.f32.mrf.mxu0
    %2842 = vdwg.mxu0
    %2843 = vmatpush.bf16.msra.mxu0 %v1083
    %2844 = vmatpush.bf16.msra.mxu0 %v1079
    %2845 = vmatpush.bf16.msra.mxu0 %v1075
    %2846 = vmatpush.bf16.msra.mxu0 %v1071
    %2847 = vmatpush.bf16.msra.mxu0 %v1067
    %2848 = vmatpush.bf16.msra.mxu0 %v1063
    %2849 = vmatpush.bf16.msra.mxu0 %v1059
    %2850 = vmatpush.bf16.msra.mxu0 %v1055
    %2851 = vmatmul.bf16.gmra.mxu0 %v2789
    %v2852 = vpop.f32.mrf.mxu0
    %v2853 = vadd.f32 0.0, %v2852
    %v2854 = vpop.f32.mrf.mxu0
    %2855 = vdwg.mxu0
    %2856 = vmatpush.bf16.msra.mxu0 %v1115
    %2857 = vmatpush.bf16.msra.mxu0 %v1111
    %2858 = vmatpush.bf16.msra.mxu0 %v1107
    %2859 = vmatpush.bf16.msra.mxu0 %v1103
    %2860 = vmatpush.bf16.msra.mxu0 %v1099
    %2861 = vmatpush.bf16.msra.mxu0 %v1095
    %2862 = vmatpush.bf16.msra.mxu0 %v1091
    %2863 = vmatpush.bf16.msra.mxu0 %v1087
    %2864 = vmatmul.bf16.gmra.mxu0 %v2790
    %v2865 = vpop.f32.mrf.mxu0
    %v2866 = vadd.f32 %v2853, %v2865
    %v2867 = vpop.f32.mrf.mxu0
    %2868 = vdwg.mxu0
    %2869 = vmatpush.bf16.msra.mxu0 %v1084
    %2870 = vmatpush.bf16.msra.mxu0 %v1080
    %2871 = vmatpush.bf16.msra.mxu0 %v1076
    %2872 = vmatpush.bf16.msra.mxu0 %v1072
    %2873 = vmatpush.bf16.msra.mxu0 %v1068
    %2874 = vmatpush.bf16.msra.mxu0 %v1064
    %2875 = vmatpush.bf16.msra.mxu0 %v1060
    %2876 = vmatpush.bf16.msra.mxu0 %v1056
    %2877 = vmatmul.bf16.gmra.mxu0 %v2789
    %v2878 = vpop.f32.mrf.mxu0
    %v2879 = vadd.f32 0.0, %v2878
    %v2880 = vpop.f32.mrf.mxu0
    %2881 = vdwg.mxu0
    %2882 = vmatpush.bf16.msra.mxu0 %v1116
    %2883 = vmatpush.bf16.msra.mxu0 %v1112
    %2884 = vmatpush.bf16.msra.mxu0 %v1108
    %2885 = vmatpush.bf16.msra.mxu0 %v1104
    %2886 = vmatpush.bf16.msra.mxu0 %v1100
    %2887 = vmatpush.bf16.msra.mxu0 %v1096
    %2888 = vmatpush.bf16.msra.mxu0 %v1092
    %2889 = vmatpush.bf16.msra.mxu0 %v1088
    %2890 = vmatmul.bf16.gmra.mxu0 %v2790
    %v2891 = vpop.f32.mrf.mxu0
    %v2892 = vadd.f32 %v2879, %v2891
    %v2893 = vpop.f32.mrf.mxu0
    %2894 = vdwg.mxu0
    %2895 = vmatpush.bf16.msra.mxu0 %v611
    %2896 = vmatpush.bf16.msra.mxu0 %v607
    %2897 = vmatpush.bf16.msra.mxu0 %v603
    %2898 = vmatpush.bf16.msra.mxu0 %v599
    %2899 = vmatpush.bf16.msra.mxu0 %v595
    %2900 = vmatpush.bf16.msra.mxu0 %v591
    %2901 = vmatpush.bf16.msra.mxu0 %v587
    %2902 = vmatpush.bf16.msra.mxu0 %v583
    %2903 = vmatmul.bf16.gmra.mxu0 %v2789
    %v2904 = vpop.f32.mrf.mxu0
    %v2905 = vadd.f32 0.0, %v2904
    %v2906 = vpop.f32.mrf.mxu0
    %2907 = vdwg.mxu0
    %2908 = vmatpush.bf16.msra.mxu0 %v643
    %2909 = vmatpush.bf16.msra.mxu0 %v639
    %2910 = vmatpush.bf16.msra.mxu0 %v635
    %2911 = vmatpush.bf16.msra.mxu0 %v631
    %2912 = vmatpush.bf16.msra.mxu0 %v627
    %2913 = vmatpush.bf16.msra.mxu0 %v623
    %2914 = vmatpush.bf16.msra.mxu0 %v619
    %2915 = vmatpush.bf16.msra.mxu0 %v615
    %2916 = vmatmul.bf16.gmra.mxu0 %v2790
    %v2917 = vpop.f32.mrf.mxu0
    %v2918 = vadd.f32 %v2905, %v2917
    %v2919 = vpop.f32.mrf.mxu0
    %2920 = vdwg.mxu0
    %2921 = vmatpush.bf16.msra.mxu0 %v612
    %2922 = vmatpush.bf16.msra.mxu0 %v608
    %2923 = vmatpush.bf16.msra.mxu0 %v604
    %2924 = vmatpush.bf16.msra.mxu0 %v600
    %2925 = vmatpush.bf16.msra.mxu0 %v596
    %2926 = vmatpush.bf16.msra.mxu0 %v592
    %2927 = vmatpush.bf16.msra.mxu0 %v588
    %2928 = vmatpush.bf16.msra.mxu0 %v584
    %2929 = vmatmul.bf16.gmra.mxu0 %v2789
    %v2930 = vpop.f32.mrf.mxu0
    %v2931 = vadd.f32 0.0, %v2930
    %v2932 = vpop.f32.mrf.mxu0
    %2933 = vdwg.mxu0
    %2934 = vmatpush.bf16.msra.mxu0 %v644
    %2935 = vmatpush.bf16.msra.mxu0 %v640
    %2936 = vmatpush.bf16.msra.mxu0 %v636
    %2937 = vmatpush.bf16.msra.mxu0 %v632
    %2938 = vmatpush.bf16.msra.mxu0 %v628
    %2939 = vmatpush.bf16.msra.mxu0 %v624
    %2940 = vmatpush.bf16.msra.mxu0 %v620
    %2941 = vmatpush.bf16.msra.mxu0 %v616
    %2942 = vmatmul.bf16.gmra.mxu0 %v2790
    %v2943 = vpop.f32.mrf.mxu0
    %v2944 = vadd.f32 %v2931, %v2943
    %v2945 = vpop.f32.mrf.mxu0
    %2946 = vdwg.mxu0
    %2947 = vmatpush.bf16.msra.mxu0 %v613
    %2948 = vmatpush.bf16.msra.mxu0 %v609
    %2949 = vmatpush.bf16.msra.mxu0 %v605
    %2950 = vmatpush.bf16.msra.mxu0 %v601
    %2951 = vmatpush.bf16.msra.mxu0 %v597
    %2952 = vmatpush.bf16.msra.mxu0 %v593
    %2953 = vmatpush.bf16.msra.mxu0 %v589
    %2954 = vmatpush.bf16.msra.mxu0 %v585
    %2955 = vmatmul.bf16.gmra.mxu0 %v2789
    %v2956 = vpop.f32.mrf.mxu0
    %v2957 = vadd.f32 0.0, %v2956
    %v2958 = vpop.f32.mrf.mxu0
    %2959 = vdwg.mxu0
    %2960 = vmatpush.bf16.msra.mxu0 %v645
    %2961 = vmatpush.bf16.msra.mxu0 %v641
    %2962 = vmatpush.bf16.msra.mxu0 %v637
    %2963 = vmatpush.bf16.msra.mxu0 %v633
    %2964 = vmatpush.bf16.msra.mxu0 %v629
    %2965 = vmatpush.bf16.msra.mxu0 %v625
    %2966 = vmatpush.bf16.msra.mxu0 %v621
    %2967 = vmatpush.bf16.msra.mxu0 %v617
    %2968 = vmatmul.bf16.gmra.mxu0 %v2790
    %v2969 = vpop.f32.mrf.mxu0
    %v2970 = vadd.f32 %v2957, %v2969
    %v2971 = vpop.f32.mrf.mxu0
    %2972 = vdwg.mxu0
    %2973 = vmatpush.bf16.msra.mxu0 %v614
    %2974 = vmatpush.bf16.msra.mxu0 %v610
    %2975 = vmatpush.bf16.msra.mxu0 %v606
    %2976 = vmatpush.bf16.msra.mxu0 %v602
    %2977 = vmatpush.bf16.msra.mxu0 %v598
    %2978 = vmatpush.bf16.msra.mxu0 %v594
    %2979 = vmatpush.bf16.msra.mxu0 %v590
    %2980 = vmatpush.bf16.msra.mxu0 %v586
    %2981 = vmatmul.bf16.gmra.mxu0 %v2789
    %v2982 = vpop.f32.mrf.mxu0
    %v2983 = vadd.f32 0.0, %v2982
    %v2984 = vpop.f32.mrf.mxu0
    %2985 = vdwg.mxu0
    %2986 = vmatpush.bf16.msra.mxu0 %v646
    %2987 = vmatpush.bf16.msra.mxu0 %v642
    %2988 = vmatpush.bf16.msra.mxu0 %v638
    %2989 = vmatpush.bf16.msra.mxu0 %v634
    %2990 = vmatpush.bf16.msra.mxu0 %v630
    %2991 = vmatpush.bf16.msra.mxu0 %v626
    %2992 = vmatpush.bf16.msra.mxu0 %v622
    %2993 = vmatpush.bf16.msra.mxu0 %v618
    %2994 = vmatmul.bf16.gmra.mxu0 %v2790
    %v2995 = vpop.f32.mrf.mxu0
    %v2996 = vadd.f32 %v2983, %v2995
    %v2997 = vpop.f32.mrf.mxu0
    %2998 = vdwg.mxu0
    %v2999 = vadd.f32 %v2814, %v375
    %v3000 = vadd.f32 %v2840, %v376
    %v3001 = vadd.f32 %v2866, %v377
    %v3002 = vadd.f32 %v2892, %v378
    %v3003 = vxor.u32 %v2999, 2147483648
    %v3004 = vxor.u32 %v3000, 2147483648
    %v3005 = vxor.u32 %v3001, 2147483648
    %v3006 = vmul.f32 %v3003, 1.442695
    %v3007 = vpow.pop %v3006
    %v3008 = vmul.f32 %v3004, 1.442695
    %v3009 = vpow.pop %v3008
    %v3010 = vmul.f32 %v3005, 1.442695
    %v3011 = vpow.pop %v3010
    %v3012 = vadd.f32 %v3007, 1.0
    %v3013 = vadd.f32 %v3009, 1.0
    %v3014 = vadd.f32 %v3011, 1.0
    %v3015 = vrcp.pop %v3012
    %v3016 = vmul.f32 %v3012, %v3015
    %v3017 = vsub.f32 1.0, %v3016
    %v3018 = vmul.f32 %v3015, %v3017
    %v3019 = vadd.f32 %v3015, %v3018
    %vm3020 = vweird.f32 %v3012
    %vm3021 = vweird.f32 %v3015
    %vm3022 = vmor %vm3020, %vm3021
    %v3023 = vsel %vm3022, %v3015, %v3019
    %v3024 = vand.u32 2147483647, %v3012
    %vm3025 = vcmp.eq.f32.partialorder %v3024, 8.507059e+37
    %v3026 = vand.u32 %v3012, 2147483648
    %v3027 = vor.u32 1.1754944e-38, %v3026
    %v3028 = vsel %vm3025, %v3027, %v3023
    %v3029 = vmul.f32 1.0, %v3028
    %v3030 = vrcp.pop %v3013
    %v3031 = vmul.f32 %v3013, %v3030
    %v3032 = vsub.f32 1.0, %v3031
    %v3033 = vmul.f32 %v3030, %v3032
    %v3034 = vadd.f32 %v3030, %v3033
    %vm3035 = vweird.f32 %v3013
    %vm3036 = vweird.f32 %v3030
    %vm3037 = vmor %vm3035, %vm3036
    %v3038 = vsel %vm3037, %v3030, %v3034
    %v3039 = vand.u32 2147483647, %v3013
    %vm3040 = vcmp.eq.f32.partialorder %v3039, 8.507059e+37
    %v3041 = vand.u32 %v3013, 2147483648
    %v3042 = vor.u32 1.1754944e-38, %v3041
    %v3043 = vsel %vm3040, %v3042, %v3038
    %v3044 = vmul.f32 1.0, %v3043
    %v3045 = vrcp.pop %v3014
    %v3046 = vmul.f32 %v3014, %v3045
    %v3047 = vsub.f32 1.0, %v3046
    %v3048 = vmul.f32 %v3045, %v3047
    %v3049 = vadd.f32 %v3045, %v3048
    %vm3050 = vweird.f32 %v3014
    %vm3051 = vweird.f32 %v3045
    %vm3052 = vmor %vm3050, %vm3051
    %v3053 = vsel %vm3052, %v3045, %v3049
    %v3054 = vand.u32 2147483647, %v3014
    %vm3055 = vcmp.eq.f32.partialorder %v3054, 8.507059e+37
    %v3056 = vand.u32 %v3014, 2147483648
    %v3057 = vor.u32 1.1754944e-38, %v3056
    %v3058 = vsel %vm3055, %v3057, %v3053
    %v3059 = vmul.f32 1.0, %v3058
    %v3060 = vtanh.pop %v3002
    %v3061 = vmul.f32 %v3044, %v2741
    %v3062 = vmul.f32 %v3029, %v3060
    %v3063 = vadd.f32 %v3061, %v3062
    %v3064 = vtanh.pop %v3063
    %v3065 = vmul.f32 %v3059, %v3064
    %v3070 = vrot.slane %v2944, 6
    %v3071 = vrot.slane %v2970, 4
    %v3072 = vrot.slane %v2996, 2
    %v3073 = vsel %vm201, %v2918, %v3070
    %v3074 = vsel %vm203, %v3071, %v3072
    %v3075 = vsel %vm205, %v3073, %v3074
    %v3077 = vadd.f32 %v232, %v3075
    %v3078 = vxor.u32 %v3077, 2147483648
    %v3079 = vmul.f32 %v3078, 1.442695
    %v3080 = vpow.pop %v3079
    %v3081 = vadd.f32 %v3080, 1.0
    %v3082 = vrcp.pop %v3081
    %v3083 = vmul.f32 %v3081, %v3082
    %v3084 = vsub.f32 1.0, %v3083
    %v3085 = vmul.f32 %v3082, %v3084
    %v3086 = vadd.f32 %v3082, %v3085
    %vm3087 = vweird.f32 %v3081
    %vm3088 = vweird.f32 %v3082
    %vm3089 = vmor %vm3087, %vm3088
    %v3090 = vsel %vm3089, %v3082, %v3086
    %v3091 = vand.u32 2147483647, %v3081
    %vm3092 = vcmp.eq.f32.partialorder %v3091, 8.507059e+37
    %v3093 = vand.u32 %v3081, 2147483648
    %v3094 = vor.u32 1.1754944e-38, %v3093
    %v3095 = vsel %vm3092, %v3094, %v3090
    %v3096 = vmul.f32 1.0, %v3095
    %v3098 = vrot.slane %v3077, 6
    %v3100 = vtanh.pop %v3098
    %v3102 = vrot.slane %v3096, 2
    %v3104 = vmul.f32 %v3102, %v2784
    %v3105 = vmul.f32 %v3096, %v3100
    %v3106 = vadd.f32 %v3104, %v3105
    %v3107 = vtanh.pop %v3106
    %v3108 = vrot.slane %v3096, 4
    %v3110 = vmul.f32 %v3108, %v3107
    %v3111 = vpack.c.bf16 %v3110, %v3110
    %v3112 = vpack.c.bf16 %v3065, %v3065
    %3113 = vmatpush.bf16.msra.mxu0 %v1081
    %3114 = vmatpush.bf16.msra.mxu0 %v1077
    %3115 = vmatpush.bf16.msra.mxu0 %v1073
    %3116 = vmatpush.bf16.msra.mxu0 %v1069
    %3117 = vmatpush.bf16.msra.mxu0 %v1065
    %3118 = vmatpush.bf16.msra.mxu0 %v1061
    %3119 = vmatpush.bf16.msra.mxu0 %v1057
    %3120 = vmatpush.bf16.msra.mxu0 %v1053
    %3121 = vmatmul.bf16.gmra.mxu0 %v3111
    %v3122 = vpop.f32.mrf.mxu0
    %v3123 = vadd.f32 0.0, %v3122
    %v3124 = vpop.f32.mrf.mxu0
    %3125 = vdwg.mxu0
    %3126 = vmatpush.bf16.msra.mxu0 %v1113
    %3127 = vmatpush.bf16.msra.mxu0 %v1109
    %3128 = vmatpush.bf16.msra.mxu0 %v1105
    %3129 = vmatpush.bf16.msra.mxu0 %v1101
    %3130 = vmatpush.bf16.msra.mxu0 %v1097
    %3131 = vmatpush.bf16.msra.mxu0 %v1093
    %3132 = vmatpush.bf16.msra.mxu0 %v1089
    %3133 = vmatpush.bf16.msra.mxu0 %v1085
    %3134 = vmatmul.bf16.gmra.mxu0 %v3112
    %v3135 = vpop.f32.mrf.mxu0
    %v3136 = vadd.f32 %v3123, %v3135
    %v3137 = vpop.f32.mrf.mxu0
    %3138 = vdwg.mxu0
    %3139 = vmatpush.bf16.msra.mxu0 %v1082
    %3140 = vmatpush.bf16.msra.mxu0 %v1078
    %3141 = vmatpush.bf16.msra.mxu0 %v1074
    %3142 = vmatpush.bf16.msra.mxu0 %v1070
    %3143 = vmatpush.bf16.msra.mxu0 %v1066
    %3144 = vmatpush.bf16.msra.mxu0 %v1062
    %3145 = vmatpush.bf16.msra.mxu0 %v1058
    %3146 = vmatpush.bf16.msra.mxu0 %v1054
    %3147 = vmatmul.bf16.gmra.mxu0 %v3111
    %v3148 = vpop.f32.mrf.mxu0
    %v3149 = vadd.f32 0.0, %v3148
    %v3150 = vpop.f32.mrf.mxu0
    %3151 = vdwg.mxu0
    %3152 = vmatpush.bf16.msra.mxu0 %v1114
    %3153 = vmatpush.bf16.msra.mxu0 %v1110
    %3154 = vmatpush.bf16.msra.mxu0 %v1106
    %3155 = vmatpush.bf16.msra.mxu0 %v1102
    %3156 = vmatpush.bf16.msra.mxu0 %v1098
    %3157 = vmatpush.bf16.msra.mxu0 %v1094
    %3158 = vmatpush.bf16.msra.mxu0 %v1090
    %3159 = vmatpush.bf16.msra.mxu0 %v1086
    %3160 = vmatmul.bf16.gmra.mxu0 %v3112
    %v3161 = vpop.f32.mrf.mxu0
    %v3162 = vadd.f32 %v3149, %v3161
    %v3163 = vpop.f32.mrf.mxu0
    %3164 = vdwg.mxu0
    %3165 = vmatpush.bf16.msra.mxu0 %v1083
    %3166 = vmatpush.bf16.msra.mxu0 %v1079
    %3167 = vmatpush.bf16.msra.mxu0 %v1075
    %3168 = vmatpush.bf16.msra.mxu0 %v1071
    %3169 = vmatpush.bf16.msra.mxu0 %v1067
    %3170 = vmatpush.bf16.msra.mxu0 %v1063
    %3171 = vmatpush.bf16.msra.mxu0 %v1059
    %3172 = vmatpush.bf16.msra.mxu0 %v1055
    %3173 = vmatmul.bf16.gmra.mxu0 %v3111
    %v3174 = vpop.f32.mrf.mxu0
    %v3175 = vadd.f32 0.0, %v3174
    %v3176 = vpop.f32.mrf.mxu0
    %3177 = vdwg.mxu0
    %3178 = vmatpush.bf16.msra.mxu0 %v1115
    %3179 = vmatpush.bf16.msra.mxu0 %v1111
    %3180 = vmatpush.bf16.msra.mxu0 %v1107
    %3181 = vmatpush.bf16.msra.mxu0 %v1103
    %3182 = vmatpush.bf16.msra.mxu0 %v1099
    %3183 = vmatpush.bf16.msra.mxu0 %v1095
    %3184 = vmatpush.bf16.msra.mxu0 %v1091
    %3185 = vmatpush.bf16.msra.mxu0 %v1087
    %3186 = vmatmul.bf16.gmra.mxu0 %v3112
    %v3187 = vpop.f32.mrf.mxu0
    %v3188 = vadd.f32 %v3175, %v3187
    %v3189 = vpop.f32.mrf.mxu0
    %3190 = vdwg.mxu0
    %3191 = vmatpush.bf16.msra.mxu0 %v1084
    %3192 = vmatpush.bf16.msra.mxu0 %v1080
    %3193 = vmatpush.bf16.msra.mxu0 %v1076
    %3194 = vmatpush.bf16.msra.mxu0 %v1072
    %3195 = vmatpush.bf16.msra.mxu0 %v1068
    %3196 = vmatpush.bf16.msra.mxu0 %v1064
    %3197 = vmatpush.bf16.msra.mxu0 %v1060
    %3198 = vmatpush.bf16.msra.mxu0 %v1056
    %3199 = vmatmul.bf16.gmra.mxu0 %v3111
    %v3200 = vpop.f32.mrf.mxu0
    %v3201 = vadd.f32 0.0, %v3200
    %v3202 = vpop.f32.mrf.mxu0
    %3203 = vdwg.mxu0
    %3204 = vmatpush.bf16.msra.mxu0 %v1116
    %3205 = vmatpush.bf16.msra.mxu0 %v1112
    %3206 = vmatpush.bf16.msra.mxu0 %v1108
    %3207 = vmatpush.bf16.msra.mxu0 %v1104
    %3208 = vmatpush.bf16.msra.mxu0 %v1100
    %3209 = vmatpush.bf16.msra.mxu0 %v1096
    %3210 = vmatpush.bf16.msra.mxu0 %v1092
    %3211 = vmatpush.bf16.msra.mxu0 %v1088
    %3212 = vmatmul.bf16.gmra.mxu0 %v3112
    %v3213 = vpop.f32.mrf.mxu0
    %v3214 = vadd.f32 %v3201, %v3213
    %v3215 = vpop.f32.mrf.mxu0
    %3216 = vdwg.mxu0
    %3217 = vmatpush.bf16.msra.mxu0 %v611
    %3218 = vmatpush.bf16.msra.mxu0 %v607
    %3219 = vmatpush.bf16.msra.mxu0 %v603
    %3220 = vmatpush.bf16.msra.mxu0 %v599
    %3221 = vmatpush.bf16.msra.mxu0 %v595
    %3222 = vmatpush.bf16.msra.mxu0 %v591
    %3223 = vmatpush.bf16.msra.mxu0 %v587
    %3224 = vmatpush.bf16.msra.mxu0 %v583
    %3225 = vmatmul.bf16.gmra.mxu0 %v3111
    %v3226 = vpop.f32.mrf.mxu0
    %v3227 = vadd.f32 0.0, %v3226
    %v3228 = vpop.f32.mrf.mxu0
    %3229 = vdwg.mxu0
    %3230 = vmatpush.bf16.msra.mxu0 %v643
    %3231 = vmatpush.bf16.msra.mxu0 %v639
    %3232 = vmatpush.bf16.msra.mxu0 %v635
    %3233 = vmatpush.bf16.msra.mxu0 %v631
    %3234 = vmatpush.bf16.msra.mxu0 %v627
    %3235 = vmatpush.bf16.msra.mxu0 %v623
    %3236 = vmatpush.bf16.msra.mxu0 %v619
    %3237 = vmatpush.bf16.msra.mxu0 %v615
    %3238 = vmatmul.bf16.gmra.mxu0 %v3112
    %v3239 = vpop.f32.mrf.mxu0
    %v3240 = vadd.f32 %v3227, %v3239
    %v3241 = vpop.f32.mrf.mxu0
    %3242 = vdwg.mxu0
    %3243 = vmatpush.bf16.msra.mxu0 %v612
    %3244 = vmatpush.bf16.msra.mxu0 %v608
    %3245 = vmatpush.bf16.msra.mxu0 %v604
    %3246 = vmatpush.bf16.msra.mxu0 %v600
    %3247 = vmatpush.bf16.msra.mxu0 %v596
    %3248 = vmatpush.bf16.msra.mxu0 %v592
    %3249 = vmatpush.bf16.msra.mxu0 %v588
    %3250 = vmatpush.bf16.msra.mxu0 %v584
    %3251 = vmatmul.bf16.gmra.mxu0 %v3111
    %v3252 = vpop.f32.mrf.mxu0
    %v3253 = vadd.f32 0.0, %v3252
    %v3254 = vpop.f32.mrf.mxu0
    %3255 = vdwg.mxu0
    %3256 = vmatpush.bf16.msra.mxu0 %v644
    %3257 = vmatpush.bf16.msra.mxu0 %v640
    %3258 = vmatpush.bf16.msra.mxu0 %v636
    %3259 = vmatpush.bf16.msra.mxu0 %v632
    %3260 = vmatpush.bf16.msra.mxu0 %v628
    %3261 = vmatpush.bf16.msra.mxu0 %v624
    %3262 = vmatpush.bf16.msra.mxu0 %v620
    %3263 = vmatpush.bf16.msra.mxu0 %v616
    %3264 = vmatmul.bf16.gmra.mxu0 %v3112
    %v3265 = vpop.f32.mrf.mxu0
    %v3266 = vadd.f32 %v3253, %v3265
    %v3267 = vpop.f32.mrf.mxu0
    %3268 = vdwg.mxu0
    %3269 = vmatpush.bf16.msra.mxu0 %v613
    %3270 = vmatpush.bf16.msra.mxu0 %v609
    %3271 = vmatpush.bf16.msra.mxu0 %v605
    %3272 = vmatpush.bf16.msra.mxu0 %v601
    %3273 = vmatpush.bf16.msra.mxu0 %v597
    %3274 = vmatpush.bf16.msra.mxu0 %v593
    %3275 = vmatpush.bf16.msra.mxu0 %v589
    %3276 = vmatpush.bf16.msra.mxu0 %v585
    %3277 = vmatmul.bf16.gmra.mxu0 %v3111
    %v3278 = vpop.f32.mrf.mxu0
    %v3279 = vadd.f32 0.0, %v3278
    %v3280 = vpop.f32.mrf.mxu0
    %3281 = vdwg.mxu0
    %3282 = vmatpush.bf16.msra.mxu0 %v645
    %3283 = vmatpush.bf16.msra.mxu0 %v641
    %3284 = vmatpush.bf16.msra.mxu0 %v637
    %3285 = vmatpush.bf16.msra.mxu0 %v633
    %3286 = vmatpush.bf16.msra.mxu0 %v629
    %3287 = vmatpush.bf16.msra.mxu0 %v625
    %3288 = vmatpush.bf16.msra.mxu0 %v621
    %3289 = vmatpush.bf16.msra.mxu0 %v617
    %3290 = vmatmul.bf16.gmra.mxu0 %v3112
    %v3291 = vpop.f32.mrf.mxu0
    %v3292 = vadd.f32 %v3279, %v3291
    %v3293 = vpop.f32.mrf.mxu0
    %3294 = vdwg.mxu0
    %3295 = vmatpush.bf16.msra.mxu0 %v614
    %3296 = vmatpush.bf16.msra.mxu0 %v610
    %3297 = vmatpush.bf16.msra.mxu0 %v606
    %3298 = vmatpush.bf16.msra.mxu0 %v602
    %3299 = vmatpush.bf16.msra.mxu0 %v598
    %3300 = vmatpush.bf16.msra.mxu0 %v594
    %3301 = vmatpush.bf16.msra.mxu0 %v590
    %3302 = vmatpush.bf16.msra.mxu0 %v586
    %3303 = vmatmul.bf16.gmra.mxu0 %v3111
    %v3304 = vpop.f32.mrf.mxu0
    %v3305 = vadd.f32 0.0, %v3304
    %v3306 = vpop.f32.mrf.mxu0
    %3307 = vdwg.mxu0
    %3308 = vmatpush.bf16.msra.mxu0 %v646
    %3309 = vmatpush.bf16.msra.mxu0 %v642
    %3310 = vmatpush.bf16.msra.mxu0 %v638
    %3311 = vmatpush.bf16.msra.mxu0 %v634
    %3312 = vmatpush.bf16.msra.mxu0 %v630
    %3313 = vmatpush.bf16.msra.mxu0 %v626
    %3314 = vmatpush.bf16.msra.mxu0 %v622
    %3315 = vmatpush.bf16.msra.mxu0 %v618
    %3316 = vmatmul.bf16.gmra.mxu0 %v3112
    %v3317 = vpop.f32.mrf.mxu0
    %v3318 = vadd.f32 %v3305, %v3317
    %v3319 = vpop.f32.mrf.mxu0
    %3320 = vdwg.mxu0
    %v3321 = vadd.f32 %v3136, %v375
    %v3322 = vadd.f32 %v3162, %v376
    %v3323 = vadd.f32 %v3188, %v377
    %v3324 = vadd.f32 %v3214, %v378
    %v3325 = vxor.u32 %v3321, 2147483648
    %v3326 = vxor.u32 %v3322, 2147483648
    %v3327 = vxor.u32 %v3323, 2147483648
    %v3328 = vmul.f32 %v3325, 1.442695
    %v3329 = vpow.pop %v3328
    %v3330 = vmul.f32 %v3326, 1.442695
    %v3331 = vpow.pop %v3330
    %v3332 = vmul.f32 %v3327, 1.442695
    %v3333 = vpow.pop %v3332
    %v3334 = vadd.f32 %v3329, 1.0
    %v3335 = vadd.f32 %v3331, 1.0
    %v3336 = vadd.f32 %v3333, 1.0
    %v3337 = vrcp.pop %v3334
    %v3338 = vmul.f32 %v3334, %v3337
    %v3339 = vsub.f32 1.0, %v3338
    %v3340 = vmul.f32 %v3337, %v3339
    %v3341 = vadd.f32 %v3337, %v3340
    %vm3342 = vweird.f32 %v3334
    %vm3343 = vweird.f32 %v3337
    %vm3344 = vmor %vm3342, %vm3343
    %v3345 = vsel %vm3344, %v3337, %v3341
    %v3346 = vand.u32 2147483647, %v3334
    %vm3347 = vcmp.eq.f32.partialorder %v3346, 8.507059e+37
    %v3348 = vand.u32 %v3334, 2147483648
    %v3349 = vor.u32 1.1754944e-38, %v3348
    %v3350 = vsel %vm3347, %v3349, %v3345
    %v3351 = vmul.f32 1.0, %v3350
    %v3352 = vrcp.pop %v3335
    %v3353 = vmul.f32 %v3335, %v3352
    %v3354 = vsub.f32 1.0, %v3353
    %v3355 = vmul.f32 %v3352, %v3354
    %v3356 = vadd.f32 %v3352, %v3355
    %vm3357 = vweird.f32 %v3335
    %vm3358 = vweird.f32 %v3352
    %vm3359 = vmor %vm3357, %vm3358
    %v3360 = vsel %vm3359, %v3352, %v3356
    %v3361 = vand.u32 2147483647, %v3335
    %vm3362 = vcmp.eq.f32.partialorder %v3361, 8.507059e+37
    %v3363 = vand.u32 %v3335, 2147483648
    %v3364 = vor.u32 1.1754944e-38, %v3363
    %v3365 = vsel %vm3362, %v3364, %v3360
    %v3366 = vmul.f32 1.0, %v3365
    %v3367 = vrcp.pop %v3336
    %v3368 = vmul.f32 %v3336, %v3367
    %v3369 = vsub.f32 1.0, %v3368
    %v3370 = vmul.f32 %v3367, %v3369
    %v3371 = vadd.f32 %v3367, %v3370
    %vm3372 = vweird.f32 %v3336
    %vm3373 = vweird.f32 %v3367
    %vm3374 = vmor %vm3372, %vm3373
    %v3375 = vsel %vm3374, %v3367, %v3371
    %v3376 = vand.u32 2147483647, %v3336
    %vm3377 = vcmp.eq.f32.partialorder %v3376, 8.507059e+37
    %v3378 = vand.u32 %v3336, 2147483648
    %v3379 = vor.u32 1.1754944e-38, %v3378
    %v3380 = vsel %vm3377, %v3379, %v3375
    %v3381 = vmul.f32 1.0, %v3380
    %v3382 = vtanh.pop %v3324
    %v3383 = vmul.f32 %v3366, %v3063
    %v3384 = vmul.f32 %v3351, %v3382
    %v3385 = vadd.f32 %v3383, %v3384
    %v3386 = vtanh.pop %v3385
    %v3387 = vmul.f32 %v3381, %v3386
    %v3392 = vrot.slane %v3266, 6
    %v3393 = vrot.slane %v3292, 4
    %v3394 = vrot.slane %v3318, 2
    %v3395 = vsel %vm201, %v3240, %v3392
    %v3396 = vsel %vm203, %v3393, %v3394
    %v3397 = vsel %vm205, %v3395, %v3396
    %v3399 = vadd.f32 %v236, %v3397
    %v3400 = vxor.u32 %v3399, 2147483648
    %v3401 = vmul.f32 %v3400, 1.442695
    %v3402 = vpow.pop %v3401
    %v3403 = vadd.f32 %v3402, 1.0
    %v3404 = vrcp.pop %v3403
    %v3405 = vmul.f32 %v3403, %v3404
    %v3406 = vsub.f32 1.0, %v3405
    %v3407 = vmul.f32 %v3404, %v3406
    %v3408 = vadd.f32 %v3404, %v3407
    %vm3409 = vweird.f32 %v3403
    %vm3410 = vweird.f32 %v3404
    %vm3411 = vmor %vm3409, %vm3410
    %v3412 = vsel %vm3411, %v3404, %v3408
    %v3413 = vand.u32 2147483647, %v3403
    %vm3414 = vcmp.eq.f32.partialorder %v3413, 8.507059e+37
    %v3415 = vand.u32 %v3403, 2147483648
    %v3416 = vor.u32 1.1754944e-38, %v3415
    %v3417 = vsel %vm3414, %v3416, %v3412
    %v3418 = vmul.f32 1.0, %v3417
    %v3420 = vrot.slane %v3399, 6
    %v3422 = vtanh.pop %v3420
    %v3424 = vrot.slane %v3418, 2
    %v3426 = vmul.f32 %v3424, %v3106
    %v3427 = vmul.f32 %v3418, %v3422
    %v3428 = vadd.f32 %v3426, %v3427
    %v3429 = vtanh.pop %v3428
    %v3430 = vrot.slane %v3418, 4
    %v3432 = vmul.f32 %v3430, %v3429
    %v3433 = vpack.c.bf16 %v3432, %v3432
    %v3434 = vpack.c.bf16 %v3387, %v3387
    %3435 = vmatpush.bf16.msra.mxu0 %v1081
    %3436 = vmatpush.bf16.msra.mxu0 %v1077
    %3437 = vmatpush.bf16.msra.mxu0 %v1073
    %3438 = vmatpush.bf16.msra.mxu0 %v1069
    %3439 = vmatpush.bf16.msra.mxu0 %v1065
    %3440 = vmatpush.bf16.msra.mxu0 %v1061
    %3441 = vmatpush.bf16.msra.mxu0 %v1057
    %3442 = vmatpush.bf16.msra.mxu0 %v1053
    %3443 = vmatmul.bf16.gmra.mxu0 %v3433
    %v3444 = vpop.f32.mrf.mxu0
    %v3445 = vadd.f32 0.0, %v3444
    %v3446 = vpop.f32.mrf.mxu0
    %3447 = vdwg.mxu0
    %3448 = vmatpush.bf16.msra.mxu0 %v1113
    %3449 = vmatpush.bf16.msra.mxu0 %v1109
    %3450 = vmatpush.bf16.msra.mxu0 %v1105
    %3451 = vmatpush.bf16.msra.mxu0 %v1101
    %3452 = vmatpush.bf16.msra.mxu0 %v1097
    %3453 = vmatpush.bf16.msra.mxu0 %v1093
    %3454 = vmatpush.bf16.msra.mxu0 %v1089
    %3455 = vmatpush.bf16.msra.mxu0 %v1085
    %3456 = vmatmul.bf16.gmra.mxu0 %v3434
    %v3457 = vpop.f32.mrf.mxu0
    %v3458 = vadd.f32 %v3445, %v3457
    %v3459 = vpop.f32.mrf.mxu0
    %3460 = vdwg.mxu0
    %3461 = vmatpush.bf16.msra.mxu0 %v1082
    %3462 = vmatpush.bf16.msra.mxu0 %v1078
    %3463 = vmatpush.bf16.msra.mxu0 %v1074
    %3464 = vmatpush.bf16.msra.mxu0 %v1070
    %3465 = vmatpush.bf16.msra.mxu0 %v1066
    %3466 = vmatpush.bf16.msra.mxu0 %v1062
    %3467 = vmatpush.bf16.msra.mxu0 %v1058
    %3468 = vmatpush.bf16.msra.mxu0 %v1054
    %3469 = vmatmul.bf16.gmra.mxu0 %v3433
    %v3470 = vpop.f32.mrf.mxu0
    %v3471 = vadd.f32 0.0, %v3470
    %v3472 = vpop.f32.mrf.mxu0
    %3473 = vdwg.mxu0
    %3474 = vmatpush.bf16.msra.mxu0 %v1114
    %3475 = vmatpush.bf16.msra.mxu0 %v1110
    %3476 = vmatpush.bf16.msra.mxu0 %v1106
    %3477 = vmatpush.bf16.msra.mxu0 %v1102
    %3478 = vmatpush.bf16.msra.mxu0 %v1098
    %3479 = vmatpush.bf16.msra.mxu0 %v1094
    %3480 = vmatpush.bf16.msra.mxu0 %v1090
    %3481 = vmatpush.bf16.msra.mxu0 %v1086
    %3482 = vmatmul.bf16.gmra.mxu0 %v3434
    %v3483 = vpop.f32.mrf.mxu0
    %v3484 = vadd.f32 %v3471, %v3483
    %v3485 = vpop.f32.mrf.mxu0
    %3486 = vdwg.mxu0
    %3487 = vmatpush.bf16.msra.mxu0 %v1083
    %3488 = vmatpush.bf16.msra.mxu0 %v1079
    %3489 = vmatpush.bf16.msra.mxu0 %v1075
    %3490 = vmatpush.bf16.msra.mxu0 %v1071
    %3491 = vmatpush.bf16.msra.mxu0 %v1067
    %3492 = vmatpush.bf16.msra.mxu0 %v1063
    %3493 = vmatpush.bf16.msra.mxu0 %v1059
    %3494 = vmatpush.bf16.msra.mxu0 %v1055
    %3495 = vmatmul.bf16.gmra.mxu0 %v3433
    %v3496 = vpop.f32.mrf.mxu0
    %v3497 = vadd.f32 0.0, %v3496
    %v3498 = vpop.f32.mrf.mxu0
    %3499 = vdwg.mxu0
    %3500 = vmatpush.bf16.msra.mxu0 %v1115
    %3501 = vmatpush.bf16.msra.mxu0 %v1111
    %3502 = vmatpush.bf16.msra.mxu0 %v1107
    %3503 = vmatpush.bf16.msra.mxu0 %v1103
    %3504 = vmatpush.bf16.msra.mxu0 %v1099
    %3505 = vmatpush.bf16.msra.mxu0 %v1095
    %3506 = vmatpush.bf16.msra.mxu0 %v1091
    %3507 = vmatpush.bf16.msra.mxu0 %v1087
    %3508 = vmatmul.bf16.gmra.mxu0 %v3434
    %v3509 = vpop.f32.mrf.mxu0
    %v3510 = vadd.f32 %v3497, %v3509
    %v3511 = vpop.f32.mrf.mxu0
    %3512 = vdwg.mxu0
    %3513 = vmatpush.bf16.msra.mxu0 %v1084
    %3514 = vmatpush.bf16.msra.mxu0 %v1080
    %3515 = vmatpush.bf16.msra.mxu0 %v1076
    %3516 = vmatpush.bf16.msra.mxu0 %v1072
    %3517 = vmatpush.bf16.msra.mxu0 %v1068
    %3518 = vmatpush.bf16.msra.mxu0 %v1064
    %3519 = vmatpush.bf16.msra.mxu0 %v1060
    %3520 = vmatpush.bf16.msra.mxu0 %v1056
    %3521 = vmatmul.bf16.gmra.mxu0 %v3433
    %v3522 = vpop.f32.mrf.mxu0
    %v3523 = vadd.f32 0.0, %v3522
    %v3524 = vpop.f32.mrf.mxu0
    %3525 = vdwg.mxu0
    %3526 = vmatpush.bf16.msra.mxu0 %v1116
    %3527 = vmatpush.bf16.msra.mxu0 %v1112
    %3528 = vmatpush.bf16.msra.mxu0 %v1108
    %3529 = vmatpush.bf16.msra.mxu0 %v1104
    %3530 = vmatpush.bf16.msra.mxu0 %v1100
    %3531 = vmatpush.bf16.msra.mxu0 %v1096
    %3532 = vmatpush.bf16.msra.mxu0 %v1092
    %3533 = vmatpush.bf16.msra.mxu0 %v1088
    %3534 = vmatmul.bf16.gmra.mxu0 %v3434
    %v3535 = vpop.f32.mrf.mxu0
    %v3536 = vadd.f32 %v3523, %v3535
    %v3537 = vpop.f32.mrf.mxu0
    %3538 = vdwg.mxu0
    %v3539 = vadd.f32 %v3458, %v375
    %v3540 = vadd.f32 %v3484, %v376
    %v3541 = vadd.f32 %v3510, %v377
    %v3542 = vadd.f32 %v3536, %v378
    %v3543 = vxor.u32 %v3539, 2147483648
    %v3544 = vxor.u32 %v3540, 2147483648
    %v3545 = vxor.u32 %v3541, 2147483648
    %v3546 = vmul.f32 %v3543, 1.442695
    %v3547 = vpow.pop %v3546
    %v3548 = vmul.f32 %v3544, 1.442695
    %v3549 = vpow.pop %v3548
    %v3550 = vmul.f32 %v3545, 1.442695
    %v3551 = vpow.pop %v3550
    %v3552 = vadd.f32 %v3547, 1.0
    %v3553 = vadd.f32 %v3549, 1.0
    %v3554 = vadd.f32 %v3551, 1.0
    %v3555 = vrcp.pop %v3552
    %v3556 = vmul.f32 %v3552, %v3555
    %v3557 = vsub.f32 1.0, %v3556
    %v3558 = vmul.f32 %v3555, %v3557
    %v3559 = vadd.f32 %v3555, %v3558
    %vm3560 = vweird.f32 %v3552
    %vm3561 = vweird.f32 %v3555
    %vm3562 = vmor %vm3560, %vm3561
    %v3563 = vsel %vm3562, %v3555, %v3559
    %v3564 = vand.u32 2147483647, %v3552
    %vm3565 = vcmp.eq.f32.partialorder %v3564, 8.507059e+37
    %v3566 = vand.u32 %v3552, 2147483648
    %v3567 = vor.u32 1.1754944e-38, %v3566
    %v3568 = vsel %vm3565, %v3567, %v3563
    %v3569 = vmul.f32 1.0, %v3568
    %v3570 = vrcp.pop %v3553
    %v3571 = vmul.f32 %v3553, %v3570
    %v3572 = vsub.f32 1.0, %v3571
    %v3573 = vmul.f32 %v3570, %v3572
    %v3574 = vadd.f32 %v3570, %v3573
    %vm3575 = vweird.f32 %v3553
    %vm3576 = vweird.f32 %v3570
    %vm3577 = vmor %vm3575, %vm3576
    %v3578 = vsel %vm3577, %v3570, %v3574
    %v3579 = vand.u32 2147483647, %v3553
    %vm3580 = vcmp.eq.f32.partialorder %v3579, 8.507059e+37
    %v3581 = vand.u32 %v3553, 2147483648
    %v3582 = vor.u32 1.1754944e-38, %v3581
    %v3583 = vsel %vm3580, %v3582, %v3578
    %v3584 = vmul.f32 1.0, %v3583
    %v3585 = vrcp.pop %v3554
    %v3586 = vmul.f32 %v3554, %v3585
    %v3587 = vsub.f32 1.0, %v3586
    %v3588 = vmul.f32 %v3585, %v3587
    %v3589 = vadd.f32 %v3585, %v3588
    %vm3590 = vweird.f32 %v3554
    %vm3591 = vweird.f32 %v3585
    %vm3592 = vmor %vm3590, %vm3591
    %v3593 = vsel %vm3592, %v3585, %v3589
    %v3594 = vand.u32 2147483647, %v3554
    %vm3595 = vcmp.eq.f32.partialorder %v3594, 8.507059e+37
    %v3596 = vand.u32 %v3554, 2147483648
    %v3597 = vor.u32 1.1754944e-38, %v3596
    %v3598 = vsel %vm3595, %v3597, %v3593
    %v3599 = vmul.f32 1.0, %v3598
    %v3600 = vtanh.pop %v3542
    %v3601 = vmul.f32 %v3584, %v3385
    %v3602 = vmul.f32 %v3569, %v3600
    %v3603 = vadd.f32 %v3601, %v3602
    %v3604 = vtanh.pop %v3603
    %v3605 = vmul.f32 %v3599, %v3604
    %3614 = vst [vmem:[#allocation1] ss:$4 sm:$0xff] %v1455
    %s3615 = scalar_lea.vmem [#allocation1], 1
    %3616 = vst [vmem:[%s3615] ss:$4 sm:$0xff] %v1777
    %s3617 = scalar_lea.vmem [#allocation1], 2
    %3618 = vst [vmem:[%s3617] ss:$4 sm:$0xff] %v2099
    %s3619 = scalar_lea.vmem [#allocation1], 3
    %3620 = vst [vmem:[%s3619] ss:$4 sm:$0xff] %v2421
    %s3621 = scalar_lea.vmem [#allocation1], 32
    %3622 = vst [vmem:[%s3621] ss:$4 sm:$0xff] %v2743
    %s3623 = scalar_lea.vmem [#allocation1], 33
    %3624 = vst [vmem:[%s3623] ss:$4 sm:$0xff] %v3065
    %s3625 = scalar_lea.vmem [#allocation1], 34
    %3626 = vst [vmem:[%s3625] ss:$4 sm:$0xff] %v3387
    %s3627 = scalar_lea.vmem [#allocation1], 35
    %3628 = vst [vmem:[%s3627] ss:$4 sm:$0xff] %v3605
    %v3629 = vld.sshfl [vmem:[#allocation1] sm:$0xff pattern:$0x73625140]
    %v3630 = vld.sshfl [vmem:[#allocation1 + $0x20] sm:$0xff pattern:$0x73625140]
    %v3633 = vpack.c.bf16 %v3630, %v3629
    %v3634 = vld [vmem:[%s7] sm:$0xf]
    %v3635 = vld [vmem:[%s7 + $0x4] sm:$0xf]
    %v3636 = vld [vmem:[%s7 + $0x8] sm:$0xf]
    %v3637 = vld [vmem:[%s7 + $0xc] sm:$0xf]
    %v3638 = vld [vmem:[%s7 + $0x10] sm:$0xf]
    %v3639 = vld [vmem:[%s7 + $0x14] sm:$0xf]
    %v3640 = vld [vmem:[%s7 + $0x18] sm:$0xf]
    %v3641 = vld [vmem:[%s7 + $0x1c] sm:$0xf]
    %v3642 = vld [vmem:[%s7 + $0x20] sm:$0xf]
    %v3643 = vld [vmem:[%s7 + $0x24] sm:$0xf]
    %v3644 = vld [vmem:[%s7 + $0x28] sm:$0xf]
    %v3645 = vld [vmem:[%s7 + $0x2c] sm:$0xf]
    %v3646 = vld [vmem:[%s7 + $0x30] sm:$0xf]
    %v3647 = vld [vmem:[%s7 + $0x34] sm:$0xf]
    %v3648 = vld [vmem:[%s7 + $0x38] sm:$0xf]
    %v3649 = vld [vmem:[%s7 + $0x3c] sm:$0xf]
    %v3650 = vld [vmem:[%s8] sm:$0x1]
    %v3652 = vperm.slane %v3650, 0
    %v3670 = vunpack.c.l.b16 %v3634
    %v3671 = vunpack.c.l.b16 %v3635
    %v3672 = vunpack.c.l.b16 %v3636
    %v3673 = vunpack.c.l.b16 %v3637
    %v3674 = vunpack.c.l.b16 %v3638
    %v3675 = vunpack.c.l.b16 %v3639
    %v3676 = vunpack.c.l.b16 %v3640
    %v3677 = vunpack.c.l.b16 %v3641
    %v3678 = vunpack.c.l.b16 %v3642
    %v3679 = vunpack.c.l.b16 %v3643
    %v3680 = vunpack.c.l.b16 %v3644
    %v3681 = vunpack.c.l.b16 %v3645
    %v3682 = vunpack.c.l.b16 %v3646
    %v3683 = vunpack.c.l.b16 %v3647
    %v3684 = vunpack.c.l.b16 %v3648
    %v3685 = vunpack.c.l.b16 %v3649
    %v3686 = vpack.c.b16 %v3671, %v3670
    %v3687 = vpack.c.b16 %v3673, %v3672
    %v3688 = vpack.c.b16 %v3675, %v3674
    %v3689 = vpack.c.b16 %v3677, %v3676
    %v3690 = vpack.c.b16 %v3679, %v3678
    %v3691 = vpack.c.b16 %v3681, %v3680
    %v3692 = vpack.c.b16 %v3683, %v3682
    %v3693 = vpack.c.b16 %v3685, %v3684
    %3702 = vmatpush.bf16.msra.mxu0 %v3693
    %3703 = vmatpush.bf16.msra.mxu0 %v3692
    %3704 = vmatpush.bf16.msra.mxu0 %v3691
    %3705 = vmatpush.bf16.msra.mxu0 %v3690
    %3706 = vmatpush.bf16.msra.mxu0 %v3689
    %3707 = vmatpush.bf16.msra.mxu0 %v3688
    %3708 = vmatpush.bf16.msra.mxu0 %v3687
    %3709 = vmatpush.bf16.msra.mxu0 %v3686
    %3710 = vmatmul.bf16.gmra.mxu0 %v3633
    %v3711 = vpop.f32.mrf.mxu0
    %v3712 = vadd.f32 %v3652, %v3711
    %v3713 = vpop.f32.mrf.mxu0
    %v3714 = vadd.f32 %v3652, %v3713
    %3715 = vdwg.mxu0
    %3716 = vst [vmem:[%s9] sm:$0xff] %v3712
    %3717 = vst [vmem:[%s9 + $0x8] sm:$0xff] %v3714
    %3718 = vst [vmem:[#allocation2] sm:$0x3] %v3432
    %s3719 = scalar_lea.vmem [#allocation2], 2
    %3720 = vst [vmem:[%s3719] sm:$0x3] %v3605
    %3721 = vst [vmem:[#allocation4] sm:$0x3] %v3428
    %s3722 = scalar_lea.vmem [#allocation4], 2
    %3723 = vst [vmem:[%s3722] sm:$0x3] %v3603
    // Predicated region
    $region38: #{decktalk_forward.1} parent=1 // pred_check
      _
    $region39: #{decktalk_forward.1} parent=1 // pred_check_branch
      %3725 = sbr.rel (0) target = $region41
    $region40: #{decktalk_forward.1} parent=1 // pred_region
      _
    $region41: #{decktalk_forward.1} parent=1 // pred_fallthru
      _
    // Predicated region
    $region42: #{decktalk_forward.1} parent=1 // pred_check
      _
    $region43: #{decktalk_forward.1} parent=1 // pred_check_branch
      %3727 = sbr.rel (0) target = $region45
    $region44: #{decktalk_forward.1} parent=1 // pred_region
      %3729 = vsyncadd [#allocation3], 0
      %s3730 = sshll.u32 [#allocation2], 4
      %s3731 = int_to_ptr.vmem [resolvable:$true] %s3730
      %s3732 = sshll.u32 %s10, 4
      %s3733 = int_to_ptr.hbm [resolvable:$true] %s3732
      %3738 = dma.vmem_to_hbm [thread:$0]  %s3731, 64, %s3733, [#allocation3], 32, 32, 2
    $region45: #{decktalk_forward.1} parent=1 // pred_fallthru
      _
    // Predicated region
    $region46: #{decktalk_forward.1} parent=1 // pred_check
      _
    $region47: #{decktalk_forward.1} parent=1 // pred_check_branch
      %3740 = sbr.rel (0) target = $region49
    $region48: #{decktalk_forward.1} parent=1 // pred_region
      %3742 = vsyncadd [#allocation5], 0
      %s3743 = sshll.u32 [#allocation4], 4
      %s3744 = int_to_ptr.vmem [resolvable:$true] %s3743
      %s3745 = sshll.u32 %s11, 4
      %s3746 = int_to_ptr.hbm [resolvable:$true] %s3745
      %3751 = dma.vmem_to_hbm [thread:$0]  %s3744, 64, %s3746, [#allocation5], 32, 32, 2
    $region49: #{decktalk_forward.1} parent=1 // pred_fallthru
      _
    // Predicated region
    $region50: #{decktalk_forward.1} parent=1 // pred_check
      _
    $region51: #{decktalk_forward.1} parent=1 // pred_check_branch
      %3753 = sbr.rel (0) target = $region53
    $region52: #{decktalk_forward.1} parent=1 // pred_region
      _
    $region53: #{decktalk_forward.1} parent=1 // pred_fallthru
      _
    // Predicated region
    $region54: #{decktalk_forward.1} parent=1 // pred_check
      _
    $region55: #{decktalk_forward.1} parent=1 // pred_check_branch
      %3755 = sbr.rel (0) target = $region57
    $region56: #{decktalk_forward.1} parent=1 // pred_region
      %3757 = dma.done [#allocation3], 64
    $region57: #{decktalk_forward.1} parent=1 // pred_fallthru
      _
    // Predicated region
    $region58: #{decktalk_forward.1} parent=1 // pred_check
      _
    $region59: #{decktalk_forward.1} parent=1 // pred_check_branch
      %3759 = sbr.rel (0) target = $region61
    $region60: #{decktalk_forward.1} parent=1 // pred_region
      %3761 = dma.done [#allocation5], 64
    $region61: #{decktalk_forward.1} parent=1 // pred_fallthru
      _
    %3762 = vsyncpa [#allocation3], 1
    %3763 = vsyncpa [#allocation5], 1

</llo_original>
